<compile_context>
chip_gen: v7x
topology: tpu7x:2x2x1
jax: 0.10.0
libtpu: 0.0.40
codegen_flags: <defaults>
</compile_context>

<pallas_src>
import numpy as np
import jax
import jax.numpy as jnp
from jax.experimental import pallas as pl
from jax.experimental.pallas import tpu as pltpu

# Set to jnp.bfloat16 on v6e/v7x for ~2x MXU throughput (accumulation stays in
# f32 via preferred_element_type).  Kept f32 here so the 1e-4 check passes.
MATMUL_DTYPE = jnp.float32


# ----------------------------------------------------------------------------
# bilinear (align_corners=True) interpolation matrix, matches torch Upsample
# ----------------------------------------------------------------------------
def bilinear_matrix(n_in, n_out):
    m = np.zeros((n_out, n_in), np.float32)
    if n_out == 1:
        m[0, 0] = 1.0
        return m
    for i in range(n_out):
        src = i * (n_in - 1) / (n_out - 1)
        i0 = int(np.floor(src))
        i1 = min(i0 + 1, n_in - 1)
        w1 = src - i0
        m[i, i0] += 1.0 - w1
        m[i, i1] += w1
    return m


# ----------------------------------------------------------------------------
# shared in-kernel piece: 3x3 conv (on an already zero-padded (Cin,H+2,W+2)
# value) + folded BN + ReLU, as a single (Cout, 9*Cin) @ (9*Cin, H*W) matmul.
# ----------------------------------------------------------------------------
def _conv3x3_bn_relu_core(xpad, w, scale, bias, H, W):
    Cin = xpad.shape[0]
    taps = []
    for dh in range(3):
        for dw in range(3):
            taps.append(xpad[:, dh:dh + H, dw:dw + W].reshape(Cin, H * W))
    patches = jnp.concatenate(taps, axis=0)                       # (9*Cin, H*W)
    acc = jnp.dot(w.astype(MATMUL_DTYPE), patches.astype(MATMUL_DTYPE),
                  preferred_element_type=jnp.float32)             # (Cout, H*W)
    y = acc * scale + bias                                        # (Cout,1) bcast
    return jnp.maximum(y, 0.0)


def _fold_bn(gamma, beta, mean, var, eps):
    scale = (gamma / jnp.sqrt(var + eps)).astype(jnp.float32)
    bias = (beta - mean * scale).astype(jnp.float32)
    return scale, bias


def _flatten_conv_weight(w_oihw):
    # (Cout, Cin, 3, 3) -> (Cout, 9*Cin) with (tap, cin) ordering matching the
    # im2col rows built in _conv3x3_bn_relu_core.
    Cout, Cin = w_oihw.shape[0], w_oihw.shape[1]
    return jnp.transpose(w_oihw, (0, 2, 3, 1)).reshape(Cout, 9 * Cin)


# ----------------------------------------------------------------------------
# Kernel A: fused upsample + F.pad + concat + conv3x3 + BN + ReLU
# ----------------------------------------------------------------------------
def _make_up_concat_conv_kernel(C1, C2, Hin, Win, H2, W2, Cmid):
    Hp, Wp = H2 + 2, W2 + 2

    def kernel(x1_ref, x2_ref, uh_ref, uwt_ref, w_ref, s_ref, b_ref, o_ref):
        f32 = jnp.float32

        # ---- bilinear x2 upsample of x1 (+F.pad +conv-pad via zero rows/cols)
        # height pass: one batched 2-D matmul (channels folded into N)
        x1c = x1_ref[0].astype(f32)                               # (C1,Hin,Win)
        xt = jnp.transpose(x1c, (1, 0, 2)).reshape(Hin, C1 * Win)
        hp = jnp.dot(uh_ref[...].astype(MATMUL_DTYPE), xt.astype(MATMUL_DTYPE),
                     preferred_element_type=f32)                  # (Hp, C1*Win)
        hp = jnp.transpose(hp.reshape(Hp, C1, Win), (1, 0, 2)).reshape(C1 * Hp, Win)
        # width pass: one batched 2-D matmul (channels*rows folded into M)
        x1up = jnp.dot(hp.astype(MATMUL_DTYPE), uwt_ref[...].astype(MATMUL_DTYPE),
                       preferred_element_type=f32)                # (C1*Hp, Wp)
        x1up = x1up.reshape(C1, Hp, Wp)

        # ---- x2 skip connection: conv zero-pad built in VMEM (no HBM pad) ----
        x2c = x2_ref[0].astype(f32)                               # (C2, H2, W2)
        zcol = jnp.zeros((C2, H2, 1), f32)
        zrow = jnp.zeros((C2, 1, Wp), f32)
        x2p = jnp.concatenate([zcol, x2c, zcol], axis=2)          # (C2, H2, Wp)
        x2p = jnp.concatenate([zrow, x2p, zrow], axis=1)          # (C2, Hp, Wp)

        # ---- channel concat == torch.cat([x2, x1], dim=1), done in VMEM ------
        xcat = jnp.concatenate([x2p, x1up], axis=0)               # (Cin, Hp, Wp)

        # ---- 3x3 conv (single K=9*Cin matmul) + BN + ReLU ---------------------
        y = _conv3x3_bn_relu_core(xcat, w_ref[...], s_ref[...], b_ref[...], H2, W2)
        o_ref[0] = y.astype(o_ref.dtype)                          # (Cmid, H2*W2)

    return kernel


def fused_up_concat_conv(x1, x2, w1, gamma, beta, mean, var, eps=1e-5):
    B, C1, Hin, Win = x1.shape
    _, C2, H2, W2 = x2.shape
    Cin = C1 + C2
    Cmid = w1.shape[0]
    assert w1.shape[1] == Cin
    Hup, Wup = 2 * Hin, 2 * Win
    dy, dx = H2 - Hup, W2 - Wup
    assert dy >= 0 and dx >= 0
    Hp, Wp = H2 + 2, W2 + 2
    Npix = H2 * W2

    # interpolation matrices with F.pad AND the conv's 1-pixel zero pad folded
    # in as zero rows/columns -> the upsampled block comes out already padded.
    uh = np.zeros((Hp, Hin), np.float32)
    uh[1 + dy // 2: 1 + dy // 2 + Hup, :] = bilinear_matrix(Hin, Hup)
    uw = np.zeros((Wp, Win), np.float32)
    uw[1 + dx // 2: 1 + dx // 2 + Wup, :] = bilinear_matrix(Win, Wup)
    uh = jnp.asarray(uh)                                          # (Hp, Hin)
    uwt = jnp.asarray(uw.T)                                       # (Win, Wp)

    scale, bias = _fold_bn(gamma, beta, mean, var, eps)
    w_flat = _flatten_conv_weight(w1)                             # (Cmid, 9*Cin)

    kernel = _make_up_concat_conv_kernel(C1, C2, Hin, Win, H2, W2, Cmid)
    return pl.pallas_call(
        kernel,
        out_shape=jax.ShapeDtypeStruct((B, Cmid, Npix), x1.dtype),
        grid=(B,),
        in_specs=[
            pl.BlockSpec((1, C1, Hin, Win), lambda b: (b, 0, 0, 0)),
            pl.BlockSpec((1, C2, H2, W2), lambda b: (b, 0, 0, 0)),
            pl.BlockSpec((Hp, Hin), lambda b: (0, 0)),
            pl.BlockSpec((Win, Wp), lambda b: (0, 0)),
            pl.BlockSpec((Cmid, 9 * Cin), lambda b: (0, 0)),
            pl.BlockSpec((Cmid, 1), lambda b: (0, 0)),
            pl.BlockSpec((Cmid, 1), lambda b: (0, 0)),
        ],
        out_specs=pl.BlockSpec((1, Cmid, Npix), lambda b: (b, 0, 0)),
        compiler_params=pltpu.CompilerParams(
            dimension_semantics=("parallel",),
            vmem_limit_bytes=32 * 1024 * 1024),
    )(x1, x2, uh, uwt, w_flat, scale.reshape(Cmid, 1), bias.reshape(Cmid, 1))


# ----------------------------------------------------------------------------
# Kernel B: 3x3 conv + BN + ReLU on the flattened (B, Cin, H*W) activation
# ----------------------------------------------------------------------------
def _make_conv_kernel(Cin, Cout, H, W):
    def kernel(x_ref, w_ref, s_ref, b_ref, o_ref):
        f32 = jnp.float32
        x = x_ref[0].astype(f32).reshape(Cin, H, W)
        zcol = jnp.zeros((Cin, H, 1), f32)
        zrow = jnp.zeros((Cin, 1, W + 2), f32)
        xp = jnp.concatenate([zcol, x, zcol], axis=2)
        xp = jnp.concatenate([zrow, xp, zrow], axis=1)            # (Cin,H+2,W+2)
        y = _conv3x3_bn_relu_core(xp, w_ref[...], s_ref[...], b_ref[...], H, W)
        o_ref[0] = y.astype(o_ref.dtype)                          # (Cout, H*W)

    return kernel


def conv3x3_bn_relu_flat(x_flat, H, W, w, gamma, beta, mean, var, eps=1e-5):
    B, Cin, Npix = x_flat.shape
    Cout = w.shape[0]
    scale, bias = _fold_bn(gamma, beta, mean, var, eps)
    w_flat = _flatten_conv_weight(w)                              # (Cout, 9*Cin)
    kernel = _make_conv_kernel(Cin, Cout, H, W)
    return pl.pallas_call(
        kernel,
        out_shape=jax.ShapeDtypeStruct((B, Cout, Npix), x_flat.dtype),
        grid=(B,),
        in_specs=[
            pl.BlockSpec((1, Cin, Npix), lambda b: (b, 0, 0)),
            pl.BlockSpec((Cout, 9 * Cin), lambda b: (0, 0)),
            pl.BlockSpec((Cout, 1), lambda b: (0, 0)),
            pl.BlockSpec((Cout, 1), lambda b: (0, 0)),
        ],
        out_specs=pl.BlockSpec((1, Cout, Npix), lambda b: (b, 0, 0)),
        compiler_params=pltpu.CompilerParams(
            dimension_semantics=("parallel",),
            vmem_limit_bytes=32 * 1024 * 1024),
    )(x_flat, w_flat, scale.reshape(Cout, 1), bias.reshape(Cout, 1))


# ----------------------------------------------------------------------------
# Up module: params + forward
# ----------------------------------------------------------------------------
def init_up_params(key, in_channels, out_channels):
    mid = in_channels // 2
    k1, k2, k3, k4, k5, k6 = jax.random.split(key, 6)
    return {
        "w1": 0.1 * jax.random.normal(k1, (mid, in_channels, 3, 3), jnp.float32),
        "gamma1": 1.0 + 0.1 * jax.random.normal(k2, (mid,), jnp.float32),
        "beta1": 0.1 * jax.random.normal(k3, (mid,), jnp.float32),
        "mean1": jnp.zeros((mid,), jnp.float32),
        "var1": jnp.ones((mid,), jnp.float32),
        "w2": 0.1 * jax.random.normal(k4, (out_channels, mid, 3, 3), jnp.float32),
        "gamma2": 1.0 + 0.1 * jax.random.normal(k5, (out_channels,), jnp.float32),
        "beta2": 0.1 * jax.random.normal(k6, (out_channels,), jnp.float32),
        "mean2": jnp.zeros((out_channels,), jnp.float32),
        "var2": jnp.ones((out_channels,), jnp.float32),
    }


def up_forward(params, x1_nchw, x2_nchw):
    B = x1_nchw.shape[0]
    H2, W2 = x2_nchw.shape[2], x2_nchw.shape[3]
    Cout = params["w2"].shape[0]
    # Kernel A: upsample + pad + concat + conv1 + BN1 + ReLU1 (one pallas_call)
    h = fused_up_concat_conv(x1_nchw, x2_nchw, params["w1"], params["gamma1"],
                             params["beta1"], params["mean1"], params["var1"])
    # Kernel B: conv2 + BN2 + ReLU2
    y = conv3x3_bn_relu_flat(h, H2, W2, params["w2"], params["gamma2"],
                             params["beta2"], params["mean2"], params["var2"])
    # Contiguous reshape only (no transpose, no data movement).
    return y.reshape(B, Cout, H2, W2)


# ----------------------------------------------------------------------------
# pure-JAX reference for verification
# ----------------------------------------------------------------------------
def ref_forward(params, x1_nchw, x2_nchw):
    B, C, Hin, Win = x1_nchw.shape
    uh = jnp.asarray(bilinear_matrix(Hin, 2 * Hin))
    uw = jnp.asarray(bilinear_matrix(Win, 2 * Win))
    x1u = jnp.einsum('oi,bcij->bcoj', uh, x1_nchw)
    x1u = jnp.einsum('pj,bcoj->bcop', uw, x1u)
    dy = x2_nchw.shape[2] - x1u.shape[2]
    dx = x2_nchw.shape[3] - x1u.shape[3]
    x1u = jnp.pad(x1u, ((0, 0), (0, 0),
                        (dy // 2, dy - dy // 2),
                        (dx // 2, dx - dx // 2)))
    x = jnp.concatenate([x2_nchw, x1u], axis=1)

    def cbr(x, w, g, b, m, v):
        y = jax.lax.conv_general_dilated(
            x, w, (1, 1), 'SAME',
            dimension_numbers=('NCHW', 'OIHW', 'NCHW'))
        s = g / jnp.sqrt(v + 1e-5)
        y = y * s[None, :, None, None] + (b - m * s)[None, :, None, None]
        return jnp.maximum(y, 0.0)

    x = cbr(x, params["w1"], params["gamma1"], params["beta1"],
            params["mean1"], params["var1"])
    x = cbr(x, params["w2"], params["gamma2"], params["beta2"],
            params["mean2"], params["var2"])
    return x


if __name__ == "__main__":
    key = jax.random.PRNGKey(0)
    kp, kx1, kx2 = jax.random.split(key, 3)

    in_channels, out_channels = 8, 4
    B, H, W = 2, 8, 8
    # x1: deeper feature map (half the concat channels, half the resolution)
    x1 = jax.random.normal(kx1, (B, in_channels // 2, H, W), jnp.float32)
    # x2: skip connection at full resolution
    x2 = jax.random.normal(kx2, (B, in_channels // 2, 2 * H, 2 * W), jnp.float32)

    params = init_up_params(kp, in_channels, out_channels)

    out = up_forward(params, x1, x2)
    out = jax.block_until_ready(out)
    assert out.shape == (B, out_channels, 2 * H, 2 * W), out.shape

    ref = ref_forward(params, x1, x2)
    np.testing.assert_allclose(np.asarray(out), np.asarray(ref),
                               rtol=1e-4, atol=1e-4)
    print("KERNEL_OK")
</pallas_src>

<mosaic_0001>
module attributes {stable_mosaic.version = 11 : i64} {
  func.func @kernel(%arg0: i32, %arg1: memref<1x4x8x8xf32, #tpu.memory_space<vmem>>, %arg2: memref<1x4x16x16xf32, #tpu.memory_space<vmem>>, %arg3: memref<18x8xf32, #tpu.memory_space<vmem>>, %arg4: memref<8x18xf32, #tpu.memory_space<vmem>>, %arg5: memref<4x72xf32, #tpu.memory_space<vmem>>, %arg6: memref<4x1xf32, #tpu.memory_space<vmem>>, %arg7: memref<4x1xf32, #tpu.memory_space<vmem>>, %arg8: memref<1x4x256xf32, #tpu.memory_space<vmem>>) attributes {dimension_semantics = [#tpu.dimension_semantics<parallel>], iteration_bounds = array<i64: 2>, scalar_prefetch = 0 : i64, scratch_operands = 0 : i64, tpu.core_type = #tpu.core_type<tc>, window_params = [{transform_indices = @transform_0, window_bounds = array<i64: 1, 4, 8, 8>}, {transform_indices = @transform_1, window_bounds = array<i64: 1, 4, 16, 16>}, {pipeline_mode = #tpu.pipeline_mode<synchronous>, transform_indices = @transform_2, window_bounds = array<i64: 18, 8>}, {pipeline_mode = #tpu.pipeline_mode<synchronous>, transform_indices = @transform_3, window_bounds = array<i64: 8, 18>}, {pipeline_mode = #tpu.pipeline_mode<synchronous>, transform_indices = @transform_4, window_bounds = array<i64: 4, 72>}, {pipeline_mode = #tpu.pipeline_mode<synchronous>, transform_indices = @transform_5, window_bounds = array<i64: 4, 1>}, {pipeline_mode = #tpu.pipeline_mode<synchronous>, transform_indices = @transform_6, window_bounds = array<i64: 4, 1>}, {transform_indices = @transform_7, window_bounds = array<i64: 1, 4, 256>}]} {
    %c0 = arith.constant 0 : index
    %c0_0 = arith.constant 0 : index
    %c0_1 = arith.constant 0 : index
    %c0_2 = arith.constant 0 : index
    %0 = vector.load %arg1[%c0, %c0_0, %c0_1, %c0_2] : memref<1x4x8x8xf32, #tpu.memory_space<vmem>>, vector<1x4x8x8xf32>
    %1 = vector.shape_cast %0 : vector<1x4x8x8xf32> to vector<4x8x8xf32>
    %2 = tpu.transpose %1, [1, 0, 2] : vector<4x8x8xf32> -> vector<8x4x8xf32>
    %3 = vector.shape_cast %2 : vector<8x4x8xf32> to vector<8x32xf32>
    %c0_3 = arith.constant 0 : index
    %c0_4 = arith.constant 0 : index
    %4 = vector.load %arg3[%c0_3, %c0_4] : memref<18x8xf32, #tpu.memory_space<vmem>>, vector<18x8xf32>
    %cst = arith.constant dense<0.000000e+00> : vector<18x32xf32>
    %5 = tpu.matmul %4, %3, %cst {dimension_numbers = #tpu.dot_dimension_numbers<[1], [0], [0], [1], [0, 0, 1, 1], [], []>} : vector<18x8xf32>, vector<8x32xf32>, vector<18x32xf32> -> vector<18x32xf32>
    %6 = vector.shape_cast %5 : vector<18x32xf32> to vector<18x4x8xf32>
    %7 = tpu.transpose %6, [1, 0, 2] : vector<18x4x8xf32> -> vector<4x18x8xf32>
    %8 = vector.shape_cast %7 : vector<4x18x8xf32> to vector<72x8xf32>
    %c0_5 = arith.constant 0 : index
    %c0_6 = arith.constant 0 : index
    %9 = vector.load %arg4[%c0_5, %c0_6] : memref<8x18xf32, #tpu.memory_space<vmem>>, vector<8x18xf32>
    %cst_7 = arith.constant dense<0.000000e+00> : vector<72x18xf32>
    %10 = tpu.matmul %8, %9, %cst_7 {dimension_numbers = #tpu.dot_dimension_numbers<[1], [0], [0], [1], [0, 0, 1, 1], [], []>} : vector<72x8xf32>, vector<8x18xf32>, vector<72x18xf32> -> vector<72x18xf32>
    %11 = vector.shape_cast %10 : vector<72x18xf32> to vector<4x18x18xf32>
    %c0_8 = arith.constant 0 : index
    %c0_9 = arith.constant 0 : index
    %c0_10 = arith.constant 0 : index
    %c0_11 = arith.constant 0 : index
    %12 = vector.load %arg2[%c0_8, %c0_9, %c0_10, %c0_11] : memref<1x4x16x16xf32, #tpu.memory_space<vmem>>, vector<1x4x16x16xf32>
    %13 = vector.shape_cast %12 : vector<1x4x16x16xf32> to vector<4x16x16xf32>
    %cst_12 = arith.constant 0.000000e+00 : f32
    %14 = vector.broadcast %cst_12 : f32 to vector<4x16x1xf32>
    %cst_13 = arith.constant 0.000000e+00 : f32
    %15 = vector.broadcast %cst_13 : f32 to vector<4x1x18xf32>
    %16 = tpu.concatenate %14, %13, %14 in 2 : vector<4x16x1xf32>, vector<4x16x16xf32>, vector<4x16x1xf32> -> vector<4x16x18xf32>
    %17 = tpu.concatenate %15, %16, %15 in 1 : vector<4x1x18xf32>, vector<4x16x18xf32>, vector<4x1x18xf32> -> vector<4x18x18xf32>
    %18 = tpu.concatenate %17, %11 in 0 : vector<4x18x18xf32>, vector<4x18x18xf32> -> vector<8x18x18xf32>
    %c0_14 = arith.constant 0 : index
    %c0_15 = arith.constant 0 : index
    %19 = vector.load %arg5[%c0_14, %c0_15] : memref<4x72xf32, #tpu.memory_space<vmem>>, vector<4x72xf32>
    %c0_16 = arith.constant 0 : index
    %c0_17 = arith.constant 0 : index
    %20 = vector.load %arg6[%c0_16, %c0_17] : memref<4x1xf32, #tpu.memory_space<vmem>>, vector<4x1xf32>
    %c0_18 = arith.constant 0 : index
    %c0_19 = arith.constant 0 : index
    %21 = vector.load %arg7[%c0_18, %c0_19] : memref<4x1xf32, #tpu.memory_space<vmem>>, vector<4x1xf32>
    %22 = vector.extract_strided_slice %18 {offsets = [0, 0, 0], sizes = [8, 16, 16], strides = [1, 1, 1]} : vector<8x18x18xf32> to vector<8x16x16xf32>
    %23 = vector.shape_cast %22 : vector<8x16x16xf32> to vector<8x256xf32>
    %24 = vector.extract_strided_slice %18 {offsets = [0, 0, 1], sizes = [8, 16, 16], strides = [1, 1, 1]} : vector<8x18x18xf32> to vector<8x16x16xf32>
    %25 = vector.shape_cast %24 : vector<8x16x16xf32> to vector<8x256xf32>
    %26 = vector.extract_strided_slice %18 {offsets = [0, 0, 2], sizes = [8, 16, 16], strides = [1, 1, 1]} : vector<8x18x18xf32> to vector<8x16x16xf32>
    %27 = vector.shape_cast %26 : vector<8x16x16xf32> to vector<8x256xf32>
    %28 = vector.extract_strided_slice %18 {offsets = [0, 1, 0], sizes = [8, 16, 16], strides = [1, 1, 1]} : vector<8x18x18xf32> to vector<8x16x16xf32>
    %29 = vector.shape_cast %28 : vector<8x16x16xf32> to vector<8x256xf32>
    %30 = vector.extract_strided_slice %18 {offsets = [0, 1, 1], sizes = [8, 16, 16], strides = [1, 1, 1]} : vector<8x18x18xf32> to vector<8x16x16xf32>
    %31 = vector.shape_cast %30 : vector<8x16x16xf32> to vector<8x256xf32>
    %32 = vector.extract_strided_slice %18 {offsets = [0, 1, 2], sizes = [8, 16, 16], strides = [1, 1, 1]} : vector<8x18x18xf32> to vector<8x16x16xf32>
    %33 = vector.shape_cast %32 : vector<8x16x16xf32> to vector<8x256xf32>
    %34 = vector.extract_strided_slice %18 {offsets = [0, 2, 0], sizes = [8, 16, 16], strides = [1, 1, 1]} : vector<8x18x18xf32> to vector<8x16x16xf32>
    %35 = vector.shape_cast %34 : vector<8x16x16xf32> to vector<8x256xf32>
    %36 = vector.extract_strided_slice %18 {offsets = [0, 2, 1], sizes = [8, 16, 16], strides = [1, 1, 1]} : vector<8x18x18xf32> to vector<8x16x16xf32>
    %37 = vector.shape_cast %36 : vector<8x16x16xf32> to vector<8x256xf32>
    %38 = vector.extract_strided_slice %18 {offsets = [0, 2, 2], sizes = [8, 16, 16], strides = [1, 1, 1]} : vector<8x18x18xf32> to vector<8x16x16xf32>
    %39 = vector.shape_cast %38 : vector<8x16x16xf32> to vector<8x256xf32>
    %40 = tpu.concatenate %23, %25, %27, %29, %31, %33, %35, %37, %39 in 0 : vector<8x256xf32>, vector<8x256xf32>, vector<8x256xf32>, vector<8x256xf32>, vector<8x256xf32>, vector<8x256xf32>, vector<8x256xf32>, vector<8x256xf32>, vector<8x256xf32> -> vector<72x256xf32>
    %cst_20 = arith.constant dense<0.000000e+00> : vector<4x256xf32>
    %41 = tpu.matmul %19, %40, %cst_20 {dimension_numbers = #tpu.dot_dimension_numbers<[1], [0], [0], [1], [0, 0, 1, 1], [], []>} : vector<4x72xf32>, vector<72x256xf32>, vector<4x256xf32> -> vector<4x256xf32>
    %42 = vector.broadcast %20 : vector<4x1xf32> to vector<4x256xf32>
    %43 = arith.mulf %41, %42 : vector<4x256xf32>
    %44 = vector.broadcast %21 : vector<4x1xf32> to vector<4x256xf32>
    %45 = arith.addf %43, %44 : vector<4x256xf32>
    %cst_21 = arith.constant 0.000000e+00 : f32
    %46 = vector.broadcast %cst_21 : f32 to vector<4x256xf32>
    %47 = arith.maximumf %45, %46 : vector<4x256xf32>
    %c0_22 = arith.constant 0 : index
    %c0_23 = arith.constant 0 : index
    %c0_24 = arith.constant 0 : index
    %48 = vector.load %arg8[%c0_22, %c0_23, %c0_24] : memref<1x4x256xf32, #tpu.memory_space<vmem>>, vector<1x4x256xf32>
    %49 = vector.shape_cast %48 : vector<1x4x256xf32> to vector<4x256xf32>
    %50 = vector.shape_cast %47 : vector<4x256xf32> to vector<1x4x256xf32>
    tpu.vector_store %arg8[%c0_22, %c0_23, %c0_24], %50 {strides = array<i32>} : memref<1x4x256xf32, #tpu.memory_space<vmem>>, vector<1x4x256xf32>,
    return
  }
  func.func @transform_0(%arg0: i32) -> (i32, i32, i32, i32) {
    %c0_i32 = arith.constant 0 : i32
    %c0_i32_0 = arith.constant 0 : i32
    %c0_i32_1 = arith.constant 0 : i32
    %c0_i32_2 = arith.constant 0 : i32
    return %arg0, %c0_i32, %c0_i32_0, %c0_i32_1 : i32, i32, i32, i32
  }
  func.func @transform_1(%arg0: i32) -> (i32, i32, i32, i32) {
    %c0_i32 = arith.constant 0 : i32
    %c0_i32_0 = arith.constant 0 : i32
    %c0_i32_1 = arith.constant 0 : i32
    %c0_i32_2 = arith.constant 0 : i32
    return %arg0, %c0_i32, %c0_i32_0, %c0_i32_1 : i32, i32, i32, i32
  }
  func.func @transform_2(%arg0: i32) -> (i32, i32) {
    %c0_i32 = arith.constant 0 : i32
    %c0_i32_0 = arith.constant 0 : i32
    %c0_i32_1 = arith.constant 0 : i32
    return %c0_i32, %c0_i32_0 : i32, i32
  }
  func.func @transform_3(%arg0: i32) -> (i32, i32) {
    %c0_i32 = arith.constant 0 : i32
    %c0_i32_0 = arith.constant 0 : i32
    %c0_i32_1 = arith.constant 0 : i32
    return %c0_i32, %c0_i32_0 : i32, i32
  }
  func.func @transform_4(%arg0: i32) -> (i32, i32) {
    %c0_i32 = arith.constant 0 : i32
    %c0_i32_0 = arith.constant 0 : i32
    %c0_i32_1 = arith.constant 0 : i32
    return %c0_i32, %c0_i32_0 : i32, i32
  }
  func.func @transform_5(%arg0: i32) -> (i32, i32) {
    %c0_i32 = arith.constant 0 : i32
    %c0_i32_0 = arith.constant 0 : i32
    %c0_i32_1 = arith.constant 0 : i32
    return %c0_i32, %c0_i32_0 : i32, i32
  }
  func.func @transform_6(%arg0: i32) -> (i32, i32) {
    %c0_i32 = arith.constant 0 : i32
    %c0_i32_0 = arith.constant 0 : i32
    %c0_i32_1 = arith.constant 0 : i32
    return %c0_i32, %c0_i32_0 : i32, i32
  }
  func.func @transform_7(%arg0: i32) -> (i32, i32, i32) {
    %c0_i32 = arith.constant 0 : i32
    %c0_i32_0 = arith.constant 0 : i32
    %c0_i32_1 = arith.constant 0 : i32
    return %arg0, %c0_i32, %c0_i32_0 : i32, i32, i32
  }
}

</mosaic_0001>

<llo_original>
// kernel: tpu_custom_call.1
$region0: #{tpu_custom_call.1}
  #allocation0 [shape = 'u32[]', space=smem, size = 0x4, offset = 0x4, fixed_abs, tag = 'smem constant byte address 0x4 - core index']
  #allocation1 [shape = 'u32[144,128]{1,0:T(1,128)}', space=vmem, size = 0x12000, scoped, tag = 'internal scratch']
  %s0 = inlined_call_operand.hbm [shape: f32[2,4,8,8], index: 0, kind: input, shape index: {}]
  %s1 = inlined_call_operand.hbm [shape: f32[2,4,16,16], index: 1, kind: input, shape index: {}]
  %s2 = inlined_call_operand.vmem [shape: f32[18,8], index: 2, kind: input, shape index: {}]
  %s3 = inlined_call_operand.vmem [shape: f32[8,18], index: 3, kind: input, shape index: {}]
  %s4 = inlined_call_operand.vmem [shape: f32[4,72], index: 4, kind: input, shape index: {}]
  %s5 = inlined_call_operand.vmem [shape: f32[4,1], index: 5, kind: input, shape index: {}]
  %s6 = inlined_call_operand.vmem [shape: f32[4,1], index: 6, kind: input, shape index: {}]
  %s7 = inlined_call_operand.hbm [shape: f32[2,4,256], index: 7, kind: output, shape index: {}]
  %s8 = sld [smem:[#allocation0]]
  $region69: #{tpu_custom_call.1} parent=0
    _
  %s10 = ssub.s32 1, %s8
  %s11 = scalar_select 0, %s10, %s8
  $region1: #{tpu_custom_call.1} parent=0
    #allocation2 [shape = 'u8[32768]{0}', space=vmem, size = 0x8000, scoped, tag = 'input window, operand 0']
    #allocation3 [shape = 's32[2]{0}', space=sflag, size = 0x8, scoped, tag = 'scoped memory for tpu_custom_call.1']
    #allocation4 [shape = 's32[2]{0}', space=sflag, size = 0x8, scoped, tag = 'scoped memory for tpu_custom_call.1']
    #allocation5 [shape = 'u8[65536]{0}', space=vmem, size = 0x10000, scoped, tag = 'input window, operand 1']
    #allocation6 [shape = 's32[2]{0}', space=sflag, size = 0x8, scoped, tag = 'scoped memory for tpu_custom_call.1']
    #allocation7 [shape = 'u8[8192]{0}', space=vmem, size = 0x2000, scoped, tag = 'output window, operand 0']
    %12 = vsyncpa [#allocation3], 0
    %s13 = scalar_lea.sflag [#allocation3], 1
    %14 = vsyncpa %s13, 0
    %15 = vsyncpa [#allocation6], 0
    %s16 = scalar_lea.sflag [#allocation6], 1
    %17 = vsyncpa %s16, 0
    %18 = vsyncpa [#allocation4], 0
    %s19 = scalar_lea.sflag [#allocation4], 1
    %20 = vsyncpa %s19, 0
    loop: start=0, step=1, limit=4
    $region2: #{tpu_custom_call.1} parent=1 // loop_pre_header
      _
    $region3: #{tpu_custom_call.1} parent=1 // loop_header
      %s22 = sphi 0, %s26
      %p23 = scmp.ge.s32.totalorder %s22, 4
      %s32 = sphi 0, %s34
      %s35 = sphi 0, %s32
      %s36 = sphi 0, %s35
      %s52 = sphi 0, %s36
      %s58 = sphi 0, %s60
      %s61 = sphi 0, %s58
      %s62 = sphi 0, %s61
      %s78 = sphi 0, %s62
      %s82 = sphi 0, %s82
      %s84 = sphi 0, %s82
      %s85 = sphi 0, %s84
      %s99 = sphi 0, %s85
      %s103 = sphi 0, %s103
      %s105 = sphi 0, %s103
      %s106 = sphi 0, %s105
      %s120 = sphi 0, %s106
      %s124 = sphi 0, %s124
      %s126 = sphi 0, %s124
      %s127 = sphi 0, %s126
      %s141 = sphi 0, %s127
      %s145 = sphi 0, %s145
      %s147 = sphi 0, %s145
      %s148 = sphi 0, %s147
      %s162 = sphi 0, %s148
      %s166 = sphi 0, %s166
      %s168 = sphi 0, %s166
      %s169 = sphi 0, %s168
      %s183 = sphi 0, %s169
      %s189 = sphi 0, %s191
      %s192 = sphi 0, %s189
      %s193 = sphi 0, %s192
      %s209 = sphi 0, %s193
    $region4: #{tpu_custom_call.1} parent=1 // loop_header_branch
      %25 = sbr.rel (%p23) target = $region8
    $region5: #{tpu_custom_call.1} parent=1 // loop_body
      %s27 = ssub.s32 %s22, 1
      %s28 = ssub.s32 %s22, 2
      %s29 = sadd.s32 %s22, 1
      %s30 = ssub.s32 %s22, %s29
      %p31 = scmp.eq.s32.totalorder %s30, 0
      %s33 = sadd.s32 %s32, 1
      %s34 = scalar_select %p31, %s32, %s33
      %p37 = pneg %p31
      %p38 = scmp.eq.s32.totalorder %s22, 1
      %p39 = por %p37, %p38
      %p40 = scmp.ne.s32.totalorder %s32, %s35
      %p41 = scmp.eq.s32.totalorder %s22, 0
      %p42 = por %p40, %p41
      %p43 = scmp.ne.s32.totalorder %s32, %s35
      %p44 = scmp.eq.s32.totalorder %s27, 1
      %p45 = por %p43, %p44
      %p46 = scmp.ne.s32.totalorder %s35, %s36
      %p47 = scmp.eq.s32.totalorder %s27, 0
      %p48 = por %p46, %p47
      %p49 = scmp.ne.s32.totalorder %s35, %s36
      %p50 = scmp.eq.s32.totalorder %s28, 1
      %p51 = por %p49, %p50
      %p53 = scmp.ne.s32.totalorder %s36, %s52
      %p54 = scmp.eq.s32.totalorder %s28, 0
      %p55 = por %p53, %p54
      %s56 = ssub.s32 %s22, %s29
      %p57 = scmp.eq.s32.totalorder %s56, 0
      %s59 = sadd.s32 %s58, 1
      %s60 = scalar_select %p57, %s58, %s59
      %p63 = pneg %p57
      %p64 = scmp.eq.s32.totalorder %s22, 1
      %p65 = por %p63, %p64
      %p66 = scmp.ne.s32.totalorder %s58, %s61
      %p67 = scmp.eq.s32.totalorder %s22, 0
      %p68 = por %p66, %p67
      %p69 = scmp.ne.s32.totalorder %s58, %s61
      %p70 = scmp.eq.s32.totalorder %s27, 1
      %p71 = por %p69, %p70
      %p72 = scmp.ne.s32.totalorder %s61, %s62
      %p73 = scmp.eq.s32.totalorder %s27, 0
      %p74 = por %p72, %p73
      %p75 = scmp.ne.s32.totalorder %s61, %s62
      %p76 = scmp.eq.s32.totalorder %s28, 1
      %p77 = por %p75, %p76
      %p79 = scmp.ne.s32.totalorder %s62, %s78
      %p80 = scmp.eq.s32.totalorder %s28, 0
      %p81 = por %p79, %p80
      %s83 = sadd.s32 %s82, 1
      %p86 = scmp.eq.s32.totalorder %s22, 1
      %p87 = scmp.ne.s32.totalorder %s82, %s84
      %p88 = scmp.eq.s32.totalorder %s22, 0
      %p89 = por %p87, %p88
      %p90 = scmp.ne.s32.totalorder %s82, %s84
      %p91 = scmp.eq.s32.totalorder %s27, 1
      %p92 = por %p90, %p91
      %p93 = scmp.ne.s32.totalorder %s84, %s85
      %p94 = scmp.eq.s32.totalorder %s27, 0
      %p95 = por %p93, %p94
      %p96 = scmp.ne.s32.totalorder %s84, %s85
      %p97 = scmp.eq.s32.totalorder %s28, 1
      %p98 = por %p96, %p97
      %p100 = scmp.ne.s32.totalorder %s85, %s99
      %p101 = scmp.eq.s32.totalorder %s28, 0
      %p102 = por %p100, %p101
      %s104 = sadd.s32 %s103, 1
      %p107 = scmp.eq.s32.totalorder %s22, 1
      %p108 = scmp.ne.s32.totalorder %s103, %s105
      %p109 = scmp.eq.s32.totalorder %s22, 0
      %p110 = por %p108, %p109
      %p111 = scmp.ne.s32.totalorder %s103, %s105
      %p112 = scmp.eq.s32.totalorder %s27, 1
      %p113 = por %p111, %p112
      %p114 = scmp.ne.s32.totalorder %s105, %s106
      %p115 = scmp.eq.s32.totalorder %s27, 0
      %p116 = por %p114, %p115
      %p117 = scmp.ne.s32.totalorder %s105, %s106
      %p118 = scmp.eq.s32.totalorder %s28, 1
      %p119 = por %p117, %p118
      %p121 = scmp.ne.s32.totalorder %s106, %s120
      %p122 = scmp.eq.s32.totalorder %s28, 0
      %p123 = por %p121, %p122
      %s125 = sadd.s32 %s124, 1
      %p128 = scmp.eq.s32.totalorder %s22, 1
      %p129 = scmp.ne.s32.totalorder %s124, %s126
      %p130 = scmp.eq.s32.totalorder %s22, 0
      %p131 = por %p129, %p130
      %p132 = scmp.ne.s32.totalorder %s124, %s126
      %p133 = scmp.eq.s32.totalorder %s27, 1
      %p134 = por %p132, %p133
      %p135 = scmp.ne.s32.totalorder %s126, %s127
      %p136 = scmp.eq.s32.totalorder %s27, 0
      %p137 = por %p135, %p136
      %p138 = scmp.ne.s32.totalorder %s126, %s127
      %p139 = scmp.eq.s32.totalorder %s28, 1
      %p140 = por %p138, %p139
      %p142 = scmp.ne.s32.totalorder %s127, %s141
      %p143 = scmp.eq.s32.totalorder %s28, 0
      %p144 = por %p142, %p143
      %s146 = sadd.s32 %s145, 1
      %p149 = scmp.eq.s32.totalorder %s22, 1
      %p150 = scmp.ne.s32.totalorder %s145, %s147
      %p151 = scmp.eq.s32.totalorder %s22, 0
      %p152 = por %p150, %p151
      %p153 = scmp.ne.s32.totalorder %s145, %s147
      %p154 = scmp.eq.s32.totalorder %s27, 1
      %p155 = por %p153, %p154
      %p156 = scmp.ne.s32.totalorder %s147, %s148
      %p157 = scmp.eq.s32.totalorder %s27, 0
      %p158 = por %p156, %p157
      %p159 = scmp.ne.s32.totalorder %s147, %s148
      %p160 = scmp.eq.s32.totalorder %s28, 1
      %p161 = por %p159, %p160
      %p163 = scmp.ne.s32.totalorder %s148, %s162
      %p164 = scmp.eq.s32.totalorder %s28, 0
      %p165 = por %p163, %p164
      %s167 = sadd.s32 %s166, 1
      %p170 = scmp.eq.s32.totalorder %s22, 1
      %p171 = scmp.ne.s32.totalorder %s166, %s168
      %p172 = scmp.eq.s32.totalorder %s22, 0
      %p173 = por %p171, %p172
      %p174 = scmp.ne.s32.totalorder %s166, %s168
      %p175 = scmp.eq.s32.totalorder %s27, 1
      %p176 = por %p174, %p175
      %p177 = scmp.ne.s32.totalorder %s168, %s169
      %p178 = scmp.eq.s32.totalorder %s27, 0
      %p179 = por %p177, %p178
      %p180 = scmp.ne.s32.totalorder %s168, %s169
      %p181 = scmp.eq.s32.totalorder %s28, 1
      %p182 = por %p180, %p181
      %p184 = scmp.ne.s32.totalorder %s169, %s183
      %p185 = scmp.eq.s32.totalorder %s28, 0
      %p186 = por %p184, %p185
      %s187 = ssub.s32 %s22, %s29
      %p188 = scmp.eq.s32.totalorder %s187, 0
      %s190 = sadd.s32 %s189, 1
      %s191 = scalar_select %p188, %s189, %s190
      %p194 = pneg %p188
      %p195 = scmp.eq.s32.totalorder %s22, 1
      %p196 = por %p194, %p195
      %p197 = scmp.ne.s32.totalorder %s189, %s192
      %p198 = scmp.eq.s32.totalorder %s22, 0
      %p199 = por %p197, %p198
      %p200 = scmp.ne.s32.totalorder %s189, %s192
      %p201 = scmp.eq.s32.totalorder %s27, 1
      %p202 = por %p200, %p201
      %p203 = scmp.ne.s32.totalorder %s192, %s193
      %p204 = scmp.eq.s32.totalorder %s27, 0
      %p205 = por %p203, %p204
      %p206 = scmp.ne.s32.totalorder %s192, %s193
      %p207 = scmp.eq.s32.totalorder %s28, 1
      %p208 = por %p206, %p207
      %p210 = scmp.ne.s32.totalorder %s193, %s209
      %p211 = scmp.eq.s32.totalorder %s28, 0
      %p212 = por %p210, %p211
      %p213 = scmp.le.s32.totalorder 1, %s22
      %p214 = scmp.lt.s32.totalorder %s22, 3
      %p215 = pnand %p213, %p214
      %p216 = pneg %p215
      // Predicated region
      $region9: #{tpu_custom_call.1} parent=5 // pred_check
        _
      $region10: #{tpu_custom_call.1} parent=5 // pred_check_branch
        %218 = sbr.rel (%p215) target = $region12
      $region11: #{tpu_custom_call.1} parent=5 // pred_region
        %s219 = ssub.s32 %s22, 1
        // Predicated region
        $region13: #{tpu_custom_call.1} parent=11 // pred_check
          %p220 = pneg %p95
        $region14: #{tpu_custom_call.1} parent=11 // pred_check_branch
          %222 = sbr.rel (%p220) target = $region16
        $region15: #{tpu_custom_call.1} parent=11 // pred_region
          _
        $region16: #{tpu_custom_call.1} parent=11 // pred_fallthru
          _
        // Predicated region
        $region17: #{tpu_custom_call.1} parent=11 // pred_check
          %p223 = pneg %p116
        $region18: #{tpu_custom_call.1} parent=11 // pred_check_branch
          %225 = sbr.rel (%p223) target = $region20
        $region19: #{tpu_custom_call.1} parent=11 // pred_region
          _
        $region20: #{tpu_custom_call.1} parent=11 // pred_fallthru
          _
        // Predicated region
        $region21: #{tpu_custom_call.1} parent=11 // pred_check
          %p226 = pneg %p137
        $region22: #{tpu_custom_call.1} parent=11 // pred_check_branch
          %228 = sbr.rel (%p226) target = $region24
        $region23: #{tpu_custom_call.1} parent=11 // pred_region
          _
        $region24: #{tpu_custom_call.1} parent=11 // pred_fallthru
          _
        // Predicated region
        $region25: #{tpu_custom_call.1} parent=11 // pred_check
          %p229 = pneg %p158
        $region26: #{tpu_custom_call.1} parent=11 // pred_check_branch
          %231 = sbr.rel (%p229) target = $region28
        $region27: #{tpu_custom_call.1} parent=11 // pred_region
          _
        $region28: #{tpu_custom_call.1} parent=11 // pred_fallthru
          _
        // Predicated region
        $region29: #{tpu_custom_call.1} parent=11 // pred_check
          %p232 = pneg %p179
        $region30: #{tpu_custom_call.1} parent=11 // pred_check_branch
          %234 = sbr.rel (%p232) target = $region32
        $region31: #{tpu_custom_call.1} parent=11 // pred_region
          _
        $region32: #{tpu_custom_call.1} parent=11 // pred_fallthru
          _
      $region12: #{tpu_custom_call.1} parent=5 // pred_fallthru
        _
      %p235 = scmp.lt.s32.totalorder %s22, 2
      // Predicated region
      $region33: #{tpu_custom_call.1} parent=5 // pred_check
        %p236 = pneg %p235
      $region34: #{tpu_custom_call.1} parent=5 // pred_check_branch
        %238 = sbr.rel (%p236) target = $region36
      $region35: #{tpu_custom_call.1} parent=5 // pred_region
        // Predicated region
        $region37: #{tpu_custom_call.1} parent=35 // pred_check
          %p239 = pneg %p42
        $region38: #{tpu_custom_call.1} parent=35 // pred_check_branch
          %241 = sbr.rel (%p239) target = $region40
        $region39: #{tpu_custom_call.1} parent=35 // pred_region
          %s242 = sand.u32 %s32, 1
          %s243 = scalar_lea.sflag [#allocation3], %s242
          %s244 = sand.u32 %s32, 1
          %s245 = smul.addr %s244, 32
          %s246 = scalar_lea.vmem [#allocation2], %s245
          %s248 = ssub.s32 512, 512
          %249 = vsyncadd %s243, %s248
          %s250 = smul.addr %s22, 4
          %s251 = smul.addr %s250, 128
          %s252 = scalar_lea.hbm %s0, %s251
          %s253 = sshll.u32 %s246, 4
          %s254 = int_to_ptr.vmem [resolvable:$true] %s253
          %259 = dma.hbm_to_vmem [thread:$0]  %s252, 512, %s254, %s243, 128, 128, 8
        $region40: #{tpu_custom_call.1} parent=35 // pred_fallthru
          _
        // Predicated region
        $region41: #{tpu_custom_call.1} parent=35 // pred_check
          %p260 = pneg %p68
        $region42: #{tpu_custom_call.1} parent=35 // pred_check_branch
          %262 = sbr.rel (%p260) target = $region44
        $region43: #{tpu_custom_call.1} parent=35 // pred_region
          %s263 = sand.u32 %s58, 1
          %s264 = scalar_lea.sflag [#allocation6], %s263
          %s265 = sand.u32 %s58, 1
          %s266 = smul.addr %s265, 64
          %s267 = scalar_lea.vmem [#allocation5], %s266
          %s269 = ssub.s32 1024, 1024
          %270 = vsyncadd %s264, %s269
          %s271 = smul.addr %s22, 8
          %s272 = smul.addr %s271, 128
          %s273 = scalar_lea.hbm %s1, %s272
          %s274 = sshll.u32 %s267, 4
          %s275 = int_to_ptr.vmem [resolvable:$true] %s274
          %280 = dma.hbm_to_vmem [thread:$0]  %s273, 1024, %s275, %s264, 128, 128, 8
        $region44: #{tpu_custom_call.1} parent=35 // pred_fallthru
          _
      $region36: #{tpu_custom_call.1} parent=5 // pred_fallthru
        _
      %p281 = scmp.le.s32.totalorder 1, %s22
      %p282 = scmp.lt.s32.totalorder %s22, 3
      %p283 = pnand %p281, %p282
      %p284 = pneg %p283
      // Predicated region
      $region45: #{tpu_custom_call.1} parent=5 // pred_check
        _
      $region46: #{tpu_custom_call.1} parent=5 // pred_check_branch
        %286 = sbr.rel (%p283) target = $region48
      $region47: #{tpu_custom_call.1} parent=5 // pred_region
        %s287 = ssub.s32 %s22, 1
        %s288 = sand.u32 %s35, 1
        %s289 = scalar_lea.sflag [#allocation3], %s288
        %s290 = sand.u32 %s35, 1
        %s291 = smul.addr %s290, 32
        %s292 = scalar_lea.vmem [#allocation2], %s291
        // Predicated region
        $region49: #{tpu_custom_call.1} parent=47 // pred_check
          %p293 = pneg %p48
        $region50: #{tpu_custom_call.1} parent=47 // pred_check_branch
          %295 = sbr.rel (%p293) target = $region52
        $region51: #{tpu_custom_call.1} parent=47 // pred_region
          %296 = dma.done %s289, 512
        $region52: #{tpu_custom_call.1} parent=47 // pred_fallthru
          _
        %s297 = sand.u32 %s61, 1
        %s298 = scalar_lea.sflag [#allocation6], %s297
        %s299 = sand.u32 %s61, 1
        %s300 = smul.addr %s299, 64
        %s301 = scalar_lea.vmem [#allocation5], %s300
        // Predicated region
        $region53: #{tpu_custom_call.1} parent=47 // pred_check
          %p302 = pneg %p74
        $region54: #{tpu_custom_call.1} parent=47 // pred_check_branch
          %304 = sbr.rel (%p302) target = $region56
        $region55: #{tpu_custom_call.1} parent=47 // pred_region
          %305 = dma.done %s298, 1024
        $region56: #{tpu_custom_call.1} parent=47 // pred_fallthru
          _
        %s306 = sand.u32 %s35, 1
        %s307 = scalar_lea.sflag [#allocation3], %s306
        %s308 = sand.u32 %s35, 1
        %s309 = smul.addr %s308, 32
        %s310 = scalar_lea.vmem [#allocation2], %s309
        %p311 = pneg %p48
        %p312 = pneg %p45
        %s313 = sand.u32 %s61, 1
        %s314 = scalar_lea.sflag [#allocation6], %s313
        %s315 = sand.u32 %s61, 1
        %s316 = smul.addr %s315, 64
        %s317 = scalar_lea.vmem [#allocation5], %s316
        %p318 = pneg %p74
        %p319 = pneg %p71
        %p320 = pneg %p95
        %p321 = pneg %p92
        %p322 = pneg %p116
        %p323 = pneg %p113
        %p324 = pneg %p137
        %p325 = pneg %p134
        %p326 = pneg %p158
        %p327 = pneg %p155
        %p328 = pneg %p179
        %p329 = pneg %p176
        %p330 = pneg %p205
        %p331 = pneg %p202
        %s332 = sand.u32 %s192, 1
        %s333 = scalar_lea.sflag [#allocation4], %s332
        %s334 = sand.u32 %s192, 1
        %s335 = smul.addr %s334, 8
        %s336 = scalar_lea.vmem [#allocation7], %s335
        %v337 = vld [vmem:[%s292] sm:$0xff]
        %v338 = vld [vmem:[%s292 + $0x8] sm:$0xff]
        %v339 = vld [vmem:[%s292 + $0x10] sm:$0xff]
        %v340 = vld [vmem:[%s292 + $0x18] sm:$0xff]
        %v341 = vcombine.low %v337, %v339
        %v342 = vcombine.high %v337, %v339
        %v344 = vunpack.c.l.s4 1983009808
        %v345 = vunpack.c.0.s8 %v344
        %v346 = vlaneseq
        %v347 = vshrl.u32 %v346, 7
        %v348 = vsub.s32 %v345, %v347
        %v349 = vrot.slane %v341, %v348
        %v351 = vunpack.c.l.s4 1983009808
        %v352 = vunpack.c.0.s8 %v351
        %v353 = vlaneseq
        %v354 = vshrl.u32 %v353, 7
        %v355 = vsub.s32 %v352, %v354
        %v356 = vrot.slane %v342, %v355
        %v357 = vcombine.low %v338, %v340
        %v358 = vcombine.high %v338, %v340
        %v360 = vunpack.c.l.s4 1983009808
        %v361 = vunpack.c.0.s8 %v360
        %v362 = vlaneseq
        %v363 = vshrl.u32 %v362, 7
        %v364 = vsub.s32 %v361, %v363
        %v365 = vrot.slane %v357, %v364
        %v367 = vunpack.c.l.s4 1983009808
        %v368 = vunpack.c.0.s8 %v367
        %v369 = vlaneseq
        %v370 = vshrl.u32 %v369, 7
        %v371 = vsub.s32 %v368, %v370
        %v372 = vrot.slane %v358, %v371
        %v373 = vcombine.low %v349, %v365
        %v374 = vcombine.high %v349, %v365
        %v376 = vunpack.c.l.s4 1934713408
        %v377 = vunpack.c.0.s8 %v376
        %v378 = vlaneseq
        %v379 = vshrl.u32 %v378, 7
        %v380 = vsub.s32 %v377, %v379
        %v381 = vrot.slane %v373, %v380
        %v383 = vunpack.c.l.s4 1934713408
        %v384 = vunpack.c.0.s8 %v383
        %v385 = vlaneseq
        %v386 = vshrl.u32 %v385, 7
        %v387 = vsub.s32 %v384, %v386
        %v388 = vrot.slane %v374, %v387
        %v389 = vcombine.low %v356, %v372
        %v390 = vcombine.high %v356, %v372
        %v392 = vunpack.c.l.s4 1934713408
        %v393 = vunpack.c.0.s8 %v392
        %v394 = vlaneseq
        %v395 = vshrl.u32 %v394, 7
        %v396 = vsub.s32 %v393, %v395
        %v397 = vrot.slane %v389, %v396
        %v399 = vunpack.c.l.s4 1934713408
        %v400 = vunpack.c.0.s8 %v399
        %v401 = vlaneseq
        %v402 = vshrl.u32 %v401, 7
        %v403 = vsub.s32 %v400, %v402
        %v404 = vrot.slane %v390, %v403
        %v405 = vcombine.high %v381, 0.0
        %v406 = vcombine.high %v388, 0.0
        %v407 = vcombine.high %v397, 0.0
        %v408 = vcombine.high %v404, 0.0
        %v409 = vcombine.low %v381, %v388
        %v411 = vunpack.c.l.s4 1983009808
        %v412 = vunpack.c.0.s8 %v411
        %v413 = vlaneseq
        %v414 = vshrl.u32 %v413, 7
        %v415 = vsub.s32 %v412, %v414
        %v416 = vrot.slane %v409, %v415
        %v417 = vcombine.low %v405, %v406
        %v419 = vunpack.c.l.s4 1983009808
        %v420 = vunpack.c.0.s8 %v419
        %v421 = vlaneseq
        %v422 = vshrl.u32 %v421, 7
        %v423 = vsub.s32 %v420, %v422
        %v424 = vrot.slane %v417, %v423
        %v425 = vcombine.low %v397, %v404
        %v427 = vunpack.c.l.s4 1983009808
        %v428 = vunpack.c.0.s8 %v427
        %v429 = vlaneseq
        %v430 = vshrl.u32 %v429, 7
        %v431 = vsub.s32 %v428, %v430
        %v432 = vrot.slane %v425, %v431
        %v433 = vcombine.low %v407, %v408
        %v435 = vunpack.c.l.s4 1983009808
        %v436 = vunpack.c.0.s8 %v435
        %v437 = vlaneseq
        %v438 = vshrl.u32 %v437, 7
        %v439 = vsub.s32 %v436, %v438
        %v440 = vrot.slane %v433, %v439
        %v441 = vcombine.low %v416, %v424
        %v442 = vcombine.high %v416, %v424
        %v444 = vunpack.c.l.s4 1934713408
        %v445 = vunpack.c.0.s8 %v444
        %v446 = vlaneseq
        %v447 = vshrl.u32 %v446, 7
        %v448 = vsub.s32 %v445, %v447
        %v449 = vrot.slane %v441, %v448
        %v451 = vunpack.c.l.s4 1934713408
        %v452 = vunpack.c.0.s8 %v451
        %v453 = vlaneseq
        %v454 = vshrl.u32 %v453, 7
        %v455 = vsub.s32 %v452, %v454
        %v456 = vrot.slane %v442, %v455
        %v457 = vcombine.low %v432, %v440
        %v458 = vcombine.high %v432, %v440
        %v460 = vunpack.c.l.s4 1934713408
        %v461 = vunpack.c.0.s8 %v460
        %v462 = vlaneseq
        %v463 = vshrl.u32 %v462, 7
        %v464 = vsub.s32 %v461, %v463
        %v465 = vrot.slane %v457, %v464
        %v467 = vunpack.c.l.s4 1934713408
        %v468 = vunpack.c.0.s8 %v467
        %v469 = vlaneseq
        %v470 = vshrl.u32 %v469, 7
        %v471 = vsub.s32 %v468, %v470
        %v472 = vrot.slane %v458, %v471
        %v473 = vcombine.low %v449, %v465
        %v474 = vcombine.high %v449, %v465
        %v475 = vcombine.low %v456, %v472
        %v476 = vcombine.high %v456, %v472
        %478 = vrot.lane.b32.xlu0 %v474, 8
        %v479 = vpop.permute.xlu0 %478
        %482 = vrot.lane.b32.xlu0 %v475, 16
        %v483 = vpop.permute.xlu0 %482
        %486 = vrot.lane.b32.xlu0 %v476, 24
        %v487 = vpop.permute.xlu0 %486
        %vm489 = vcmask 64512
        %v490 = vsel %vm489, %v473, %v479
        %vm491 = vcmask 130048
        %v492 = vsel %vm491, %v490, %v483
        %vm493 = vcmask 195584
        %v494 = vsel %vm493, %v492, %v487
        %v495 = vld [vmem:[%s2] sm:$0xff]
        %v496 = vld [vmem:[%s2 + $0x8] sm:$0xff]
        %v497 = vld [vmem:[%s2 + $0x10] sm:$0x3]
        %v499 = vsel %vm489, %v495, 0
        %v502 = vsel %vm489, %v496, 0
        %v505 = vsel %vm489, %v497, 0
        %507 = vmatprep.subr.mxu0 0.0
        %508 = vmatpush1.msra.mxu0 %v494
        %509 = vmatprep.subr.mxu0 0.0
        %510 = vmatpush1.msra.mxu0 0.0
        %511 = vmatprep.subr.mxu0 0.0
        %512 = vmatpush1.msra.mxu0 0.0
        %513 = vmatprep.subr.mxu0 0.0
        %514 = vmatpush1.msra.mxu0 0.0
        %515 = vmatprep.subr.mxu0 0.0
        %516 = vmatpush1.msra.mxu0 0.0
        %517 = vmatprep.subr.mxu0 0.0
        %518 = vmatpush1.msra.mxu0 0.0
        %519 = vmatprep.subr.mxu0 0.0
        %520 = vmatpush1.msra.mxu0 0.0
        %521 = vmatprep.subr.mxu0 0.0
        %522 = vmatpush1.msra.mxu0 0.0
        %523 = vmatprep.subr.mxu0 0.0
        %524 = vmatpush1.msra.mxu0 0.0
        %525 = vmatprep.subr.mxu0 0.0
        %526 = vmatpush1.msra.mxu0 0.0
        %527 = vmatprep.subr.mxu0 0.0
        %528 = vmatpush1.msra.mxu0 0.0
        %529 = vmatprep.subr.mxu0 0.0
        %530 = vmatpush1.msra.mxu0 0.0
        %531 = vmatprep.subr.mxu0 0.0
        %532 = vmatpush1.msra.mxu0 0.0
        %533 = vmatprep.subr.mxu0 0.0
        %534 = vmatpush1.msra.mxu0 0.0
        %535 = vmatprep.subr.mxu0 0.0
        %536 = vmatpush1.msra.mxu0 0.0
        %537 = vmatprep.subr.mxu0 0.0
        %538 = vmatpush1.msra.mxu0 0.0
        %539 = vmatprep.subr.mxu0 0.0
        %540 = vmatpush1.msra.mxu0 0.0
        %541 = vmatprep.subr.mxu0 0.0
        %542 = vmatpush1.msra.mxu0 0.0
        %543 = vmatprep.subr.mxu0 0.0
        %544 = vmatpush1.msra.mxu0 0.0
        %545 = vmatprep.subr.mxu0 0.0
        %546 = vmatpush1.msra.mxu0 0.0
        %547 = vmatprep.subr.mxu0 0.0
        %548 = vmatpush1.msra.mxu0 0.0
        %549 = vmatprep.subr.mxu0 0.0
        %550 = vmatpush1.msra.mxu0 0.0
        %551 = vmatprep.subr.mxu0 0.0
        %552 = vmatpush1.msra.mxu0 0.0
        %553 = vmatprep.subr.mxu0 0.0
        %554 = vmatpush1.msra.mxu0 0.0
        %555 = vmatprep.subr.mxu0 0.0
        %556 = vmatpush1.msra.mxu0 0.0
        %557 = vmatprep.subr.mxu0 0.0
        %558 = vmatpush1.msra.mxu0 0.0
        %559 = vmatprep.subr.mxu0 0.0
        %560 = vmatpush1.msra.mxu0 0.0
        %561 = vmatprep.subr.mxu0 0.0
        %562 = vmatpush1.msra.mxu0 0.0
        %563 = vmatprep.subr.mxu0 0.0
        %564 = vmatpush1.msra.mxu0 0.0
        %565 = vmatprep.subr.mxu0 0.0
        %566 = vmatpush1.msra.mxu0 0.0
        %567 = vmatprep.subr.mxu0 0.0
        %568 = vmatpush1.msra.mxu0 0.0
        %569 = vmatprep.subr.mxu0 0.0
        %570 = vmatpush1.msra.mxu0 0.0
        %571 = vmatprep.mubr.f32.mxu0 0.0
        %572 = vmatmul.mubr.f32.gmra.mrb[0].mxu0 %v499
        %v573 = vpop.f32.mrb[0].mxu0
        %v574 = vadd.f32 0.0, %v573
        %v575 = vpop.f32.mrb[0].mxu0
        %576 = vmatprep.mubr.f32.mxu0 0.0
        %577 = vmatmul.mubr.f32.gmra.mrb[0].mxu0 %v502
        %v578 = vpop.f32.mrb[0].mxu0
        %v579 = vadd.f32 0.0, %v578
        %v580 = vpop.f32.mrb[0].mxu0
        %581 = vmatprep.mubr.f32.mxu0 0.0
        %582 = vmatmul.mubr.f32.gmra.mrb[0].mxu0 %v505
        %v583 = vpop.f32.mrb[0].mxu0
        %v584 = vadd.f32 0.0, %v583
        %v585 = vpop.f32.mrb[0].mxu0
        %586 = vdwg.mxu0
        %590 = vrot.lane.b32.xlu0 %v574, 120
        %v591 = vpop.permute.xlu0 %590
        %592 = vrot.lane.b32.xlu0 %v579, 120
        %v593 = vpop.permute.xlu0 %592
        %594 = vrot.lane.b32.xlu0 %v584, 120
        %v595 = vpop.permute.xlu0 %594
        %599 = vrot.lane.b32.xlu0 %v574, 112
        %v600 = vpop.permute.xlu0 %599
        %601 = vrot.lane.b32.xlu0 %v579, 112
        %v602 = vpop.permute.xlu0 %601
        %603 = vrot.lane.b32.xlu0 %v584, 112
        %v604 = vpop.permute.xlu0 %603
        %608 = vrot.lane.b32.xlu0 %v574, 104
        %v609 = vpop.permute.xlu0 %608
        %610 = vrot.lane.b32.xlu0 %v579, 104
        %v611 = vpop.permute.xlu0 %610
        %612 = vrot.lane.b32.xlu0 %v584, 104
        %v613 = vpop.permute.xlu0 %612
        %v617 = vcombine.low %v574, %v600
        %v618 = vcombine.high %v574, %v600
        %v620 = vunpack.c.l.s4 1983009808
        %v621 = vunpack.c.0.s8 %v620
        %v622 = vlaneseq
        %v623 = vshrl.u32 %v622, 7
        %v624 = vsub.s32 %v621, %v623
        %v625 = vrot.slane %v617, %v624
        %v627 = vunpack.c.l.s4 1983009808
        %v628 = vunpack.c.0.s8 %v627
        %v629 = vlaneseq
        %v630 = vshrl.u32 %v629, 7
        %v631 = vsub.s32 %v628, %v630
        %v632 = vrot.slane %v618, %v631
        %v633 = vcombine.low %v591, %v609
        %v634 = vcombine.high %v591, %v609
        %v636 = vunpack.c.l.s4 1983009808
        %v637 = vunpack.c.0.s8 %v636
        %v638 = vlaneseq
        %v639 = vshrl.u32 %v638, 7
        %v640 = vsub.s32 %v637, %v639
        %v641 = vrot.slane %v633, %v640
        %v643 = vunpack.c.l.s4 1983009808
        %v644 = vunpack.c.0.s8 %v643
        %v645 = vlaneseq
        %v646 = vshrl.u32 %v645, 7
        %v647 = vsub.s32 %v644, %v646
        %v648 = vrot.slane %v634, %v647
        %v649 = vcombine.low %v625, %v641
        %v650 = vcombine.high %v625, %v641
        %v652 = vunpack.c.l.s4 1934713408
        %v653 = vunpack.c.0.s8 %v652
        %v654 = vlaneseq
        %v655 = vshrl.u32 %v654, 7
        %v656 = vsub.s32 %v653, %v655
        %v657 = vrot.slane %v649, %v656
        %v659 = vunpack.c.l.s4 1934713408
        %v660 = vunpack.c.0.s8 %v659
        %v661 = vlaneseq
        %v662 = vshrl.u32 %v661, 7
        %v663 = vsub.s32 %v660, %v662
        %v664 = vrot.slane %v650, %v663
        %v665 = vcombine.low %v632, %v648
        %v666 = vcombine.high %v632, %v648
        %v668 = vunpack.c.l.s4 1934713408
        %v669 = vunpack.c.0.s8 %v668
        %v670 = vlaneseq
        %v671 = vshrl.u32 %v670, 7
        %v672 = vsub.s32 %v669, %v671
        %v673 = vrot.slane %v665, %v672
        %v675 = vunpack.c.l.s4 1934713408
        %v676 = vunpack.c.0.s8 %v675
        %v677 = vlaneseq
        %v678 = vshrl.u32 %v677, 7
        %v679 = vsub.s32 %v676, %v678
        %v680 = vrot.slane %v666, %v679
        %v681 = vcombine.high %v657, 0.0
        %v682 = vcombine.high %v664, 0.0
        %v683 = vcombine.high %v673, 0.0
        %v684 = vcombine.high %v680, 0.0
        %v685 = vcombine.low %v579, %v602
        %v686 = vcombine.high %v579, %v602
        %v688 = vunpack.c.l.s4 1983009808
        %v689 = vunpack.c.0.s8 %v688
        %v690 = vlaneseq
        %v691 = vshrl.u32 %v690, 7
        %v692 = vsub.s32 %v689, %v691
        %v693 = vrot.slane %v685, %v692
        %v695 = vunpack.c.l.s4 1983009808
        %v696 = vunpack.c.0.s8 %v695
        %v697 = vlaneseq
        %v698 = vshrl.u32 %v697, 7
        %v699 = vsub.s32 %v696, %v698
        %v700 = vrot.slane %v686, %v699
        %v701 = vcombine.low %v593, %v611
        %v702 = vcombine.high %v593, %v611
        %v704 = vunpack.c.l.s4 1983009808
        %v705 = vunpack.c.0.s8 %v704
        %v706 = vlaneseq
        %v707 = vshrl.u32 %v706, 7
        %v708 = vsub.s32 %v705, %v707
        %v709 = vrot.slane %v701, %v708
        %v711 = vunpack.c.l.s4 1983009808
        %v712 = vunpack.c.0.s8 %v711
        %v713 = vlaneseq
        %v714 = vshrl.u32 %v713, 7
        %v715 = vsub.s32 %v712, %v714
        %v716 = vrot.slane %v702, %v715
        %v717 = vcombine.low %v693, %v709
        %v718 = vcombine.high %v693, %v709
        %v720 = vunpack.c.l.s4 1934713408
        %v721 = vunpack.c.0.s8 %v720
        %v722 = vlaneseq
        %v723 = vshrl.u32 %v722, 7
        %v724 = vsub.s32 %v721, %v723
        %v725 = vrot.slane %v717, %v724
        %v727 = vunpack.c.l.s4 1934713408
        %v728 = vunpack.c.0.s8 %v727
        %v729 = vlaneseq
        %v730 = vshrl.u32 %v729, 7
        %v731 = vsub.s32 %v728, %v730
        %v732 = vrot.slane %v718, %v731
        %v733 = vcombine.low %v700, %v716
        %v734 = vcombine.high %v700, %v716
        %v736 = vunpack.c.l.s4 1934713408
        %v737 = vunpack.c.0.s8 %v736
        %v738 = vlaneseq
        %v739 = vshrl.u32 %v738, 7
        %v740 = vsub.s32 %v737, %v739
        %v741 = vrot.slane %v733, %v740
        %v743 = vunpack.c.l.s4 1934713408
        %v744 = vunpack.c.0.s8 %v743
        %v745 = vlaneseq
        %v746 = vshrl.u32 %v745, 7
        %v747 = vsub.s32 %v744, %v746
        %v748 = vrot.slane %v734, %v747
        %v749 = vcombine.high %v725, 0.0
        %v750 = vcombine.high %v732, 0.0
        %v751 = vcombine.high %v741, 0.0
        %v752 = vcombine.high %v748, 0.0
        %v753 = vcombine.low %v584, %v604
        %v755 = vunpack.c.l.s4 1983009808
        %v756 = vunpack.c.0.s8 %v755
        %v757 = vlaneseq
        %v758 = vshrl.u32 %v757, 7
        %v759 = vsub.s32 %v756, %v758
        %v760 = vrot.slane %v753, %v759
        %v761 = vcombine.low %v595, %v613
        %v763 = vunpack.c.l.s4 1983009808
        %v764 = vunpack.c.0.s8 %v763
        %v765 = vlaneseq
        %v766 = vshrl.u32 %v765, 7
        %v767 = vsub.s32 %v764, %v766
        %v768 = vrot.slane %v761, %v767
        %v769 = vcombine.low %v760, %v768
        %v771 = vunpack.c.l.s4 1934713408
        %v772 = vunpack.c.0.s8 %v771
        %v773 = vlaneseq
        %v774 = vshrl.u32 %v773, 7
        %v775 = vsub.s32 %v772, %v774
        %v776 = vrot.slane %v769, %v775
        %v777 = vcombine.low %v657, %v664
        %v779 = vunpack.c.l.s4 1983009808
        %v780 = vunpack.c.0.s8 %v779
        %v781 = vlaneseq
        %v782 = vshrl.u32 %v781, 7
        %v783 = vsub.s32 %v780, %v782
        %v784 = vrot.slane %v777, %v783
        %v785 = vcombine.low %v681, %v682
        %v787 = vunpack.c.l.s4 1983009808
        %v788 = vunpack.c.0.s8 %v787
        %v789 = vlaneseq
        %v790 = vshrl.u32 %v789, 7
        %v791 = vsub.s32 %v788, %v790
        %v792 = vrot.slane %v785, %v791
        %v793 = vcombine.low %v673, %v680
        %v795 = vunpack.c.l.s4 1983009808
        %v796 = vunpack.c.0.s8 %v795
        %v797 = vlaneseq
        %v798 = vshrl.u32 %v797, 7
        %v799 = vsub.s32 %v796, %v798
        %v800 = vrot.slane %v793, %v799
        %v801 = vcombine.low %v683, %v684
        %v803 = vunpack.c.l.s4 1983009808
        %v804 = vunpack.c.0.s8 %v803
        %v805 = vlaneseq
        %v806 = vshrl.u32 %v805, 7
        %v807 = vsub.s32 %v804, %v806
        %v808 = vrot.slane %v801, %v807
        %v809 = vcombine.low %v784, %v792
        %v810 = vcombine.high %v784, %v792
        %v812 = vunpack.c.l.s4 1934713408
        %v813 = vunpack.c.0.s8 %v812
        %v814 = vlaneseq
        %v815 = vshrl.u32 %v814, 7
        %v816 = vsub.s32 %v813, %v815
        %v817 = vrot.slane %v809, %v816
        %v819 = vunpack.c.l.s4 1934713408
        %v820 = vunpack.c.0.s8 %v819
        %v821 = vlaneseq
        %v822 = vshrl.u32 %v821, 7
        %v823 = vsub.s32 %v820, %v822
        %v824 = vrot.slane %v810, %v823
        %v825 = vcombine.low %v800, %v808
        %v826 = vcombine.high %v800, %v808
        %v828 = vunpack.c.l.s4 1934713408
        %v829 = vunpack.c.0.s8 %v828
        %v830 = vlaneseq
        %v831 = vshrl.u32 %v830, 7
        %v832 = vsub.s32 %v829, %v831
        %v833 = vrot.slane %v825, %v832
        %v835 = vunpack.c.l.s4 1934713408
        %v836 = vunpack.c.0.s8 %v835
        %v837 = vlaneseq
        %v838 = vshrl.u32 %v837, 7
        %v839 = vsub.s32 %v836, %v838
        %v840 = vrot.slane %v826, %v839
        %v841 = vcombine.low %v817, %v833
        %v842 = vcombine.high %v817, %v833
        %v843 = vcombine.low %v824, %v840
        %v844 = vcombine.high %v824, %v840
        %v845 = vcombine.low %v725, %v732
        %v847 = vunpack.c.l.s4 1983009808
        %v848 = vunpack.c.0.s8 %v847
        %v849 = vlaneseq
        %v850 = vshrl.u32 %v849, 7
        %v851 = vsub.s32 %v848, %v850
        %v852 = vrot.slane %v845, %v851
        %v853 = vcombine.low %v749, %v750
        %v855 = vunpack.c.l.s4 1983009808
        %v856 = vunpack.c.0.s8 %v855
        %v857 = vlaneseq
        %v858 = vshrl.u32 %v857, 7
        %v859 = vsub.s32 %v856, %v858
        %v860 = vrot.slane %v853, %v859
        %v861 = vcombine.low %v741, %v748
        %v863 = vunpack.c.l.s4 1983009808
        %v864 = vunpack.c.0.s8 %v863
        %v865 = vlaneseq
        %v866 = vshrl.u32 %v865, 7
        %v867 = vsub.s32 %v864, %v866
        %v868 = vrot.slane %v861, %v867
        %v869 = vcombine.low %v751, %v752
        %v871 = vunpack.c.l.s4 1983009808
        %v872 = vunpack.c.0.s8 %v871
        %v873 = vlaneseq
        %v874 = vshrl.u32 %v873, 7
        %v875 = vsub.s32 %v872, %v874
        %v876 = vrot.slane %v869, %v875
        %v877 = vcombine.low %v852, %v860
        %v878 = vcombine.high %v852, %v860
        %v880 = vunpack.c.l.s4 1934713408
        %v881 = vunpack.c.0.s8 %v880
        %v882 = vlaneseq
        %v883 = vshrl.u32 %v882, 7
        %v884 = vsub.s32 %v881, %v883
        %v885 = vrot.slane %v877, %v884
        %v887 = vunpack.c.l.s4 1934713408
        %v888 = vunpack.c.0.s8 %v887
        %v889 = vlaneseq
        %v890 = vshrl.u32 %v889, 7
        %v891 = vsub.s32 %v888, %v890
        %v892 = vrot.slane %v878, %v891
        %v893 = vcombine.low %v868, %v876
        %v894 = vcombine.high %v868, %v876
        %v896 = vunpack.c.l.s4 1934713408
        %v897 = vunpack.c.0.s8 %v896
        %v898 = vlaneseq
        %v899 = vshrl.u32 %v898, 7
        %v900 = vsub.s32 %v897, %v899
        %v901 = vrot.slane %v893, %v900
        %v903 = vunpack.c.l.s4 1934713408
        %v904 = vunpack.c.0.s8 %v903
        %v905 = vlaneseq
        %v906 = vshrl.u32 %v905, 7
        %v907 = vsub.s32 %v904, %v906
        %v908 = vrot.slane %v894, %v907
        %v909 = vcombine.low %v885, %v901
        %v910 = vcombine.high %v885, %v901
        %v911 = vcombine.low %v892, %v908
        %v912 = vcombine.high %v892, %v908
        %v914 = vunpack.c.l.s4 1983009808
        %v915 = vunpack.c.0.s8 %v914
        %v916 = vlaneseq
        %v917 = vshrl.u32 %v916, 7
        %v918 = vsub.s32 %v915, %v917
        %v919 = vrot.slane %v776, %v918
        %v920 = vcombine.high %v776, 0.0
        %v922 = vunpack.c.l.s4 1983009808
        %v923 = vunpack.c.0.s8 %v922
        %v924 = vlaneseq
        %v925 = vshrl.u32 %v924, 7
        %v926 = vsub.s32 %v923, %v925
        %v927 = vrot.slane %v920, %v926
        %v928 = vcombine.low %v919, %v927
        %v929 = vcombine.high %v919, %v927
        %v931 = vunpack.c.l.s4 1934713408
        %v932 = vunpack.c.0.s8 %v931
        %v933 = vlaneseq
        %v934 = vshrl.u32 %v933, 7
        %v935 = vsub.s32 %v932, %v934
        %v936 = vrot.slane %v928, %v935
        %v938 = vunpack.c.l.s4 1934713408
        %v939 = vunpack.c.0.s8 %v938
        %v940 = vlaneseq
        %v941 = vshrl.u32 %v940, 7
        %v942 = vsub.s32 %v939, %v941
        %v943 = vrot.slane %v929, %v942
        %v944 = vcombine.high %v936, 0.0
        %v945 = vcombine.high %v943, 0.0
        %v958 = vcombine.high %v841, %v841
        %v960 = vunpack.c.l.s4 1983009808
        %v961 = vunpack.c.0.s8 %v960
        %v962 = vlaneseq
        %v963 = vshrl.u32 %v962, 7
        %v964 = vsub.s32 %v961, %v963
        %v965 = vrot.slane %v841, %v964
        %v967 = vunpack.c.l.s4 1983009808
        %v968 = vunpack.c.0.s8 %v967
        %v969 = vlaneseq
        %v970 = vshrl.u32 %v969, 7
        %v971 = vsub.s32 %v968, %v970
        %v972 = vrot.slane %v958, %v971
        %v973 = vcombine.high %v965, %v965
        %v974 = vcombine.high %v972, %v972
        %v975 = vcombine.high %v909, %v909
        %v977 = vunpack.c.l.s4 1983009808
        %v978 = vunpack.c.0.s8 %v977
        %v979 = vlaneseq
        %v980 = vshrl.u32 %v979, 7
        %v981 = vsub.s32 %v978, %v980
        %v982 = vrot.slane %v909, %v981
        %v984 = vunpack.c.l.s4 1983009808
        %v985 = vunpack.c.0.s8 %v984
        %v986 = vlaneseq
        %v987 = vshrl.u32 %v986, 7
        %v988 = vsub.s32 %v985, %v987
        %v989 = vrot.slane %v975, %v988
        %v990 = vcombine.high %v982, %v982
        %v991 = vcombine.high %v989, %v989
        %v993 = vunpack.c.l.s4 1983009808
        %v994 = vunpack.c.0.s8 %v993
        %v995 = vlaneseq
        %v996 = vshrl.u32 %v995, 7
        %v997 = vsub.s32 %v994, %v996
        %v998 = vrot.slane %v936, %v997
        %v999 = vcombine.high %v842, %v842
        %v1001 = vunpack.c.l.s4 1983009808
        %v1002 = vunpack.c.0.s8 %v1001
        %v1003 = vlaneseq
        %v1004 = vshrl.u32 %v1003, 7
        %v1005 = vsub.s32 %v1002, %v1004
        %v1006 = vrot.slane %v842, %v1005
        %v1008 = vunpack.c.l.s4 1983009808
        %v1009 = vunpack.c.0.s8 %v1008
        %v1010 = vlaneseq
        %v1011 = vshrl.u32 %v1010, 7
        %v1012 = vsub.s32 %v1009, %v1011
        %v1013 = vrot.slane %v999, %v1012
        %v1014 = vcombine.high %v1006, %v1006
        %v1015 = vcombine.high %v1013, %v1013
        %v1016 = vcombine.high %v910, %v910
        %v1018 = vunpack.c.l.s4 1983009808
        %v1019 = vunpack.c.0.s8 %v1018
        %v1020 = vlaneseq
        %v1021 = vshrl.u32 %v1020, 7
        %v1022 = vsub.s32 %v1019, %v1021
        %v1023 = vrot.slane %v910, %v1022
        %v1025 = vunpack.c.l.s4 1983009808
        %v1026 = vunpack.c.0.s8 %v1025
        %v1027 = vlaneseq
        %v1028 = vshrl.u32 %v1027, 7
        %v1029 = vsub.s32 %v1026, %v1028
        %v1030 = vrot.slane %v1016, %v1029
        %v1031 = vcombine.high %v1023, %v1023
        %v1032 = vcombine.high %v1030, %v1030
        %v1034 = vunpack.c.l.s4 1983009808
        %v1035 = vunpack.c.0.s8 %v1034
        %v1036 = vlaneseq
        %v1037 = vshrl.u32 %v1036, 7
        %v1038 = vsub.s32 %v1035, %v1037
        %v1039 = vrot.slane %v944, %v1038
        %v1040 = vcombine.high %v843, %v843
        %v1042 = vunpack.c.l.s4 1983009808
        %v1043 = vunpack.c.0.s8 %v1042
        %v1044 = vlaneseq
        %v1045 = vshrl.u32 %v1044, 7
        %v1046 = vsub.s32 %v1043, %v1045
        %v1047 = vrot.slane %v843, %v1046
        %v1049 = vunpack.c.l.s4 1983009808
        %v1050 = vunpack.c.0.s8 %v1049
        %v1051 = vlaneseq
        %v1052 = vshrl.u32 %v1051, 7
        %v1053 = vsub.s32 %v1050, %v1052
        %v1054 = vrot.slane %v1040, %v1053
        %v1055 = vcombine.high %v1047, %v1047
        %v1056 = vcombine.high %v1054, %v1054
        %v1057 = vcombine.high %v911, %v911
        %v1059 = vunpack.c.l.s4 1983009808
        %v1060 = vunpack.c.0.s8 %v1059
        %v1061 = vlaneseq
        %v1062 = vshrl.u32 %v1061, 7
        %v1063 = vsub.s32 %v1060, %v1062
        %v1064 = vrot.slane %v911, %v1063
        %v1066 = vunpack.c.l.s4 1983009808
        %v1067 = vunpack.c.0.s8 %v1066
        %v1068 = vlaneseq
        %v1069 = vshrl.u32 %v1068, 7
        %v1070 = vsub.s32 %v1067, %v1069
        %v1071 = vrot.slane %v1057, %v1070
        %v1072 = vcombine.high %v1064, %v1064
        %v1073 = vcombine.high %v1071, %v1071
        %v1075 = vunpack.c.l.s4 1983009808
        %v1076 = vunpack.c.0.s8 %v1075
        %v1077 = vlaneseq
        %v1078 = vshrl.u32 %v1077, 7
        %v1079 = vsub.s32 %v1076, %v1078
        %v1080 = vrot.slane %v943, %v1079
        %v1081 = vcombine.high %v844, %v844
        %v1083 = vunpack.c.l.s4 1983009808
        %v1084 = vunpack.c.0.s8 %v1083
        %v1085 = vlaneseq
        %v1086 = vshrl.u32 %v1085, 7
        %v1087 = vsub.s32 %v1084, %v1086
        %v1088 = vrot.slane %v844, %v1087
        %v1090 = vunpack.c.l.s4 1983009808
        %v1091 = vunpack.c.0.s8 %v1090
        %v1092 = vlaneseq
        %v1093 = vshrl.u32 %v1092, 7
        %v1094 = vsub.s32 %v1091, %v1093
        %v1095 = vrot.slane %v1081, %v1094
        %v1096 = vcombine.high %v1088, %v1088
        %v1097 = vcombine.high %v1095, %v1095
        %v1098 = vcombine.high %v912, %v912
        %v1100 = vunpack.c.l.s4 1983009808
        %v1101 = vunpack.c.0.s8 %v1100
        %v1102 = vlaneseq
        %v1103 = vshrl.u32 %v1102, 7
        %v1104 = vsub.s32 %v1101, %v1103
        %v1105 = vrot.slane %v912, %v1104
        %v1107 = vunpack.c.l.s4 1983009808
        %v1108 = vunpack.c.0.s8 %v1107
        %v1109 = vlaneseq
        %v1110 = vshrl.u32 %v1109, 7
        %v1111 = vsub.s32 %v1108, %v1110
        %v1112 = vrot.slane %v1098, %v1111
        %v1113 = vcombine.high %v1105, %v1105
        %v1114 = vcombine.high %v1112, %v1112
        %v1116 = vunpack.c.l.s4 1983009808
        %v1117 = vunpack.c.0.s8 %v1116
        %v1118 = vlaneseq
        %v1119 = vshrl.u32 %v1118, 7
        %v1120 = vsub.s32 %v1117, %v1119
        %v1121 = vrot.slane %v945, %v1120
        %v1122 = vld [vmem:[%s3] sm:$0xff]
        %v1123 = vcombine.low %v965, %v973
        %v1124 = vcombine.low %v972, %v974
        %v1126 = vunpack.c.l.s4 1983009808
        %v1127 = vunpack.c.0.s8 %v1126
        %v1128 = vlaneseq
        %v1129 = vshrl.u32 %v1128, 7
        %v1130 = vsub.s32 %v1127, %v1129
        %v1131 = vrot.slane %v1123, %v1130
        %v1133 = vunpack.c.l.s4 1983009808
        %v1134 = vunpack.c.0.s8 %v1133
        %v1135 = vlaneseq
        %v1136 = vshrl.u32 %v1135, 7
        %v1137 = vsub.s32 %v1134, %v1136
        %v1138 = vrot.slane %v1124, %v1137
        %v1139 = vcombine.low %v1131, %v1138
        %v1140 = vcombine.low %v982, %v990
        %v1141 = vcombine.low %v989, %v991
        %v1143 = vunpack.c.l.s4 1983009808
        %v1144 = vunpack.c.0.s8 %v1143
        %v1145 = vlaneseq
        %v1146 = vshrl.u32 %v1145, 7
        %v1147 = vsub.s32 %v1144, %v1146
        %v1148 = vrot.slane %v1140, %v1147
        %v1150 = vunpack.c.l.s4 1983009808
        %v1151 = vunpack.c.0.s8 %v1150
        %v1152 = vlaneseq
        %v1153 = vshrl.u32 %v1152, 7
        %v1154 = vsub.s32 %v1151, %v1153
        %v1155 = vrot.slane %v1141, %v1154
        %v1156 = vcombine.low %v1148, %v1155
        %v1157 = vcombine.low %v998, %v1006
        %v1158 = vcombine.low %v1014, %v1013
        %v1160 = vunpack.c.l.s4 1983009808
        %v1161 = vunpack.c.0.s8 %v1160
        %v1162 = vlaneseq
        %v1163 = vshrl.u32 %v1162, 7
        %v1164 = vsub.s32 %v1161, %v1163
        %v1165 = vrot.slane %v1157, %v1164
        %v1167 = vunpack.c.l.s4 1983009808
        %v1168 = vunpack.c.0.s8 %v1167
        %v1169 = vlaneseq
        %v1170 = vshrl.u32 %v1169, 7
        %v1171 = vsub.s32 %v1168, %v1170
        %v1172 = vrot.slane %v1158, %v1171
        %v1173 = vcombine.low %v1165, %v1172
        %v1174 = vcombine.low %v1015, %v1023
        %v1175 = vcombine.low %v1031, %v1030
        %v1177 = vunpack.c.l.s4 1983009808
        %v1178 = vunpack.c.0.s8 %v1177
        %v1179 = vlaneseq
        %v1180 = vshrl.u32 %v1179, 7
        %v1181 = vsub.s32 %v1178, %v1180
        %v1182 = vrot.slane %v1174, %v1181
        %v1184 = vunpack.c.l.s4 1983009808
        %v1185 = vunpack.c.0.s8 %v1184
        %v1186 = vlaneseq
        %v1187 = vshrl.u32 %v1186, 7
        %v1188 = vsub.s32 %v1185, %v1187
        %v1189 = vrot.slane %v1175, %v1188
        %v1190 = vcombine.low %v1182, %v1189
        %v1191 = vcombine.low %v1032, %v1039
        %v1192 = vcombine.low %v1047, %v1055
        %v1194 = vunpack.c.l.s4 1983009808
        %v1195 = vunpack.c.0.s8 %v1194
        %v1196 = vlaneseq
        %v1197 = vshrl.u32 %v1196, 7
        %v1198 = vsub.s32 %v1195, %v1197
        %v1199 = vrot.slane %v1191, %v1198
        %v1201 = vunpack.c.l.s4 1983009808
        %v1202 = vunpack.c.0.s8 %v1201
        %v1203 = vlaneseq
        %v1204 = vshrl.u32 %v1203, 7
        %v1205 = vsub.s32 %v1202, %v1204
        %v1206 = vrot.slane %v1192, %v1205
        %v1207 = vcombine.low %v1199, %v1206
        %v1208 = vcombine.low %v1054, %v1056
        %v1209 = vcombine.low %v1064, %v1072
        %v1211 = vunpack.c.l.s4 1983009808
        %v1212 = vunpack.c.0.s8 %v1211
        %v1213 = vlaneseq
        %v1214 = vshrl.u32 %v1213, 7
        %v1215 = vsub.s32 %v1212, %v1214
        %v1216 = vrot.slane %v1208, %v1215
        %v1218 = vunpack.c.l.s4 1983009808
        %v1219 = vunpack.c.0.s8 %v1218
        %v1220 = vlaneseq
        %v1221 = vshrl.u32 %v1220, 7
        %v1222 = vsub.s32 %v1219, %v1221
        %v1223 = vrot.slane %v1209, %v1222
        %v1224 = vcombine.low %v1216, %v1223
        %v1225 = vcombine.low %v1071, %v1073
        %v1226 = vcombine.low %v1080, %v1088
        %v1228 = vunpack.c.l.s4 1983009808
        %v1229 = vunpack.c.0.s8 %v1228
        %v1230 = vlaneseq
        %v1231 = vshrl.u32 %v1230, 7
        %v1232 = vsub.s32 %v1229, %v1231
        %v1233 = vrot.slane %v1225, %v1232
        %v1235 = vunpack.c.l.s4 1983009808
        %v1236 = vunpack.c.0.s8 %v1235
        %v1237 = vlaneseq
        %v1238 = vshrl.u32 %v1237, 7
        %v1239 = vsub.s32 %v1236, %v1238
        %v1240 = vrot.slane %v1226, %v1239
        %v1241 = vcombine.low %v1233, %v1240
        %v1242 = vcombine.low %v1096, %v1095
        %v1243 = vcombine.low %v1097, %v1105
        %v1245 = vunpack.c.l.s4 1983009808
        %v1246 = vunpack.c.0.s8 %v1245
        %v1247 = vlaneseq
        %v1248 = vshrl.u32 %v1247, 7
        %v1249 = vsub.s32 %v1246, %v1248
        %v1250 = vrot.slane %v1242, %v1249
        %v1252 = vunpack.c.l.s4 1983009808
        %v1253 = vunpack.c.0.s8 %v1252
        %v1254 = vlaneseq
        %v1255 = vshrl.u32 %v1254, 7
        %v1256 = vsub.s32 %v1253, %v1255
        %v1257 = vrot.slane %v1243, %v1256
        %v1258 = vcombine.low %v1250, %v1257
        %v1259 = vcombine.low %v1113, %v1112
        %v1260 = vcombine.low %v1114, %v1121
        %v1262 = vunpack.c.l.s4 1983009808
        %v1263 = vunpack.c.0.s8 %v1262
        %v1264 = vlaneseq
        %v1265 = vshrl.u32 %v1264, 7
        %v1266 = vsub.s32 %v1263, %v1265
        %v1267 = vrot.slane %v1259, %v1266
        %v1269 = vunpack.c.l.s4 1983009808
        %v1270 = vunpack.c.0.s8 %v1269
        %v1271 = vlaneseq
        %v1272 = vshrl.u32 %v1271, 7
        %v1273 = vsub.s32 %v1270, %v1272
        %v1274 = vrot.slane %v1260, %v1273
        %v1275 = vcombine.low %v1267, %v1274
        %v1276 = vsel %vm489, %v1139, 0
        %v1278 = vsel %vm489, %v1156, 0
        %v1280 = vsel %vm489, %v1173, 0
        %v1282 = vsel %vm489, %v1190, 0
        %v1284 = vsel %vm489, %v1207, 0
        %v1286 = vsel %vm489, %v1224, 0
        %v1288 = vsel %vm489, %v1241, 0
        %v1290 = vsel %vm489, %v1258, 0
        %v1292 = vsel %vm489, %v1275, 0
        %1294 = vmatprep.subr.mxu0 0.0
        %1295 = vmatpush1.msra.mxu0 %v1122
        %1296 = vmatprep.subr.mxu0 0.0
        %1297 = vmatpush1.msra.mxu0 0.0
        %1298 = vmatprep.subr.mxu0 0.0
        %1299 = vmatpush1.msra.mxu0 0.0
        %1300 = vmatprep.subr.mxu0 0.0
        %1301 = vmatpush1.msra.mxu0 0.0
        %1302 = vmatprep.subr.mxu0 0.0
        %1303 = vmatpush1.msra.mxu0 0.0
        %1304 = vmatprep.subr.mxu0 0.0
        %1305 = vmatpush1.msra.mxu0 0.0
        %1306 = vmatprep.subr.mxu0 0.0
        %1307 = vmatpush1.msra.mxu0 0.0
        %1308 = vmatprep.subr.mxu0 0.0
        %1309 = vmatpush1.msra.mxu0 0.0
        %1310 = vmatprep.subr.mxu0 0.0
        %1311 = vmatpush1.msra.mxu0 0.0
        %1312 = vmatprep.subr.mxu0 0.0
        %1313 = vmatpush1.msra.mxu0 0.0
        %1314 = vmatprep.subr.mxu0 0.0
        %1315 = vmatpush1.msra.mxu0 0.0
        %1316 = vmatprep.subr.mxu0 0.0
        %1317 = vmatpush1.msra.mxu0 0.0
        %1318 = vmatprep.subr.mxu0 0.0
        %1319 = vmatpush1.msra.mxu0 0.0
        %1320 = vmatprep.subr.mxu0 0.0
        %1321 = vmatpush1.msra.mxu0 0.0
        %1322 = vmatprep.subr.mxu0 0.0
        %1323 = vmatpush1.msra.mxu0 0.0
        %1324 = vmatprep.subr.mxu0 0.0
        %1325 = vmatpush1.msra.mxu0 0.0
        %1326 = vmatprep.subr.mxu0 0.0
        %1327 = vmatpush1.msra.mxu0 0.0
        %1328 = vmatprep.subr.mxu0 0.0
        %1329 = vmatpush1.msra.mxu0 0.0
        %1330 = vmatprep.subr.mxu0 0.0
        %1331 = vmatpush1.msra.mxu0 0.0
        %1332 = vmatprep.subr.mxu0 0.0
        %1333 = vmatpush1.msra.mxu0 0.0
        %1334 = vmatprep.subr.mxu0 0.0
        %1335 = vmatpush1.msra.mxu0 0.0
        %1336 = vmatprep.subr.mxu0 0.0
        %1337 = vmatpush1.msra.mxu0 0.0
        %1338 = vmatprep.subr.mxu0 0.0
        %1339 = vmatpush1.msra.mxu0 0.0
        %1340 = vmatprep.subr.mxu0 0.0
        %1341 = vmatpush1.msra.mxu0 0.0
        %1342 = vmatprep.subr.mxu0 0.0
        %1343 = vmatpush1.msra.mxu0 0.0
        %1344 = vmatprep.subr.mxu0 0.0
        %1345 = vmatpush1.msra.mxu0 0.0
        %1346 = vmatprep.subr.mxu0 0.0
        %1347 = vmatpush1.msra.mxu0 0.0
        %1348 = vmatprep.subr.mxu0 0.0
        %1349 = vmatpush1.msra.mxu0 0.0
        %1350 = vmatprep.subr.mxu0 0.0
        %1351 = vmatpush1.msra.mxu0 0.0
        %1352 = vmatprep.subr.mxu0 0.0
        %1353 = vmatpush1.msra.mxu0 0.0
        %1354 = vmatprep.subr.mxu0 0.0
        %1355 = vmatpush1.msra.mxu0 0.0
        %1356 = vmatprep.subr.mxu0 0.0
        %1357 = vmatpush1.msra.mxu0 0.0
        %1358 = vmatprep.mubr.f32.mxu0 0.0
        %1359 = vmatmul.mubr.f32.gmra.mrb[0].mxu0 %v1276
        %v1360 = vpop.f32.mrb[0].mxu0
        %v1361 = vadd.f32 0.0, %v1360
        %v1362 = vpop.f32.mrb[0].mxu0
        %1363 = vmatprep.mubr.f32.mxu0 0.0
        %1364 = vmatmul.mubr.f32.gmra.mrb[0].mxu0 %v1278
        %v1365 = vpop.f32.mrb[0].mxu0
        %v1366 = vadd.f32 0.0, %v1365
        %v1367 = vpop.f32.mrb[0].mxu0
        %1368 = vmatprep.mubr.f32.mxu0 0.0
        %1369 = vmatmul.mubr.f32.gmra.mrb[0].mxu0 %v1280
        %v1370 = vpop.f32.mrb[0].mxu0
        %v1371 = vadd.f32 0.0, %v1370
        %v1372 = vpop.f32.mrb[0].mxu0
        %1373 = vmatprep.mubr.f32.mxu0 0.0
        %1374 = vmatmul.mubr.f32.gmra.mrb[0].mxu0 %v1282
        %v1375 = vpop.f32.mrb[0].mxu0
        %v1376 = vadd.f32 0.0, %v1375
        %v1377 = vpop.f32.mrb[0].mxu0
        %1378 = vmatprep.mubr.f32.mxu0 0.0
        %1379 = vmatmul.mubr.f32.gmra.mrb[0].mxu0 %v1284
        %v1380 = vpop.f32.mrb[0].mxu0
        %v1381 = vadd.f32 0.0, %v1380
        %v1382 = vpop.f32.mrb[0].mxu0
        %1383 = vmatprep.mubr.f32.mxu0 0.0
        %1384 = vmatmul.mubr.f32.gmra.mrb[0].mxu0 %v1286
        %v1385 = vpop.f32.mrb[0].mxu0
        %v1386 = vadd.f32 0.0, %v1385
        %v1387 = vpop.f32.mrb[0].mxu0
        %1388 = vmatprep.mubr.f32.mxu0 0.0
        %1389 = vmatmul.mubr.f32.gmra.mrb[0].mxu0 %v1288
        %v1390 = vpop.f32.mrb[0].mxu0
        %v1391 = vadd.f32 0.0, %v1390
        %v1392 = vpop.f32.mrb[0].mxu0
        %1393 = vmatprep.mubr.f32.mxu0 0.0
        %1394 = vmatmul.mubr.f32.gmra.mrb[0].mxu0 %v1290
        %v1395 = vpop.f32.mrb[0].mxu0
        %v1396 = vadd.f32 0.0, %v1395
        %v1397 = vpop.f32.mrb[0].mxu0
        %1398 = vmatprep.mubr.f32.mxu0 0.0
        %1399 = vmatmul.mubr.f32.gmra.mrb[0].mxu0 %v1292
        %v1400 = vpop.f32.mrb[0].mxu0
        %v1401 = vadd.f32 0.0, %v1400
        %v1402 = vpop.f32.mrb[0].mxu0
        %1403 = vdwg.mxu0
        %v1413 = vcombine.high %v1361, %v1361
        %v1415 = vunpack.c.l.s4 1983009808
        %v1416 = vunpack.c.0.s8 %v1415
        %v1417 = vlaneseq
        %v1418 = vshrl.u32 %v1417, 7
        %v1419 = vsub.s32 %v1416, %v1418
        %v1420 = vrot.slane %v1361, %v1419
        %v1422 = vunpack.c.l.s4 1983009808
        %v1423 = vunpack.c.0.s8 %v1422
        %v1424 = vlaneseq
        %v1425 = vshrl.u32 %v1424, 7
        %v1426 = vsub.s32 %v1423, %v1425
        %v1427 = vrot.slane %v1413, %v1426
        %v1428 = vcombine.high %v1420, %v1420
        %v1429 = vcombine.high %v1427, %v1427
        %v1430 = vcombine.high %v1366, %v1366
        %v1432 = vunpack.c.l.s4 1983009808
        %v1433 = vunpack.c.0.s8 %v1432
        %v1434 = vlaneseq
        %v1435 = vshrl.u32 %v1434, 7
        %v1436 = vsub.s32 %v1433, %v1435
        %v1437 = vrot.slane %v1366, %v1436
        %v1439 = vunpack.c.l.s4 1983009808
        %v1440 = vunpack.c.0.s8 %v1439
        %v1441 = vlaneseq
        %v1442 = vshrl.u32 %v1441, 7
        %v1443 = vsub.s32 %v1440, %v1442
        %v1444 = vrot.slane %v1430, %v1443
        %v1445 = vcombine.high %v1437, %v1437
        %v1446 = vcombine.high %v1444, %v1444
        %v1447 = vcombine.high %v1371, %v1371
        %v1449 = vunpack.c.l.s4 1983009808
        %v1450 = vunpack.c.0.s8 %v1449
        %v1451 = vlaneseq
        %v1452 = vshrl.u32 %v1451, 7
        %v1453 = vsub.s32 %v1450, %v1452
        %v1454 = vrot.slane %v1371, %v1453
        %v1456 = vunpack.c.l.s4 1983009808
        %v1457 = vunpack.c.0.s8 %v1456
        %v1458 = vlaneseq
        %v1459 = vshrl.u32 %v1458, 7
        %v1460 = vsub.s32 %v1457, %v1459
        %v1461 = vrot.slane %v1447, %v1460
        %v1462 = vcombine.high %v1454, %v1454
        %v1463 = vcombine.high %v1461, %v1461
        %v1464 = vcombine.high %v1376, %v1376
        %v1466 = vunpack.c.l.s4 1983009808
        %v1467 = vunpack.c.0.s8 %v1466
        %v1468 = vlaneseq
        %v1469 = vshrl.u32 %v1468, 7
        %v1470 = vsub.s32 %v1467, %v1469
        %v1471 = vrot.slane %v1376, %v1470
        %v1473 = vunpack.c.l.s4 1983009808
        %v1474 = vunpack.c.0.s8 %v1473
        %v1475 = vlaneseq
        %v1476 = vshrl.u32 %v1475, 7
        %v1477 = vsub.s32 %v1474, %v1476
        %v1478 = vrot.slane %v1464, %v1477
        %v1479 = vcombine.high %v1471, %v1471
        %v1480 = vcombine.high %v1478, %v1478
        %v1481 = vcombine.high %v1381, %v1381
        %v1483 = vunpack.c.l.s4 1983009808
        %v1484 = vunpack.c.0.s8 %v1483
        %v1485 = vlaneseq
        %v1486 = vshrl.u32 %v1485, 7
        %v1487 = vsub.s32 %v1484, %v1486
        %v1488 = vrot.slane %v1381, %v1487
        %v1490 = vunpack.c.l.s4 1983009808
        %v1491 = vunpack.c.0.s8 %v1490
        %v1492 = vlaneseq
        %v1493 = vshrl.u32 %v1492, 7
        %v1494 = vsub.s32 %v1491, %v1493
        %v1495 = vrot.slane %v1481, %v1494
        %v1496 = vcombine.high %v1488, %v1488
        %v1497 = vcombine.high %v1495, %v1495
        %v1498 = vcombine.high %v1386, %v1386
        %v1500 = vunpack.c.l.s4 1983009808
        %v1501 = vunpack.c.0.s8 %v1500
        %v1502 = vlaneseq
        %v1503 = vshrl.u32 %v1502, 7
        %v1504 = vsub.s32 %v1501, %v1503
        %v1505 = vrot.slane %v1386, %v1504
        %v1507 = vunpack.c.l.s4 1983009808
        %v1508 = vunpack.c.0.s8 %v1507
        %v1509 = vlaneseq
        %v1510 = vshrl.u32 %v1509, 7
        %v1511 = vsub.s32 %v1508, %v1510
        %v1512 = vrot.slane %v1498, %v1511
        %v1513 = vcombine.high %v1505, %v1505
        %v1514 = vcombine.high %v1512, %v1512
        %v1515 = vcombine.high %v1391, %v1391
        %v1517 = vunpack.c.l.s4 1983009808
        %v1518 = vunpack.c.0.s8 %v1517
        %v1519 = vlaneseq
        %v1520 = vshrl.u32 %v1519, 7
        %v1521 = vsub.s32 %v1518, %v1520
        %v1522 = vrot.slane %v1391, %v1521
        %v1524 = vunpack.c.l.s4 1983009808
        %v1525 = vunpack.c.0.s8 %v1524
        %v1526 = vlaneseq
        %v1527 = vshrl.u32 %v1526, 7
        %v1528 = vsub.s32 %v1525, %v1527
        %v1529 = vrot.slane %v1515, %v1528
        %v1530 = vcombine.high %v1522, %v1522
        %v1531 = vcombine.high %v1529, %v1529
        %v1532 = vcombine.high %v1396, %v1396
        %v1534 = vunpack.c.l.s4 1983009808
        %v1535 = vunpack.c.0.s8 %v1534
        %v1536 = vlaneseq
        %v1537 = vshrl.u32 %v1536, 7
        %v1538 = vsub.s32 %v1535, %v1537
        %v1539 = vrot.slane %v1396, %v1538
        %v1541 = vunpack.c.l.s4 1983009808
        %v1542 = vunpack.c.0.s8 %v1541
        %v1543 = vlaneseq
        %v1544 = vshrl.u32 %v1543, 7
        %v1545 = vsub.s32 %v1542, %v1544
        %v1546 = vrot.slane %v1532, %v1545
        %v1547 = vcombine.high %v1539, %v1539
        %v1548 = vcombine.high %v1546, %v1546
        %v1549 = vcombine.high %v1401, %v1401
        %v1551 = vunpack.c.l.s4 1983009808
        %v1552 = vunpack.c.0.s8 %v1551
        %v1553 = vlaneseq
        %v1554 = vshrl.u32 %v1553, 7
        %v1555 = vsub.s32 %v1552, %v1554
        %v1556 = vrot.slane %v1401, %v1555
        %v1558 = vunpack.c.l.s4 1983009808
        %v1559 = vunpack.c.0.s8 %v1558
        %v1560 = vlaneseq
        %v1561 = vshrl.u32 %v1560, 7
        %v1562 = vsub.s32 %v1559, %v1561
        %v1563 = vrot.slane %v1549, %v1562
        %v1564 = vcombine.high %v1556, %v1556
        %v1565 = vcombine.high %v1563, %v1563
        %v1566 = vld [vmem:[%s301] sm:$0xff]
        %v1567 = vld [vmem:[%s301 + $0x8] sm:$0xff]
        %v1568 = vld [vmem:[%s301 + $0x10] sm:$0xff]
        %v1569 = vld [vmem:[%s301 + $0x18] sm:$0xff]
        %v1570 = vld [vmem:[%s301 + $0x20] sm:$0xff]
        %v1571 = vld [vmem:[%s301 + $0x28] sm:$0xff]
        %v1572 = vld [vmem:[%s301 + $0x30] sm:$0xff]
        %v1573 = vld [vmem:[%s301 + $0x38] sm:$0xff]
        %1582 = vrot.lane.b32.xlu0 %v1566, 1
        %v1583 = vpop.permute.xlu0 %1582
        %1584 = vrot.lane.b32.xlu0 %v1567, 1
        %v1585 = vpop.permute.xlu0 %1584
        %1586 = vrot.lane.b32.xlu0 %v1568, 1
        %v1587 = vpop.permute.xlu0 %1586
        %1588 = vrot.lane.b32.xlu0 %v1569, 1
        %v1589 = vpop.permute.xlu0 %1588
        %1590 = vrot.lane.b32.xlu0 %v1570, 1
        %v1591 = vpop.permute.xlu0 %1590
        %1592 = vrot.lane.b32.xlu0 %v1571, 1
        %v1593 = vpop.permute.xlu0 %1592
        %1594 = vrot.lane.b32.xlu0 %v1572, 1
        %v1595 = vpop.permute.xlu0 %1594
        %1596 = vrot.lane.b32.xlu0 %v1573, 1
        %v1597 = vpop.permute.xlu0 %1596
        %vm1606 = vcmask 7168
        %v1607 = vsel %vm1606, 0.0, %v1583
        %v1608 = vsel %vm1606, 0.0, %v1585
        %v1609 = vsel %vm1606, 0.0, %v1587
        %v1610 = vsel %vm1606, 0.0, %v1589
        %v1611 = vsel %vm1606, 0.0, %v1591
        %v1612 = vsel %vm1606, 0.0, %v1593
        %v1613 = vsel %vm1606, 0.0, %v1595
        %v1614 = vsel %vm1606, 0.0, %v1597
        %vm1615 = vcmask 138240
        %v1616 = vsel %vm1615, %v1607, 0.0
        %v1617 = vsel %vm1615, %v1608, 0.0
        %v1618 = vsel %vm1615, %v1609, 0.0
        %v1619 = vsel %vm1615, %v1610, 0.0
        %v1620 = vsel %vm1615, %v1611, 0.0
        %v1621 = vsel %vm1615, %v1612, 0.0
        %v1622 = vsel %vm1615, %v1613, 0.0
        %v1623 = vsel %vm1615, %v1614, 0.0
        %vm1632 = vcmask 1040384
        %v1633 = vrot.slane %v1616, 7
        %v1634 = vrot.slane %v1617, 7
        %v1635 = vsel %vm1632, %v1633, %v1634
        %v1636 = vrot.slane %v1618, 7
        %v1637 = vrot.slane %v1619, 7
        %v1638 = vsel %vm1632, %v1636, %v1637
        %v1639 = vrot.slane %v1620, 7
        %v1640 = vrot.slane %v1621, 7
        %v1641 = vsel %vm1632, %v1639, %v1640
        %v1642 = vrot.slane %v1622, 7
        %v1643 = vrot.slane %v1623, 7
        %v1644 = vsel %vm1632, %v1642, %v1643
        %v1657 = vsel %vm1632, 0.0, %v1633
        %v1658 = vsel %vm1632, 0.0, %v1636
        %v1659 = vsel %vm1632, 0.0, %v1639
        %v1660 = vsel %vm1632, 0.0, %v1642
        %v1661 = vsel %vm1632, %v1634, 0.0
        %v1662 = vsel %vm1632, %v1637, 0.0
        %v1663 = vsel %vm1632, %v1640, 0.0
        %v1664 = vsel %vm1632, %v1643, 0.0
        %v1665 = vcombine.low %v1420, %v1428
        %v1666 = vcombine.low %v1427, %v1429
        %v1668 = vunpack.c.l.s4 1983009808
        %v1669 = vunpack.c.0.s8 %v1668
        %v1670 = vlaneseq
        %v1671 = vshrl.u32 %v1670, 7
        %v1672 = vsub.s32 %v1669, %v1671
        %v1673 = vrot.slane %v1665, %v1672
        %v1675 = vunpack.c.l.s4 1983009808
        %v1676 = vunpack.c.0.s8 %v1675
        %v1677 = vlaneseq
        %v1678 = vshrl.u32 %v1677, 7
        %v1679 = vsub.s32 %v1676, %v1678
        %v1680 = vrot.slane %v1666, %v1679
        %v1681 = vcombine.low %v1673, %v1680
        %v1682 = vcombine.low %v1437, %v1445
        %v1683 = vcombine.low %v1444, %v1446
        %v1685 = vunpack.c.l.s4 1983009808
        %v1686 = vunpack.c.0.s8 %v1685
        %v1687 = vlaneseq
        %v1688 = vshrl.u32 %v1687, 7
        %v1689 = vsub.s32 %v1686, %v1688
        %v1690 = vrot.slane %v1682, %v1689
        %v1692 = vunpack.c.l.s4 1983009808
        %v1693 = vunpack.c.0.s8 %v1692
        %v1694 = vlaneseq
        %v1695 = vshrl.u32 %v1694, 7
        %v1696 = vsub.s32 %v1693, %v1695
        %v1697 = vrot.slane %v1683, %v1696
        %v1698 = vcombine.low %v1690, %v1697
        %v1700 = vunpack.c.l.s4 1983009808
        %v1701 = vunpack.c.0.s8 %v1700
        %v1702 = vlaneseq
        %v1703 = vshrl.u32 %v1702, 7
        %v1704 = vsub.s32 %v1701, %v1703
        %v1705 = vrot.slane %v1454, %v1704
        %v1706 = vcombine.low %v1462, %v1461
        %v1707 = vcombine.low %v1463, %v1471
        %v1709 = vunpack.c.l.s4 1983009808
        %v1710 = vunpack.c.0.s8 %v1709
        %v1711 = vlaneseq
        %v1712 = vshrl.u32 %v1711, 7
        %v1713 = vsub.s32 %v1710, %v1712
        %v1714 = vrot.slane %v1706, %v1713
        %v1716 = vunpack.c.l.s4 1983009808
        %v1717 = vunpack.c.0.s8 %v1716
        %v1718 = vlaneseq
        %v1719 = vshrl.u32 %v1718, 7
        %v1720 = vsub.s32 %v1717, %v1719
        %v1721 = vrot.slane %v1707, %v1720
        %v1722 = vcombine.low %v1714, %v1721
        %v1723 = vcombine.low %v1479, %v1478
        %v1724 = vcombine.low %v1480, %v1488
        %v1726 = vunpack.c.l.s4 1983009808
        %v1727 = vunpack.c.0.s8 %v1726
        %v1728 = vlaneseq
        %v1729 = vshrl.u32 %v1728, 7
        %v1730 = vsub.s32 %v1727, %v1729
        %v1731 = vrot.slane %v1723, %v1730
        %v1733 = vunpack.c.l.s4 1983009808
        %v1734 = vunpack.c.0.s8 %v1733
        %v1735 = vlaneseq
        %v1736 = vshrl.u32 %v1735, 7
        %v1737 = vsub.s32 %v1734, %v1736
        %v1738 = vrot.slane %v1724, %v1737
        %v1739 = vcombine.low %v1731, %v1738
        %v1741 = vunpack.c.l.s4 1983009808
        %v1742 = vunpack.c.0.s8 %v1741
        %v1743 = vlaneseq
        %v1744 = vshrl.u32 %v1743, 7
        %v1745 = vsub.s32 %v1742, %v1744
        %v1746 = vrot.slane %v1496, %v1745
        %v1747 = vcombine.low %v1495, %v1497
        %v1748 = vcombine.low %v1505, %v1513
        %v1750 = vunpack.c.l.s4 1983009808
        %v1751 = vunpack.c.0.s8 %v1750
        %v1752 = vlaneseq
        %v1753 = vshrl.u32 %v1752, 7
        %v1754 = vsub.s32 %v1751, %v1753
        %v1755 = vrot.slane %v1747, %v1754
        %v1757 = vunpack.c.l.s4 1983009808
        %v1758 = vunpack.c.0.s8 %v1757
        %v1759 = vlaneseq
        %v1760 = vshrl.u32 %v1759, 7
        %v1761 = vsub.s32 %v1758, %v1760
        %v1762 = vrot.slane %v1748, %v1761
        %v1763 = vcombine.low %v1755, %v1762
        %v1764 = vcombine.low %v1512, %v1514
        %v1765 = vcombine.low %v1522, %v1530
        %v1767 = vunpack.c.l.s4 1983009808
        %v1768 = vunpack.c.0.s8 %v1767
        %v1769 = vlaneseq
        %v1770 = vshrl.u32 %v1769, 7
        %v1771 = vsub.s32 %v1768, %v1770
        %v1772 = vrot.slane %v1764, %v1771
        %v1774 = vunpack.c.l.s4 1983009808
        %v1775 = vunpack.c.0.s8 %v1774
        %v1776 = vlaneseq
        %v1777 = vshrl.u32 %v1776, 7
        %v1778 = vsub.s32 %v1775, %v1777
        %v1779 = vrot.slane %v1765, %v1778
        %v1780 = vcombine.low %v1772, %v1779
        %v1782 = vunpack.c.l.s4 1983009808
        %v1783 = vunpack.c.0.s8 %v1782
        %v1784 = vlaneseq
        %v1785 = vshrl.u32 %v1784, 7
        %v1786 = vsub.s32 %v1783, %v1785
        %v1787 = vrot.slane %v1529, %v1786
        %v1788 = vcombine.low %v1531, %v1539
        %v1789 = vcombine.low %v1547, %v1546
        %v1791 = vunpack.c.l.s4 1983009808
        %v1792 = vunpack.c.0.s8 %v1791
        %v1793 = vlaneseq
        %v1794 = vshrl.u32 %v1793, 7
        %v1795 = vsub.s32 %v1792, %v1794
        %v1796 = vrot.slane %v1788, %v1795
        %v1798 = vunpack.c.l.s4 1983009808
        %v1799 = vunpack.c.0.s8 %v1798
        %v1800 = vlaneseq
        %v1801 = vshrl.u32 %v1800, 7
        %v1802 = vsub.s32 %v1799, %v1801
        %v1803 = vrot.slane %v1789, %v1802
        %v1804 = vcombine.low %v1796, %v1803
        %v1805 = vcombine.low %v1548, %v1556
        %v1806 = vcombine.low %v1564, %v1563
        %v1808 = vunpack.c.l.s4 1983009808
        %v1809 = vunpack.c.0.s8 %v1808
        %v1810 = vlaneseq
        %v1811 = vshrl.u32 %v1810, 7
        %v1812 = vsub.s32 %v1809, %v1811
        %v1813 = vrot.slane %v1805, %v1812
        %v1815 = vunpack.c.l.s4 1983009808
        %v1816 = vunpack.c.0.s8 %v1815
        %v1817 = vlaneseq
        %v1818 = vshrl.u32 %v1817, 7
        %v1819 = vsub.s32 %v1816, %v1818
        %v1820 = vrot.slane %v1806, %v1819
        %v1821 = vcombine.low %v1813, %v1820
        %v1823 = vunpack.c.l.s4 1983009808
        %v1824 = vunpack.c.0.s8 %v1823
        %v1825 = vlaneseq
        %v1826 = vshrl.u32 %v1825, 7
        %v1827 = vsub.s32 %v1824, %v1826
        %v1828 = vrot.slane %v1565, %v1827
        %v1837 = vld [vmem:[%s4] sm:$0xf]
        %v1838 = vld [vmem:[%s5] sm:$0xf]
        %v1839 = vld [vmem:[%s6] sm:$0xf]
        %v1840 = vcombine.low %v1657, %v1659
        %v1841 = vcombine.high %v1657, %v1659
        %v1843 = vunpack.c.l.s4 1983009808
        %v1844 = vunpack.c.0.s8 %v1843
        %v1845 = vlaneseq
        %v1846 = vshrl.u32 %v1845, 7
        %v1847 = vsub.s32 %v1844, %v1846
        %v1848 = vrot.slane %v1840, %v1847
        %v1850 = vunpack.c.l.s4 1983009808
        %v1851 = vunpack.c.0.s8 %v1850
        %v1852 = vlaneseq
        %v1853 = vshrl.u32 %v1852, 7
        %v1854 = vsub.s32 %v1851, %v1853
        %v1855 = vrot.slane %v1841, %v1854
        %v1856 = vcombine.low %v1658, %v1660
        %v1857 = vcombine.high %v1658, %v1660
        %v1859 = vunpack.c.l.s4 1983009808
        %v1860 = vunpack.c.0.s8 %v1859
        %v1861 = vlaneseq
        %v1862 = vshrl.u32 %v1861, 7
        %v1863 = vsub.s32 %v1860, %v1862
        %v1864 = vrot.slane %v1856, %v1863
        %v1866 = vunpack.c.l.s4 1983009808
        %v1867 = vunpack.c.0.s8 %v1866
        %v1868 = vlaneseq
        %v1869 = vshrl.u32 %v1868, 7
        %v1870 = vsub.s32 %v1867, %v1869
        %v1871 = vrot.slane %v1857, %v1870
        %v1872 = vcombine.low %v1681, %v1763
        %v1873 = vcombine.high %v1681, %v1763
        %v1875 = vunpack.c.l.s4 1983009808
        %v1876 = vunpack.c.0.s8 %v1875
        %v1877 = vlaneseq
        %v1878 = vshrl.u32 %v1877, 7
        %v1879 = vsub.s32 %v1876, %v1878
        %v1880 = vrot.slane %v1872, %v1879
        %v1882 = vunpack.c.l.s4 1983009808
        %v1883 = vunpack.c.0.s8 %v1882
        %v1884 = vlaneseq
        %v1885 = vshrl.u32 %v1884, 7
        %v1886 = vsub.s32 %v1883, %v1885
        %v1887 = vrot.slane %v1873, %v1886
        %v1888 = vcombine.low %v1722, %v1804
        %v1889 = vcombine.high %v1722, %v1804
        %v1891 = vunpack.c.l.s4 1983009808
        %v1892 = vunpack.c.0.s8 %v1891
        %v1893 = vlaneseq
        %v1894 = vshrl.u32 %v1893, 7
        %v1895 = vsub.s32 %v1892, %v1894
        %v1896 = vrot.slane %v1888, %v1895
        %v1898 = vunpack.c.l.s4 1983009808
        %v1899 = vunpack.c.0.s8 %v1898
        %v1900 = vlaneseq
        %v1901 = vshrl.u32 %v1900, 7
        %v1902 = vsub.s32 %v1899, %v1901
        %v1903 = vrot.slane %v1889, %v1902
        %v1904 = vcombine.low %v1848, %v1864
        %v1905 = vcombine.high %v1848, %v1864
        %v1907 = vunpack.c.l.s4 1934713408
        %v1908 = vunpack.c.0.s8 %v1907
        %v1909 = vlaneseq
        %v1910 = vshrl.u32 %v1909, 7
        %v1911 = vsub.s32 %v1908, %v1910
        %v1912 = vrot.slane %v1904, %v1911
        %v1914 = vunpack.c.l.s4 1934713408
        %v1915 = vunpack.c.0.s8 %v1914
        %v1916 = vlaneseq
        %v1917 = vshrl.u32 %v1916, 7
        %v1918 = vsub.s32 %v1915, %v1917
        %v1919 = vrot.slane %v1905, %v1918
        %v1920 = vcombine.low %v1855, %v1871
        %v1921 = vcombine.high %v1855, %v1871
        %v1923 = vunpack.c.l.s4 1934713408
        %v1924 = vunpack.c.0.s8 %v1923
        %v1925 = vlaneseq
        %v1926 = vshrl.u32 %v1925, 7
        %v1927 = vsub.s32 %v1924, %v1926
        %v1928 = vrot.slane %v1920, %v1927
        %v1930 = vunpack.c.l.s4 1934713408
        %v1931 = vunpack.c.0.s8 %v1930
        %v1932 = vlaneseq
        %v1933 = vshrl.u32 %v1932, 7
        %v1934 = vsub.s32 %v1931, %v1933
        %v1935 = vrot.slane %v1921, %v1934
        %v1936 = vcombine.low %v1880, %v1896
        %v1937 = vcombine.high %v1880, %v1896
        %v1939 = vunpack.c.l.s4 1934713408
        %v1940 = vunpack.c.0.s8 %v1939
        %v1941 = vlaneseq
        %v1942 = vshrl.u32 %v1941, 7
        %v1943 = vsub.s32 %v1940, %v1942
        %v1944 = vrot.slane %v1936, %v1943
        %v1946 = vunpack.c.l.s4 1934713408
        %v1947 = vunpack.c.0.s8 %v1946
        %v1948 = vlaneseq
        %v1949 = vshrl.u32 %v1948, 7
        %v1950 = vsub.s32 %v1947, %v1949
        %v1951 = vrot.slane %v1937, %v1950
        %v1952 = vcombine.low %v1887, %v1903
        %v1953 = vcombine.high %v1887, %v1903
        %v1955 = vunpack.c.l.s4 1934713408
        %v1956 = vunpack.c.0.s8 %v1955
        %v1957 = vlaneseq
        %v1958 = vshrl.u32 %v1957, 7
        %v1959 = vsub.s32 %v1956, %v1958
        %v1960 = vrot.slane %v1952, %v1959
        %v1962 = vunpack.c.l.s4 1934713408
        %v1963 = vunpack.c.0.s8 %v1962
        %v1964 = vlaneseq
        %v1965 = vshrl.u32 %v1964, 7
        %v1966 = vsub.s32 %v1963, %v1965
        %v1967 = vrot.slane %v1953, %v1966
        %v1968 = vcombine.low %v1912, %v1944
        %v1969 = vcombine.high %v1912, %v1944
        %v1970 = vcombine.low %v1919, %v1951
        %v1971 = vcombine.high %v1919, %v1951
        %v1972 = vcombine.low %v1928, %v1960
        %v1973 = vcombine.high %v1928, %v1960
        %v1974 = vcombine.low %v1935, %v1967
        %v1975 = vcombine.high %v1935, %v1967
        %v1976 = vcombine.low %v1635, %v1641
        %v1977 = vcombine.high %v1635, %v1641
        %v1979 = vunpack.c.l.s4 1983009808
        %v1980 = vunpack.c.0.s8 %v1979
        %v1981 = vlaneseq
        %v1982 = vshrl.u32 %v1981, 7
        %v1983 = vsub.s32 %v1980, %v1982
        %v1984 = vrot.slane %v1976, %v1983
        %v1986 = vunpack.c.l.s4 1983009808
        %v1987 = vunpack.c.0.s8 %v1986
        %v1988 = vlaneseq
        %v1989 = vshrl.u32 %v1988, 7
        %v1990 = vsub.s32 %v1987, %v1989
        %v1991 = vrot.slane %v1977, %v1990
        %v1992 = vcombine.low %v1638, %v1644
        %v1993 = vcombine.high %v1638, %v1644
        %v1995 = vunpack.c.l.s4 1983009808
        %v1996 = vunpack.c.0.s8 %v1995
        %v1997 = vlaneseq
        %v1998 = vshrl.u32 %v1997, 7
        %v1999 = vsub.s32 %v1996, %v1998
        %v2000 = vrot.slane %v1992, %v1999
        %v2002 = vunpack.c.l.s4 1983009808
        %v2003 = vunpack.c.0.s8 %v2002
        %v2004 = vlaneseq
        %v2005 = vshrl.u32 %v2004, 7
        %v2006 = vsub.s32 %v2003, %v2005
        %v2007 = vrot.slane %v1993, %v2006
        %v2008 = vcombine.low %v1698, %v1780
        %v2009 = vcombine.high %v1698, %v1780
        %v2011 = vunpack.c.l.s4 1983009808
        %v2012 = vunpack.c.0.s8 %v2011
        %v2013 = vlaneseq
        %v2014 = vshrl.u32 %v2013, 7
        %v2015 = vsub.s32 %v2012, %v2014
        %v2016 = vrot.slane %v2008, %v2015
        %v2018 = vunpack.c.l.s4 1983009808
        %v2019 = vunpack.c.0.s8 %v2018
        %v2020 = vlaneseq
        %v2021 = vshrl.u32 %v2020, 7
        %v2022 = vsub.s32 %v2019, %v2021
        %v2023 = vrot.slane %v2009, %v2022
        %v2024 = vcombine.low %v1739, %v1821
        %v2025 = vcombine.high %v1739, %v1821
        %v2027 = vunpack.c.l.s4 1983009808
        %v2028 = vunpack.c.0.s8 %v2027
        %v2029 = vlaneseq
        %v2030 = vshrl.u32 %v2029, 7
        %v2031 = vsub.s32 %v2028, %v2030
        %v2032 = vrot.slane %v2024, %v2031
        %v2034 = vunpack.c.l.s4 1983009808
        %v2035 = vunpack.c.0.s8 %v2034
        %v2036 = vlaneseq
        %v2037 = vshrl.u32 %v2036, 7
        %v2038 = vsub.s32 %v2035, %v2037
        %v2039 = vrot.slane %v2025, %v2038
        %v2040 = vcombine.low %v1984, %v2000
        %v2041 = vcombine.high %v1984, %v2000
        %v2043 = vunpack.c.l.s4 1934713408
        %v2044 = vunpack.c.0.s8 %v2043
        %v2045 = vlaneseq
        %v2046 = vshrl.u32 %v2045, 7
        %v2047 = vsub.s32 %v2044, %v2046
        %v2048 = vrot.slane %v2040, %v2047
        %v2050 = vunpack.c.l.s4 1934713408
        %v2051 = vunpack.c.0.s8 %v2050
        %v2052 = vlaneseq
        %v2053 = vshrl.u32 %v2052, 7
        %v2054 = vsub.s32 %v2051, %v2053
        %v2055 = vrot.slane %v2041, %v2054
        %v2056 = vcombine.low %v1991, %v2007
        %v2057 = vcombine.high %v1991, %v2007
        %v2059 = vunpack.c.l.s4 1934713408
        %v2060 = vunpack.c.0.s8 %v2059
        %v2061 = vlaneseq
        %v2062 = vshrl.u32 %v2061, 7
        %v2063 = vsub.s32 %v2060, %v2062
        %v2064 = vrot.slane %v2056, %v2063
        %v2066 = vunpack.c.l.s4 1934713408
        %v2067 = vunpack.c.0.s8 %v2066
        %v2068 = vlaneseq
        %v2069 = vshrl.u32 %v2068, 7
        %v2070 = vsub.s32 %v2067, %v2069
        %v2071 = vrot.slane %v2057, %v2070
        %v2072 = vcombine.low %v2016, %v2032
        %v2073 = vcombine.high %v2016, %v2032
        %v2075 = vunpack.c.l.s4 1934713408
        %v2076 = vunpack.c.0.s8 %v2075
        %v2077 = vlaneseq
        %v2078 = vshrl.u32 %v2077, 7
        %v2079 = vsub.s32 %v2076, %v2078
        %v2080 = vrot.slane %v2072, %v2079
        %v2082 = vunpack.c.l.s4 1934713408
        %v2083 = vunpack.c.0.s8 %v2082
        %v2084 = vlaneseq
        %v2085 = vshrl.u32 %v2084, 7
        %v2086 = vsub.s32 %v2083, %v2085
        %v2087 = vrot.slane %v2073, %v2086
        %v2088 = vcombine.low %v2023, %v2039
        %v2089 = vcombine.high %v2023, %v2039
        %v2091 = vunpack.c.l.s4 1934713408
        %v2092 = vunpack.c.0.s8 %v2091
        %v2093 = vlaneseq
        %v2094 = vshrl.u32 %v2093, 7
        %v2095 = vsub.s32 %v2092, %v2094
        %v2096 = vrot.slane %v2088, %v2095
        %v2098 = vunpack.c.l.s4 1934713408
        %v2099 = vunpack.c.0.s8 %v2098
        %v2100 = vlaneseq
        %v2101 = vshrl.u32 %v2100, 7
        %v2102 = vsub.s32 %v2099, %v2101
        %v2103 = vrot.slane %v2089, %v2102
        %v2104 = vcombine.low %v2048, %v2080
        %v2105 = vcombine.high %v2048, %v2080
        %v2106 = vcombine.low %v2055, %v2087
        %v2107 = vcombine.high %v2055, %v2087
        %v2108 = vcombine.low %v2064, %v2096
        %v2109 = vcombine.high %v2064, %v2096
        %v2110 = vcombine.low %v2071, %v2103
        %v2111 = vcombine.high %v2071, %v2103
        %2113 = vrot.lane.b32.xlu0 %v1969, 16
        %v2114 = vpop.permute.xlu0 %2113
        %2117 = vrot.lane.b32.xlu0 %v1970, 32
        %v2118 = vpop.permute.xlu0 %2117
        %2121 = vrot.lane.b32.xlu0 %v1971, 48
        %v2122 = vpop.permute.xlu0 %2121
        %2125 = vrot.lane.b32.xlu0 %v1972, 64
        %v2126 = vpop.permute.xlu0 %2125
        %2129 = vrot.lane.b32.xlu0 %v1973, 80
        %v2130 = vpop.permute.xlu0 %2129
        %2133 = vrot.lane.b32.xlu0 %v1974, 96
        %v2134 = vpop.permute.xlu0 %2133
        %2137 = vrot.lane.b32.xlu0 %v1975, 112
        %v2138 = vpop.permute.xlu0 %2137
        %2141 = vrot.lane.b32.xlu0 %v2105, 16
        %v2142 = vpop.permute.xlu0 %2141
        %2145 = vrot.lane.b32.xlu0 %v2106, 32
        %v2146 = vpop.permute.xlu0 %2145
        %2149 = vrot.lane.b32.xlu0 %v2107, 48
        %v2150 = vpop.permute.xlu0 %2149
        %2153 = vrot.lane.b32.xlu0 %v2108, 64
        %v2154 = vpop.permute.xlu0 %2153
        %2157 = vrot.lane.b32.xlu0 %v2109, 80
        %v2158 = vpop.permute.xlu0 %2157
        %2161 = vrot.lane.b32.xlu0 %v2110, 96
        %v2162 = vpop.permute.xlu0 %2161
        %2165 = vrot.lane.b32.xlu0 %v2111, 112
        %v2166 = vpop.permute.xlu0 %2165
        %v2168 = vsel %vm491, %v1968, %v2114
        %vm2169 = vcmask 261120
        %v2170 = vsel %vm2169, %v2168, %v2118
        %vm2171 = vcmask 392192
        %v2172 = vsel %vm2171, %v2170, %v2122
        %vm2173 = vcmask 523264
        %v2174 = vsel %vm2173, %v2172, %v2126
        %vm2175 = vcmask 654336
        %v2176 = vsel %vm2175, %v2174, %v2130
        %vm2177 = vcmask 785408
        %v2178 = vsel %vm2177, %v2176, %v2134
        %vm2179 = vcmask 916480
        %v2180 = vsel %vm2179, %v2178, %v2138
        %v2181 = vsel %vm491, %v2104, %v2142
        %v2182 = vsel %vm2169, %v2181, %v2146
        %v2183 = vsel %vm2171, %v2182, %v2150
        %v2184 = vsel %vm2173, %v2183, %v2154
        %v2185 = vsel %vm2175, %v2184, %v2158
        %v2186 = vsel %vm2177, %v2185, %v2162
        %v2187 = vsel %vm2179, %v2186, %v2166
        %2192 = vrot.lane.b32.xlu0 %v1657, 127
        %v2193 = vpop.permute.xlu0 %2192
        %2194 = vrot.lane.b32.xlu0 %v1635, 127
        %v2195 = vpop.permute.xlu0 %2194
        %2196 = vrot.lane.b32.xlu0 %v1658, 127
        %v2197 = vpop.permute.xlu0 %2196
        %2198 = vrot.lane.b32.xlu0 %v1638, 127
        %v2199 = vpop.permute.xlu0 %2198
        %2200 = vrot.lane.b32.xlu0 %v1659, 127
        %v2201 = vpop.permute.xlu0 %2200
        %2202 = vrot.lane.b32.xlu0 %v1641, 127
        %v2203 = vpop.permute.xlu0 %2202
        %2204 = vrot.lane.b32.xlu0 %v1660, 127
        %v2205 = vpop.permute.xlu0 %2204
        %2206 = vrot.lane.b32.xlu0 %v1644, 127
        %v2207 = vpop.permute.xlu0 %2206
        %2208 = vrot.lane.b32.xlu0 %v1681, 127
        %v2209 = vpop.permute.xlu0 %2208
        %2210 = vrot.lane.b32.xlu0 %v1698, 127
        %v2211 = vpop.permute.xlu0 %2210
        %2212 = vrot.lane.b32.xlu0 %v1722, 127
        %v2213 = vpop.permute.xlu0 %2212
        %2214 = vrot.lane.b32.xlu0 %v1739, 127
        %v2215 = vpop.permute.xlu0 %2214
        %2216 = vrot.lane.b32.xlu0 %v1763, 127
        %v2217 = vpop.permute.xlu0 %2216
        %2218 = vrot.lane.b32.xlu0 %v1780, 127
        %v2219 = vpop.permute.xlu0 %2218
        %2220 = vrot.lane.b32.xlu0 %v1804, 127
        %v2221 = vpop.permute.xlu0 %2220
        %2222 = vrot.lane.b32.xlu0 %v1821, 127
        %v2223 = vpop.permute.xlu0 %2222
        %v2240 = vcombine.low %v2193, %v2201
        %v2241 = vcombine.high %v2193, %v2201
        %v2243 = vunpack.c.l.s4 1983009808
        %v2244 = vunpack.c.0.s8 %v2243
        %v2245 = vlaneseq
        %v2246 = vshrl.u32 %v2245, 7
        %v2247 = vsub.s32 %v2244, %v2246
        %v2248 = vrot.slane %v2240, %v2247
        %v2250 = vunpack.c.l.s4 1983009808
        %v2251 = vunpack.c.0.s8 %v2250
        %v2252 = vlaneseq
        %v2253 = vshrl.u32 %v2252, 7
        %v2254 = vsub.s32 %v2251, %v2253
        %v2255 = vrot.slane %v2241, %v2254
        %v2256 = vcombine.low %v2197, %v2205
        %v2257 = vcombine.high %v2197, %v2205
        %v2259 = vunpack.c.l.s4 1983009808
        %v2260 = vunpack.c.0.s8 %v2259
        %v2261 = vlaneseq
        %v2262 = vshrl.u32 %v2261, 7
        %v2263 = vsub.s32 %v2260, %v2262
        %v2264 = vrot.slane %v2256, %v2263
        %v2266 = vunpack.c.l.s4 1983009808
        %v2267 = vunpack.c.0.s8 %v2266
        %v2268 = vlaneseq
        %v2269 = vshrl.u32 %v2268, 7
        %v2270 = vsub.s32 %v2267, %v2269
        %v2271 = vrot.slane %v2257, %v2270
        %v2272 = vcombine.low %v2209, %v2217
        %v2273 = vcombine.high %v2209, %v2217
        %v2275 = vunpack.c.l.s4 1983009808
        %v2276 = vunpack.c.0.s8 %v2275
        %v2277 = vlaneseq
        %v2278 = vshrl.u32 %v2277, 7
        %v2279 = vsub.s32 %v2276, %v2278
        %v2280 = vrot.slane %v2272, %v2279
        %v2282 = vunpack.c.l.s4 1983009808
        %v2283 = vunpack.c.0.s8 %v2282
        %v2284 = vlaneseq
        %v2285 = vshrl.u32 %v2284, 7
        %v2286 = vsub.s32 %v2283, %v2285
        %v2287 = vrot.slane %v2273, %v2286
        %v2288 = vcombine.low %v2213, %v2221
        %v2289 = vcombine.high %v2213, %v2221
        %v2291 = vunpack.c.l.s4 1983009808
        %v2292 = vunpack.c.0.s8 %v2291
        %v2293 = vlaneseq
        %v2294 = vshrl.u32 %v2293, 7
        %v2295 = vsub.s32 %v2292, %v2294
        %v2296 = vrot.slane %v2288, %v2295
        %v2298 = vunpack.c.l.s4 1983009808
        %v2299 = vunpack.c.0.s8 %v2298
        %v2300 = vlaneseq
        %v2301 = vshrl.u32 %v2300, 7
        %v2302 = vsub.s32 %v2299, %v2301
        %v2303 = vrot.slane %v2289, %v2302
        %v2304 = vcombine.low %v2248, %v2264
        %v2305 = vcombine.high %v2248, %v2264
        %v2307 = vunpack.c.l.s4 1934713408
        %v2308 = vunpack.c.0.s8 %v2307
        %v2309 = vlaneseq
        %v2310 = vshrl.u32 %v2309, 7
        %v2311 = vsub.s32 %v2308, %v2310
        %v2312 = vrot.slane %v2304, %v2311
        %v2314 = vunpack.c.l.s4 1934713408
        %v2315 = vunpack.c.0.s8 %v2314
        %v2316 = vlaneseq
        %v2317 = vshrl.u32 %v2316, 7
        %v2318 = vsub.s32 %v2315, %v2317
        %v2319 = vrot.slane %v2305, %v2318
        %v2320 = vcombine.low %v2255, %v2271
        %v2321 = vcombine.high %v2255, %v2271
        %v2323 = vunpack.c.l.s4 1934713408
        %v2324 = vunpack.c.0.s8 %v2323
        %v2325 = vlaneseq
        %v2326 = vshrl.u32 %v2325, 7
        %v2327 = vsub.s32 %v2324, %v2326
        %v2328 = vrot.slane %v2320, %v2327
        %v2330 = vunpack.c.l.s4 1934713408
        %v2331 = vunpack.c.0.s8 %v2330
        %v2332 = vlaneseq
        %v2333 = vshrl.u32 %v2332, 7
        %v2334 = vsub.s32 %v2331, %v2333
        %v2335 = vrot.slane %v2321, %v2334
        %v2336 = vcombine.low %v2280, %v2296
        %v2337 = vcombine.high %v2280, %v2296
        %v2339 = vunpack.c.l.s4 1934713408
        %v2340 = vunpack.c.0.s8 %v2339
        %v2341 = vlaneseq
        %v2342 = vshrl.u32 %v2341, 7
        %v2343 = vsub.s32 %v2340, %v2342
        %v2344 = vrot.slane %v2336, %v2343
        %v2346 = vunpack.c.l.s4 1934713408
        %v2347 = vunpack.c.0.s8 %v2346
        %v2348 = vlaneseq
        %v2349 = vshrl.u32 %v2348, 7
        %v2350 = vsub.s32 %v2347, %v2349
        %v2351 = vrot.slane %v2337, %v2350
        %v2352 = vcombine.low %v2287, %v2303
        %v2353 = vcombine.high %v2287, %v2303
        %v2355 = vunpack.c.l.s4 1934713408
        %v2356 = vunpack.c.0.s8 %v2355
        %v2357 = vlaneseq
        %v2358 = vshrl.u32 %v2357, 7
        %v2359 = vsub.s32 %v2356, %v2358
        %v2360 = vrot.slane %v2352, %v2359
        %v2362 = vunpack.c.l.s4 1934713408
        %v2363 = vunpack.c.0.s8 %v2362
        %v2364 = vlaneseq
        %v2365 = vshrl.u32 %v2364, 7
        %v2366 = vsub.s32 %v2363, %v2365
        %v2367 = vrot.slane %v2353, %v2366
        %v2368 = vcombine.low %v2312, %v2344
        %v2369 = vcombine.high %v2312, %v2344
        %v2370 = vcombine.low %v2319, %v2351
        %v2371 = vcombine.high %v2319, %v2351
        %v2372 = vcombine.low %v2328, %v2360
        %v2373 = vcombine.high %v2328, %v2360
        %v2374 = vcombine.low %v2335, %v2367
        %v2375 = vcombine.high %v2335, %v2367
        %v2376 = vcombine.low %v2195, %v2203
        %v2377 = vcombine.high %v2195, %v2203
        %v2379 = vunpack.c.l.s4 1983009808
        %v2380 = vunpack.c.0.s8 %v2379
        %v2381 = vlaneseq
        %v2382 = vshrl.u32 %v2381, 7
        %v2383 = vsub.s32 %v2380, %v2382
        %v2384 = vrot.slane %v2376, %v2383
        %v2386 = vunpack.c.l.s4 1983009808
        %v2387 = vunpack.c.0.s8 %v2386
        %v2388 = vlaneseq
        %v2389 = vshrl.u32 %v2388, 7
        %v2390 = vsub.s32 %v2387, %v2389
        %v2391 = vrot.slane %v2377, %v2390
        %v2392 = vcombine.low %v2199, %v2207
        %v2393 = vcombine.high %v2199, %v2207
        %v2395 = vunpack.c.l.s4 1983009808
        %v2396 = vunpack.c.0.s8 %v2395
        %v2397 = vlaneseq
        %v2398 = vshrl.u32 %v2397, 7
        %v2399 = vsub.s32 %v2396, %v2398
        %v2400 = vrot.slane %v2392, %v2399
        %v2402 = vunpack.c.l.s4 1983009808
        %v2403 = vunpack.c.0.s8 %v2402
        %v2404 = vlaneseq
        %v2405 = vshrl.u32 %v2404, 7
        %v2406 = vsub.s32 %v2403, %v2405
        %v2407 = vrot.slane %v2393, %v2406
        %v2408 = vcombine.low %v2211, %v2219
        %v2409 = vcombine.high %v2211, %v2219
        %v2411 = vunpack.c.l.s4 1983009808
        %v2412 = vunpack.c.0.s8 %v2411
        %v2413 = vlaneseq
        %v2414 = vshrl.u32 %v2413, 7
        %v2415 = vsub.s32 %v2412, %v2414
        %v2416 = vrot.slane %v2408, %v2415
        %v2418 = vunpack.c.l.s4 1983009808
        %v2419 = vunpack.c.0.s8 %v2418
        %v2420 = vlaneseq
        %v2421 = vshrl.u32 %v2420, 7
        %v2422 = vsub.s32 %v2419, %v2421
        %v2423 = vrot.slane %v2409, %v2422
        %v2424 = vcombine.low %v2215, %v2223
        %v2425 = vcombine.high %v2215, %v2223
        %v2427 = vunpack.c.l.s4 1983009808
        %v2428 = vunpack.c.0.s8 %v2427
        %v2429 = vlaneseq
        %v2430 = vshrl.u32 %v2429, 7
        %v2431 = vsub.s32 %v2428, %v2430
        %v2432 = vrot.slane %v2424, %v2431
        %v2434 = vunpack.c.l.s4 1983009808
        %v2435 = vunpack.c.0.s8 %v2434
        %v2436 = vlaneseq
        %v2437 = vshrl.u32 %v2436, 7
        %v2438 = vsub.s32 %v2435, %v2437
        %v2439 = vrot.slane %v2425, %v2438
        %v2440 = vcombine.low %v2384, %v2400
        %v2441 = vcombine.high %v2384, %v2400
        %v2443 = vunpack.c.l.s4 1934713408
        %v2444 = vunpack.c.0.s8 %v2443
        %v2445 = vlaneseq
        %v2446 = vshrl.u32 %v2445, 7
        %v2447 = vsub.s32 %v2444, %v2446
        %v2448 = vrot.slane %v2440, %v2447
        %v2450 = vunpack.c.l.s4 1934713408
        %v2451 = vunpack.c.0.s8 %v2450
        %v2452 = vlaneseq
        %v2453 = vshrl.u32 %v2452, 7
        %v2454 = vsub.s32 %v2451, %v2453
        %v2455 = vrot.slane %v2441, %v2454
        %v2456 = vcombine.low %v2391, %v2407
        %v2457 = vcombine.high %v2391, %v2407
        %v2459 = vunpack.c.l.s4 1934713408
        %v2460 = vunpack.c.0.s8 %v2459
        %v2461 = vlaneseq
        %v2462 = vshrl.u32 %v2461, 7
        %v2463 = vsub.s32 %v2460, %v2462
        %v2464 = vrot.slane %v2456, %v2463
        %v2466 = vunpack.c.l.s4 1934713408
        %v2467 = vunpack.c.0.s8 %v2466
        %v2468 = vlaneseq
        %v2469 = vshrl.u32 %v2468, 7
        %v2470 = vsub.s32 %v2467, %v2469
        %v2471 = vrot.slane %v2457, %v2470
        %v2472 = vcombine.low %v2416, %v2432
        %v2473 = vcombine.high %v2416, %v2432
        %v2475 = vunpack.c.l.s4 1934713408
        %v2476 = vunpack.c.0.s8 %v2475
        %v2477 = vlaneseq
        %v2478 = vshrl.u32 %v2477, 7
        %v2479 = vsub.s32 %v2476, %v2478
        %v2480 = vrot.slane %v2472, %v2479
        %v2482 = vunpack.c.l.s4 1934713408
        %v2483 = vunpack.c.0.s8 %v2482
        %v2484 = vlaneseq
        %v2485 = vshrl.u32 %v2484, 7
        %v2486 = vsub.s32 %v2483, %v2485
        %v2487 = vrot.slane %v2473, %v2486
        %v2488 = vcombine.low %v2423, %v2439
        %v2489 = vcombine.high %v2423, %v2439
        %v2491 = vunpack.c.l.s4 1934713408
        %v2492 = vunpack.c.0.s8 %v2491
        %v2493 = vlaneseq
        %v2494 = vshrl.u32 %v2493, 7
        %v2495 = vsub.s32 %v2492, %v2494
        %v2496 = vrot.slane %v2488, %v2495
        %v2498 = vunpack.c.l.s4 1934713408
        %v2499 = vunpack.c.0.s8 %v2498
        %v2500 = vlaneseq
        %v2501 = vshrl.u32 %v2500, 7
        %v2502 = vsub.s32 %v2499, %v2501
        %v2503 = vrot.slane %v2489, %v2502
        %v2504 = vcombine.low %v2448, %v2480
        %v2505 = vcombine.high %v2448, %v2480
        %v2506 = vcombine.low %v2455, %v2487
        %v2507 = vcombine.high %v2455, %v2487
        %v2508 = vcombine.low %v2464, %v2496
        %v2509 = vcombine.high %v2464, %v2496
        %v2510 = vcombine.low %v2471, %v2503
        %v2511 = vcombine.high %v2471, %v2503
        %2513 = vrot.lane.b32.xlu0 %v2369, 16
        %v2514 = vpop.permute.xlu0 %2513
        %2517 = vrot.lane.b32.xlu0 %v2370, 32
        %v2518 = vpop.permute.xlu0 %2517
        %2521 = vrot.lane.b32.xlu0 %v2371, 48
        %v2522 = vpop.permute.xlu0 %2521
        %2525 = vrot.lane.b32.xlu0 %v2372, 64
        %v2526 = vpop.permute.xlu0 %2525
        %2529 = vrot.lane.b32.xlu0 %v2373, 80
        %v2530 = vpop.permute.xlu0 %2529
        %2533 = vrot.lane.b32.xlu0 %v2374, 96
        %v2534 = vpop.permute.xlu0 %2533
        %2537 = vrot.lane.b32.xlu0 %v2375, 112
        %v2538 = vpop.permute.xlu0 %2537
        %2541 = vrot.lane.b32.xlu0 %v2505, 16
        %v2542 = vpop.permute.xlu0 %2541
        %2545 = vrot.lane.b32.xlu0 %v2506, 32
        %v2546 = vpop.permute.xlu0 %2545
        %2549 = vrot.lane.b32.xlu0 %v2507, 48
        %v2550 = vpop.permute.xlu0 %2549
        %2553 = vrot.lane.b32.xlu0 %v2508, 64
        %v2554 = vpop.permute.xlu0 %2553
        %2557 = vrot.lane.b32.xlu0 %v2509, 80
        %v2558 = vpop.permute.xlu0 %2557
        %2561 = vrot.lane.b32.xlu0 %v2510, 96
        %v2562 = vpop.permute.xlu0 %2561
        %2565 = vrot.lane.b32.xlu0 %v2511, 112
        %v2566 = vpop.permute.xlu0 %2565
        %v2568 = vsel %vm491, %v2368, %v2514
        %v2569 = vsel %vm2169, %v2568, %v2518
        %v2570 = vsel %vm2171, %v2569, %v2522
        %v2571 = vsel %vm2173, %v2570, %v2526
        %v2572 = vsel %vm2175, %v2571, %v2530
        %v2573 = vsel %vm2177, %v2572, %v2534
        %v2574 = vsel %vm2179, %v2573, %v2538
        %v2575 = vsel %vm491, %v2504, %v2542
        %v2576 = vsel %vm2169, %v2575, %v2546
        %v2577 = vsel %vm2171, %v2576, %v2550
        %v2578 = vsel %vm2173, %v2577, %v2554
        %v2579 = vsel %vm2175, %v2578, %v2558
        %v2580 = vsel %vm2177, %v2579, %v2562
        %v2581 = vsel %vm2179, %v2580, %v2566
        %2582 = vrot.lane.b32.xlu0 %v1657, 126
        %v2583 = vpop.permute.xlu0 %2582
        %2584 = vrot.lane.b32.xlu0 %v1635, 126
        %v2585 = vpop.permute.xlu0 %2584
        %2586 = vrot.lane.b32.xlu0 %v1658, 126
        %v2587 = vpop.permute.xlu0 %2586
        %2588 = vrot.lane.b32.xlu0 %v1638, 126
        %v2589 = vpop.permute.xlu0 %2588
        %2590 = vrot.lane.b32.xlu0 %v1659, 126
        %v2591 = vpop.permute.xlu0 %2590
        %2592 = vrot.lane.b32.xlu0 %v1641, 126
        %v2593 = vpop.permute.xlu0 %2592
        %2594 = vrot.lane.b32.xlu0 %v1660, 126
        %v2595 = vpop.permute.xlu0 %2594
        %2596 = vrot.lane.b32.xlu0 %v1644, 126
        %v2597 = vpop.permute.xlu0 %2596
        %2598 = vrot.lane.b32.xlu0 %v1681, 126
        %v2599 = vpop.permute.xlu0 %2598
        %2600 = vrot.lane.b32.xlu0 %v1698, 126
        %v2601 = vpop.permute.xlu0 %2600
        %2602 = vrot.lane.b32.xlu0 %v1722, 126
        %v2603 = vpop.permute.xlu0 %2602
        %2604 = vrot.lane.b32.xlu0 %v1739, 126
        %v2605 = vpop.permute.xlu0 %2604
        %2606 = vrot.lane.b32.xlu0 %v1763, 126
        %v2607 = vpop.permute.xlu0 %2606
        %2608 = vrot.lane.b32.xlu0 %v1780, 126
        %v2609 = vpop.permute.xlu0 %2608
        %2610 = vrot.lane.b32.xlu0 %v1804, 126
        %v2611 = vpop.permute.xlu0 %2610
        %2612 = vrot.lane.b32.xlu0 %v1821, 126
        %v2613 = vpop.permute.xlu0 %2612
        %v2630 = vcombine.low %v2583, %v2591
        %v2631 = vcombine.high %v2583, %v2591
        %v2633 = vunpack.c.l.s4 1983009808
        %v2634 = vunpack.c.0.s8 %v2633
        %v2635 = vlaneseq
        %v2636 = vshrl.u32 %v2635, 7
        %v2637 = vsub.s32 %v2634, %v2636
        %v2638 = vrot.slane %v2630, %v2637
        %v2640 = vunpack.c.l.s4 1983009808
        %v2641 = vunpack.c.0.s8 %v2640
        %v2642 = vlaneseq
        %v2643 = vshrl.u32 %v2642, 7
        %v2644 = vsub.s32 %v2641, %v2643
        %v2645 = vrot.slane %v2631, %v2644
        %v2646 = vcombine.low %v2587, %v2595
        %v2647 = vcombine.high %v2587, %v2595
        %v2649 = vunpack.c.l.s4 1983009808
        %v2650 = vunpack.c.0.s8 %v2649
        %v2651 = vlaneseq
        %v2652 = vshrl.u32 %v2651, 7
        %v2653 = vsub.s32 %v2650, %v2652
        %v2654 = vrot.slane %v2646, %v2653
        %v2656 = vunpack.c.l.s4 1983009808
        %v2657 = vunpack.c.0.s8 %v2656
        %v2658 = vlaneseq
        %v2659 = vshrl.u32 %v2658, 7
        %v2660 = vsub.s32 %v2657, %v2659
        %v2661 = vrot.slane %v2647, %v2660
        %v2662 = vcombine.low %v2599, %v2607
        %v2663 = vcombine.high %v2599, %v2607
        %v2665 = vunpack.c.l.s4 1983009808
        %v2666 = vunpack.c.0.s8 %v2665
        %v2667 = vlaneseq
        %v2668 = vshrl.u32 %v2667, 7
        %v2669 = vsub.s32 %v2666, %v2668
        %v2670 = vrot.slane %v2662, %v2669
        %v2672 = vunpack.c.l.s4 1983009808
        %v2673 = vunpack.c.0.s8 %v2672
        %v2674 = vlaneseq
        %v2675 = vshrl.u32 %v2674, 7
        %v2676 = vsub.s32 %v2673, %v2675
        %v2677 = vrot.slane %v2663, %v2676
        %v2678 = vcombine.low %v2603, %v2611
        %v2679 = vcombine.high %v2603, %v2611
        %v2681 = vunpack.c.l.s4 1983009808
        %v2682 = vunpack.c.0.s8 %v2681
        %v2683 = vlaneseq
        %v2684 = vshrl.u32 %v2683, 7
        %v2685 = vsub.s32 %v2682, %v2684
        %v2686 = vrot.slane %v2678, %v2685
        %v2688 = vunpack.c.l.s4 1983009808
        %v2689 = vunpack.c.0.s8 %v2688
        %v2690 = vlaneseq
        %v2691 = vshrl.u32 %v2690, 7
        %v2692 = vsub.s32 %v2689, %v2691
        %v2693 = vrot.slane %v2679, %v2692
        %v2694 = vcombine.low %v2638, %v2654
        %v2695 = vcombine.high %v2638, %v2654
        %v2697 = vunpack.c.l.s4 1934713408
        %v2698 = vunpack.c.0.s8 %v2697
        %v2699 = vlaneseq
        %v2700 = vshrl.u32 %v2699, 7
        %v2701 = vsub.s32 %v2698, %v2700
        %v2702 = vrot.slane %v2694, %v2701
        %v2704 = vunpack.c.l.s4 1934713408
        %v2705 = vunpack.c.0.s8 %v2704
        %v2706 = vlaneseq
        %v2707 = vshrl.u32 %v2706, 7
        %v2708 = vsub.s32 %v2705, %v2707
        %v2709 = vrot.slane %v2695, %v2708
        %v2710 = vcombine.low %v2645, %v2661
        %v2711 = vcombine.high %v2645, %v2661
        %v2713 = vunpack.c.l.s4 1934713408
        %v2714 = vunpack.c.0.s8 %v2713
        %v2715 = vlaneseq
        %v2716 = vshrl.u32 %v2715, 7
        %v2717 = vsub.s32 %v2714, %v2716
        %v2718 = vrot.slane %v2710, %v2717
        %v2720 = vunpack.c.l.s4 1934713408
        %v2721 = vunpack.c.0.s8 %v2720
        %v2722 = vlaneseq
        %v2723 = vshrl.u32 %v2722, 7
        %v2724 = vsub.s32 %v2721, %v2723
        %v2725 = vrot.slane %v2711, %v2724
        %v2726 = vcombine.low %v2670, %v2686
        %v2727 = vcombine.high %v2670, %v2686
        %v2729 = vunpack.c.l.s4 1934713408
        %v2730 = vunpack.c.0.s8 %v2729
        %v2731 = vlaneseq
        %v2732 = vshrl.u32 %v2731, 7
        %v2733 = vsub.s32 %v2730, %v2732
        %v2734 = vrot.slane %v2726, %v2733
        %v2736 = vunpack.c.l.s4 1934713408
        %v2737 = vunpack.c.0.s8 %v2736
        %v2738 = vlaneseq
        %v2739 = vshrl.u32 %v2738, 7
        %v2740 = vsub.s32 %v2737, %v2739
        %v2741 = vrot.slane %v2727, %v2740
        %v2742 = vcombine.low %v2677, %v2693
        %v2743 = vcombine.high %v2677, %v2693
        %v2745 = vunpack.c.l.s4 1934713408
        %v2746 = vunpack.c.0.s8 %v2745
        %v2747 = vlaneseq
        %v2748 = vshrl.u32 %v2747, 7
        %v2749 = vsub.s32 %v2746, %v2748
        %v2750 = vrot.slane %v2742, %v2749
        %v2752 = vunpack.c.l.s4 1934713408
        %v2753 = vunpack.c.0.s8 %v2752
        %v2754 = vlaneseq
        %v2755 = vshrl.u32 %v2754, 7
        %v2756 = vsub.s32 %v2753, %v2755
        %v2757 = vrot.slane %v2743, %v2756
        %v2758 = vcombine.low %v2702, %v2734
        %v2759 = vcombine.high %v2702, %v2734
        %v2760 = vcombine.low %v2709, %v2741
        %v2761 = vcombine.high %v2709, %v2741
        %v2762 = vcombine.low %v2718, %v2750
        %v2763 = vcombine.high %v2718, %v2750
        %v2764 = vcombine.low %v2725, %v2757
        %v2765 = vcombine.high %v2725, %v2757
        %v2766 = vcombine.low %v2585, %v2593
        %v2767 = vcombine.high %v2585, %v2593
        %v2769 = vunpack.c.l.s4 1983009808
        %v2770 = vunpack.c.0.s8 %v2769
        %v2771 = vlaneseq
        %v2772 = vshrl.u32 %v2771, 7
        %v2773 = vsub.s32 %v2770, %v2772
        %v2774 = vrot.slane %v2766, %v2773
        %v2776 = vunpack.c.l.s4 1983009808
        %v2777 = vunpack.c.0.s8 %v2776
        %v2778 = vlaneseq
        %v2779 = vshrl.u32 %v2778, 7
        %v2780 = vsub.s32 %v2777, %v2779
        %v2781 = vrot.slane %v2767, %v2780
        %v2782 = vcombine.low %v2589, %v2597
        %v2783 = vcombine.high %v2589, %v2597
        %v2785 = vunpack.c.l.s4 1983009808
        %v2786 = vunpack.c.0.s8 %v2785
        %v2787 = vlaneseq
        %v2788 = vshrl.u32 %v2787, 7
        %v2789 = vsub.s32 %v2786, %v2788
        %v2790 = vrot.slane %v2782, %v2789
        %v2792 = vunpack.c.l.s4 1983009808
        %v2793 = vunpack.c.0.s8 %v2792
        %v2794 = vlaneseq
        %v2795 = vshrl.u32 %v2794, 7
        %v2796 = vsub.s32 %v2793, %v2795
        %v2797 = vrot.slane %v2783, %v2796
        %v2798 = vcombine.low %v2601, %v2609
        %v2799 = vcombine.high %v2601, %v2609
        %v2801 = vunpack.c.l.s4 1983009808
        %v2802 = vunpack.c.0.s8 %v2801
        %v2803 = vlaneseq
        %v2804 = vshrl.u32 %v2803, 7
        %v2805 = vsub.s32 %v2802, %v2804
        %v2806 = vrot.slane %v2798, %v2805
        %v2808 = vunpack.c.l.s4 1983009808
        %v2809 = vunpack.c.0.s8 %v2808
        %v2810 = vlaneseq
        %v2811 = vshrl.u32 %v2810, 7
        %v2812 = vsub.s32 %v2809, %v2811
        %v2813 = vrot.slane %v2799, %v2812
        %v2814 = vcombine.low %v2605, %v2613
        %v2815 = vcombine.high %v2605, %v2613
        %v2817 = vunpack.c.l.s4 1983009808
        %v2818 = vunpack.c.0.s8 %v2817
        %v2819 = vlaneseq
        %v2820 = vshrl.u32 %v2819, 7
        %v2821 = vsub.s32 %v2818, %v2820
        %v2822 = vrot.slane %v2814, %v2821
        %v2824 = vunpack.c.l.s4 1983009808
        %v2825 = vunpack.c.0.s8 %v2824
        %v2826 = vlaneseq
        %v2827 = vshrl.u32 %v2826, 7
        %v2828 = vsub.s32 %v2825, %v2827
        %v2829 = vrot.slane %v2815, %v2828
        %v2830 = vcombine.low %v2774, %v2790
        %v2831 = vcombine.high %v2774, %v2790
        %v2833 = vunpack.c.l.s4 1934713408
        %v2834 = vunpack.c.0.s8 %v2833
        %v2835 = vlaneseq
        %v2836 = vshrl.u32 %v2835, 7
        %v2837 = vsub.s32 %v2834, %v2836
        %v2838 = vrot.slane %v2830, %v2837
        %v2840 = vunpack.c.l.s4 1934713408
        %v2841 = vunpack.c.0.s8 %v2840
        %v2842 = vlaneseq
        %v2843 = vshrl.u32 %v2842, 7
        %v2844 = vsub.s32 %v2841, %v2843
        %v2845 = vrot.slane %v2831, %v2844
        %v2846 = vcombine.low %v2781, %v2797
        %v2847 = vcombine.high %v2781, %v2797
        %v2849 = vunpack.c.l.s4 1934713408
        %v2850 = vunpack.c.0.s8 %v2849
        %v2851 = vlaneseq
        %v2852 = vshrl.u32 %v2851, 7
        %v2853 = vsub.s32 %v2850, %v2852
        %v2854 = vrot.slane %v2846, %v2853
        %v2856 = vunpack.c.l.s4 1934713408
        %v2857 = vunpack.c.0.s8 %v2856
        %v2858 = vlaneseq
        %v2859 = vshrl.u32 %v2858, 7
        %v2860 = vsub.s32 %v2857, %v2859
        %v2861 = vrot.slane %v2847, %v2860
        %v2862 = vcombine.low %v2806, %v2822
        %v2863 = vcombine.high %v2806, %v2822
        %v2865 = vunpack.c.l.s4 1934713408
        %v2866 = vunpack.c.0.s8 %v2865
        %v2867 = vlaneseq
        %v2868 = vshrl.u32 %v2867, 7
        %v2869 = vsub.s32 %v2866, %v2868
        %v2870 = vrot.slane %v2862, %v2869
        %v2872 = vunpack.c.l.s4 1934713408
        %v2873 = vunpack.c.0.s8 %v2872
        %v2874 = vlaneseq
        %v2875 = vshrl.u32 %v2874, 7
        %v2876 = vsub.s32 %v2873, %v2875
        %v2877 = vrot.slane %v2863, %v2876
        %v2878 = vcombine.low %v2813, %v2829
        %v2879 = vcombine.high %v2813, %v2829
        %v2881 = vunpack.c.l.s4 1934713408
        %v2882 = vunpack.c.0.s8 %v2881
        %v2883 = vlaneseq
        %v2884 = vshrl.u32 %v2883, 7
        %v2885 = vsub.s32 %v2882, %v2884
        %v2886 = vrot.slane %v2878, %v2885
        %v2888 = vunpack.c.l.s4 1934713408
        %v2889 = vunpack.c.0.s8 %v2888
        %v2890 = vlaneseq
        %v2891 = vshrl.u32 %v2890, 7
        %v2892 = vsub.s32 %v2889, %v2891
        %v2893 = vrot.slane %v2879, %v2892
        %v2894 = vcombine.low %v2838, %v2870
        %v2895 = vcombine.high %v2838, %v2870
        %v2896 = vcombine.low %v2845, %v2877
        %v2897 = vcombine.high %v2845, %v2877
        %v2898 = vcombine.low %v2854, %v2886
        %v2899 = vcombine.high %v2854, %v2886
        %v2900 = vcombine.low %v2861, %v2893
        %v2901 = vcombine.high %v2861, %v2893
        %2903 = vrot.lane.b32.xlu0 %v2759, 16
        %v2904 = vpop.permute.xlu0 %2903
        %2907 = vrot.lane.b32.xlu0 %v2760, 32
        %v2908 = vpop.permute.xlu0 %2907
        %2911 = vrot.lane.b32.xlu0 %v2761, 48
        %v2912 = vpop.permute.xlu0 %2911
        %2915 = vrot.lane.b32.xlu0 %v2762, 64
        %v2916 = vpop.permute.xlu0 %2915
        %2919 = vrot.lane.b32.xlu0 %v2763, 80
        %v2920 = vpop.permute.xlu0 %2919
        %2923 = vrot.lane.b32.xlu0 %v2764, 96
        %v2924 = vpop.permute.xlu0 %2923
        %2927 = vrot.lane.b32.xlu0 %v2765, 112
        %v2928 = vpop.permute.xlu0 %2927
        %2931 = vrot.lane.b32.xlu0 %v2895, 16
        %v2932 = vpop.permute.xlu0 %2931
        %2935 = vrot.lane.b32.xlu0 %v2896, 32
        %v2936 = vpop.permute.xlu0 %2935
        %2939 = vrot.lane.b32.xlu0 %v2897, 48
        %v2940 = vpop.permute.xlu0 %2939
        %2943 = vrot.lane.b32.xlu0 %v2898, 64
        %v2944 = vpop.permute.xlu0 %2943
        %2947 = vrot.lane.b32.xlu0 %v2899, 80
        %v2948 = vpop.permute.xlu0 %2947
        %2951 = vrot.lane.b32.xlu0 %v2900, 96
        %v2952 = vpop.permute.xlu0 %2951
        %2955 = vrot.lane.b32.xlu0 %v2901, 112
        %v2956 = vpop.permute.xlu0 %2955
        %v2958 = vsel %vm491, %v2758, %v2904
        %v2959 = vsel %vm2169, %v2958, %v2908
        %v2960 = vsel %vm2171, %v2959, %v2912
        %v2961 = vsel %vm2173, %v2960, %v2916
        %v2962 = vsel %vm2175, %v2961, %v2920
        %v2963 = vsel %vm2177, %v2962, %v2924
        %v2964 = vsel %vm2179, %v2963, %v2928
        %v2965 = vsel %vm491, %v2894, %v2932
        %v2966 = vsel %vm2169, %v2965, %v2936
        %v2967 = vsel %vm2171, %v2966, %v2940
        %v2968 = vsel %vm2173, %v2967, %v2944
        %v2969 = vsel %vm2175, %v2968, %v2948
        %v2970 = vsel %vm2177, %v2969, %v2952
        %v2971 = vsel %vm2179, %v2970, %v2956
        %vm2976 = vcmask 1046528
        %v2977 = vrot.slane %v1657, 1
        %v2978 = vrot.slane %v1635, 1
        %v2979 = vsel %vm2976, %v2977, %v2978
        %v2980 = vrot.slane %v1661, 1
        %v2981 = vsel %vm2976, %v2978, %v2980
        %v2982 = vrot.slane %v1658, 1
        %v2983 = vrot.slane %v1638, 1
        %v2984 = vsel %vm2976, %v2982, %v2983
        %v2985 = vrot.slane %v1662, 1
        %v2986 = vsel %vm2976, %v2983, %v2985
        %v2987 = vrot.slane %v1659, 1
        %v2988 = vrot.slane %v1641, 1
        %v2989 = vsel %vm2976, %v2987, %v2988
        %v2990 = vrot.slane %v1663, 1
        %v2991 = vsel %vm2976, %v2988, %v2990
        %v2992 = vrot.slane %v1660, 1
        %v2993 = vrot.slane %v1644, 1
        %v2994 = vsel %vm2976, %v2992, %v2993
        %v2995 = vrot.slane %v1664, 1
        %v2996 = vsel %vm2976, %v2993, %v2995
        %v2997 = vrot.slane %v1681, 1
        %v2998 = vrot.slane %v1698, 1
        %v2999 = vsel %vm2976, %v2997, %v2998
        %v3000 = vrot.slane %v1705, 1
        %v3001 = vsel %vm2976, %v2998, %v3000
        %v3002 = vrot.slane %v1722, 1
        %v3003 = vrot.slane %v1739, 1
        %v3004 = vsel %vm2976, %v3002, %v3003
        %v3005 = vrot.slane %v1746, 1
        %v3006 = vsel %vm2976, %v3003, %v3005
        %v3007 = vrot.slane %v1763, 1
        %v3008 = vrot.slane %v1780, 1
        %v3009 = vsel %vm2976, %v3007, %v3008
        %v3010 = vrot.slane %v1787, 1
        %v3011 = vsel %vm2976, %v3008, %v3010
        %v3012 = vrot.slane %v1804, 1
        %v3013 = vrot.slane %v1821, 1
        %v3014 = vsel %vm2976, %v3012, %v3013
        %v3015 = vrot.slane %v1828, 1
        %v3016 = vsel %vm2976, %v3013, %v3015
        %v3033 = vcombine.low %v2979, %v2989
        %v3034 = vcombine.high %v2979, %v2989
        %v3036 = vunpack.c.l.s4 1983009808
        %v3037 = vunpack.c.0.s8 %v3036
        %v3038 = vlaneseq
        %v3039 = vshrl.u32 %v3038, 7
        %v3040 = vsub.s32 %v3037, %v3039
        %v3041 = vrot.slane %v3033, %v3040
        %v3043 = vunpack.c.l.s4 1983009808
        %v3044 = vunpack.c.0.s8 %v3043
        %v3045 = vlaneseq
        %v3046 = vshrl.u32 %v3045, 7
        %v3047 = vsub.s32 %v3044, %v3046
        %v3048 = vrot.slane %v3034, %v3047
        %v3049 = vcombine.low %v2984, %v2994
        %v3050 = vcombine.high %v2984, %v2994
        %v3052 = vunpack.c.l.s4 1983009808
        %v3053 = vunpack.c.0.s8 %v3052
        %v3054 = vlaneseq
        %v3055 = vshrl.u32 %v3054, 7
        %v3056 = vsub.s32 %v3053, %v3055
        %v3057 = vrot.slane %v3049, %v3056
        %v3059 = vunpack.c.l.s4 1983009808
        %v3060 = vunpack.c.0.s8 %v3059
        %v3061 = vlaneseq
        %v3062 = vshrl.u32 %v3061, 7
        %v3063 = vsub.s32 %v3060, %v3062
        %v3064 = vrot.slane %v3050, %v3063
        %v3065 = vcombine.low %v2999, %v3009
        %v3066 = vcombine.high %v2999, %v3009
        %v3068 = vunpack.c.l.s4 1983009808
        %v3069 = vunpack.c.0.s8 %v3068
        %v3070 = vlaneseq
        %v3071 = vshrl.u32 %v3070, 7
        %v3072 = vsub.s32 %v3069, %v3071
        %v3073 = vrot.slane %v3065, %v3072
        %v3075 = vunpack.c.l.s4 1983009808
        %v3076 = vunpack.c.0.s8 %v3075
        %v3077 = vlaneseq
        %v3078 = vshrl.u32 %v3077, 7
        %v3079 = vsub.s32 %v3076, %v3078
        %v3080 = vrot.slane %v3066, %v3079
        %v3081 = vcombine.low %v3004, %v3014
        %v3082 = vcombine.high %v3004, %v3014
        %v3084 = vunpack.c.l.s4 1983009808
        %v3085 = vunpack.c.0.s8 %v3084
        %v3086 = vlaneseq
        %v3087 = vshrl.u32 %v3086, 7
        %v3088 = vsub.s32 %v3085, %v3087
        %v3089 = vrot.slane %v3081, %v3088
        %v3091 = vunpack.c.l.s4 1983009808
        %v3092 = vunpack.c.0.s8 %v3091
        %v3093 = vlaneseq
        %v3094 = vshrl.u32 %v3093, 7
        %v3095 = vsub.s32 %v3092, %v3094
        %v3096 = vrot.slane %v3082, %v3095
        %v3097 = vcombine.low %v3041, %v3057
        %v3098 = vcombine.high %v3041, %v3057
        %v3100 = vunpack.c.l.s4 1934713408
        %v3101 = vunpack.c.0.s8 %v3100
        %v3102 = vlaneseq
        %v3103 = vshrl.u32 %v3102, 7
        %v3104 = vsub.s32 %v3101, %v3103
        %v3105 = vrot.slane %v3097, %v3104
        %v3107 = vunpack.c.l.s4 1934713408
        %v3108 = vunpack.c.0.s8 %v3107
        %v3109 = vlaneseq
        %v3110 = vshrl.u32 %v3109, 7
        %v3111 = vsub.s32 %v3108, %v3110
        %v3112 = vrot.slane %v3098, %v3111
        %v3113 = vcombine.low %v3048, %v3064
        %v3114 = vcombine.high %v3048, %v3064
        %v3116 = vunpack.c.l.s4 1934713408
        %v3117 = vunpack.c.0.s8 %v3116
        %v3118 = vlaneseq
        %v3119 = vshrl.u32 %v3118, 7
        %v3120 = vsub.s32 %v3117, %v3119
        %v3121 = vrot.slane %v3113, %v3120
        %v3123 = vunpack.c.l.s4 1934713408
        %v3124 = vunpack.c.0.s8 %v3123
        %v3125 = vlaneseq
        %v3126 = vshrl.u32 %v3125, 7
        %v3127 = vsub.s32 %v3124, %v3126
        %v3128 = vrot.slane %v3114, %v3127
        %v3129 = vcombine.low %v3073, %v3089
        %v3130 = vcombine.high %v3073, %v3089
        %v3132 = vunpack.c.l.s4 1934713408
        %v3133 = vunpack.c.0.s8 %v3132
        %v3134 = vlaneseq
        %v3135 = vshrl.u32 %v3134, 7
        %v3136 = vsub.s32 %v3133, %v3135
        %v3137 = vrot.slane %v3129, %v3136
        %v3139 = vunpack.c.l.s4 1934713408
        %v3140 = vunpack.c.0.s8 %v3139
        %v3141 = vlaneseq
        %v3142 = vshrl.u32 %v3141, 7
        %v3143 = vsub.s32 %v3140, %v3142
        %v3144 = vrot.slane %v3130, %v3143
        %v3145 = vcombine.low %v3080, %v3096
        %v3146 = vcombine.high %v3080, %v3096
        %v3148 = vunpack.c.l.s4 1934713408
        %v3149 = vunpack.c.0.s8 %v3148
        %v3150 = vlaneseq
        %v3151 = vshrl.u32 %v3150, 7
        %v3152 = vsub.s32 %v3149, %v3151
        %v3153 = vrot.slane %v3145, %v3152
        %v3155 = vunpack.c.l.s4 1934713408
        %v3156 = vunpack.c.0.s8 %v3155
        %v3157 = vlaneseq
        %v3158 = vshrl.u32 %v3157, 7
        %v3159 = vsub.s32 %v3156, %v3158
        %v3160 = vrot.slane %v3146, %v3159
        %v3161 = vcombine.low %v3105, %v3137
        %v3162 = vcombine.high %v3105, %v3137
        %v3163 = vcombine.low %v3112, %v3144
        %v3164 = vcombine.high %v3112, %v3144
        %v3165 = vcombine.low %v3121, %v3153
        %v3166 = vcombine.high %v3121, %v3153
        %v3167 = vcombine.low %v3128, %v3160
        %v3168 = vcombine.high %v3128, %v3160
        %v3169 = vcombine.low %v2981, %v2991
        %v3170 = vcombine.high %v2981, %v2991
        %v3172 = vunpack.c.l.s4 1983009808
        %v3173 = vunpack.c.0.s8 %v3172
        %v3174 = vlaneseq
        %v3175 = vshrl.u32 %v3174, 7
        %v3176 = vsub.s32 %v3173, %v3175
        %v3177 = vrot.slane %v3169, %v3176
        %v3179 = vunpack.c.l.s4 1983009808
        %v3180 = vunpack.c.0.s8 %v3179
        %v3181 = vlaneseq
        %v3182 = vshrl.u32 %v3181, 7
        %v3183 = vsub.s32 %v3180, %v3182
        %v3184 = vrot.slane %v3170, %v3183
        %v3185 = vcombine.low %v2986, %v2996
        %v3186 = vcombine.high %v2986, %v2996
        %v3188 = vunpack.c.l.s4 1983009808
        %v3189 = vunpack.c.0.s8 %v3188
        %v3190 = vlaneseq
        %v3191 = vshrl.u32 %v3190, 7
        %v3192 = vsub.s32 %v3189, %v3191
        %v3193 = vrot.slane %v3185, %v3192
        %v3195 = vunpack.c.l.s4 1983009808
        %v3196 = vunpack.c.0.s8 %v3195
        %v3197 = vlaneseq
        %v3198 = vshrl.u32 %v3197, 7
        %v3199 = vsub.s32 %v3196, %v3198
        %v3200 = vrot.slane %v3186, %v3199
        %v3201 = vcombine.low %v3001, %v3011
        %v3202 = vcombine.high %v3001, %v3011
        %v3204 = vunpack.c.l.s4 1983009808
        %v3205 = vunpack.c.0.s8 %v3204
        %v3206 = vlaneseq
        %v3207 = vshrl.u32 %v3206, 7
        %v3208 = vsub.s32 %v3205, %v3207
        %v3209 = vrot.slane %v3201, %v3208
        %v3211 = vunpack.c.l.s4 1983009808
        %v3212 = vunpack.c.0.s8 %v3211
        %v3213 = vlaneseq
        %v3214 = vshrl.u32 %v3213, 7
        %v3215 = vsub.s32 %v3212, %v3214
        %v3216 = vrot.slane %v3202, %v3215
        %v3217 = vcombine.low %v3006, %v3016
        %v3218 = vcombine.high %v3006, %v3016
        %v3220 = vunpack.c.l.s4 1983009808
        %v3221 = vunpack.c.0.s8 %v3220
        %v3222 = vlaneseq
        %v3223 = vshrl.u32 %v3222, 7
        %v3224 = vsub.s32 %v3221, %v3223
        %v3225 = vrot.slane %v3217, %v3224
        %v3227 = vunpack.c.l.s4 1983009808
        %v3228 = vunpack.c.0.s8 %v3227
        %v3229 = vlaneseq
        %v3230 = vshrl.u32 %v3229, 7
        %v3231 = vsub.s32 %v3228, %v3230
        %v3232 = vrot.slane %v3218, %v3231
        %v3233 = vcombine.low %v3177, %v3193
        %v3234 = vcombine.high %v3177, %v3193
        %v3236 = vunpack.c.l.s4 1934713408
        %v3237 = vunpack.c.0.s8 %v3236
        %v3238 = vlaneseq
        %v3239 = vshrl.u32 %v3238, 7
        %v3240 = vsub.s32 %v3237, %v3239
        %v3241 = vrot.slane %v3233, %v3240
        %v3243 = vunpack.c.l.s4 1934713408
        %v3244 = vunpack.c.0.s8 %v3243
        %v3245 = vlaneseq
        %v3246 = vshrl.u32 %v3245, 7
        %v3247 = vsub.s32 %v3244, %v3246
        %v3248 = vrot.slane %v3234, %v3247
        %v3249 = vcombine.low %v3184, %v3200
        %v3250 = vcombine.high %v3184, %v3200
        %v3252 = vunpack.c.l.s4 1934713408
        %v3253 = vunpack.c.0.s8 %v3252
        %v3254 = vlaneseq
        %v3255 = vshrl.u32 %v3254, 7
        %v3256 = vsub.s32 %v3253, %v3255
        %v3257 = vrot.slane %v3249, %v3256
        %v3259 = vunpack.c.l.s4 1934713408
        %v3260 = vunpack.c.0.s8 %v3259
        %v3261 = vlaneseq
        %v3262 = vshrl.u32 %v3261, 7
        %v3263 = vsub.s32 %v3260, %v3262
        %v3264 = vrot.slane %v3250, %v3263
        %v3265 = vcombine.low %v3209, %v3225
        %v3266 = vcombine.high %v3209, %v3225
        %v3268 = vunpack.c.l.s4 1934713408
        %v3269 = vunpack.c.0.s8 %v3268
        %v3270 = vlaneseq
        %v3271 = vshrl.u32 %v3270, 7
        %v3272 = vsub.s32 %v3269, %v3271
        %v3273 = vrot.slane %v3265, %v3272
        %v3275 = vunpack.c.l.s4 1934713408
        %v3276 = vunpack.c.0.s8 %v3275
        %v3277 = vlaneseq
        %v3278 = vshrl.u32 %v3277, 7
        %v3279 = vsub.s32 %v3276, %v3278
        %v3280 = vrot.slane %v3266, %v3279
        %v3281 = vcombine.low %v3216, %v3232
        %v3282 = vcombine.high %v3216, %v3232
        %v3284 = vunpack.c.l.s4 1934713408
        %v3285 = vunpack.c.0.s8 %v3284
        %v3286 = vlaneseq
        %v3287 = vshrl.u32 %v3286, 7
        %v3288 = vsub.s32 %v3285, %v3287
        %v3289 = vrot.slane %v3281, %v3288
        %v3291 = vunpack.c.l.s4 1934713408
        %v3292 = vunpack.c.0.s8 %v3291
        %v3293 = vlaneseq
        %v3294 = vshrl.u32 %v3293, 7
        %v3295 = vsub.s32 %v3292, %v3294
        %v3296 = vrot.slane %v3282, %v3295
        %v3297 = vcombine.low %v3241, %v3273
        %v3298 = vcombine.high %v3241, %v3273
        %v3299 = vcombine.low %v3248, %v3280
        %v3300 = vcombine.high %v3248, %v3280
        %v3301 = vcombine.low %v3257, %v3289
        %v3302 = vcombine.high %v3257, %v3289
        %v3303 = vcombine.low %v3264, %v3296
        %v3304 = vcombine.high %v3264, %v3296
        %3306 = vrot.lane.b32.xlu0 %v3162, 16
        %v3307 = vpop.permute.xlu0 %3306
        %3310 = vrot.lane.b32.xlu0 %v3163, 32
        %v3311 = vpop.permute.xlu0 %3310
        %3314 = vrot.lane.b32.xlu0 %v3164, 48
        %v3315 = vpop.permute.xlu0 %3314
        %3318 = vrot.lane.b32.xlu0 %v3165, 64
        %v3319 = vpop.permute.xlu0 %3318
        %3322 = vrot.lane.b32.xlu0 %v3166, 80
        %v3323 = vpop.permute.xlu0 %3322
        %3326 = vrot.lane.b32.xlu0 %v3167, 96
        %v3327 = vpop.permute.xlu0 %3326
        %3330 = vrot.lane.b32.xlu0 %v3168, 112
        %v3331 = vpop.permute.xlu0 %3330
        %3334 = vrot.lane.b32.xlu0 %v3298, 16
        %v3335 = vpop.permute.xlu0 %3334
        %3338 = vrot.lane.b32.xlu0 %v3299, 32
        %v3339 = vpop.permute.xlu0 %3338
        %3342 = vrot.lane.b32.xlu0 %v3300, 48
        %v3343 = vpop.permute.xlu0 %3342
        %3346 = vrot.lane.b32.xlu0 %v3301, 64
        %v3347 = vpop.permute.xlu0 %3346
        %3350 = vrot.lane.b32.xlu0 %v3302, 80
        %v3351 = vpop.permute.xlu0 %3350
        %3354 = vrot.lane.b32.xlu0 %v3303, 96
        %v3355 = vpop.permute.xlu0 %3354
        %3358 = vrot.lane.b32.xlu0 %v3304, 112
        %v3359 = vpop.permute.xlu0 %3358
        %v3361 = vsel %vm491, %v3161, %v3307
        %v3362 = vsel %vm2169, %v3361, %v3311
        %v3363 = vsel %vm2171, %v3362, %v3315
        %v3364 = vsel %vm2173, %v3363, %v3319
        %v3365 = vsel %vm2175, %v3364, %v3323
        %v3366 = vsel %vm2177, %v3365, %v3327
        %v3367 = vsel %vm2179, %v3366, %v3331
        %v3368 = vsel %vm491, %v3297, %v3335
        %v3369 = vsel %vm2169, %v3368, %v3339
        %v3370 = vsel %vm2171, %v3369, %v3343
        %v3371 = vsel %vm2173, %v3370, %v3347
        %v3372 = vsel %vm2175, %v3371, %v3351
        %v3373 = vsel %vm2177, %v3372, %v3355
        %v3374 = vsel %vm2179, %v3373, %v3359
        %3375 = vrot.lane.b32.xlu0 %v2979, 127
        %v3376 = vpop.permute.xlu0 %3375
        %3377 = vrot.lane.b32.xlu0 %v2981, 127
        %v3378 = vpop.permute.xlu0 %3377
        %3379 = vrot.lane.b32.xlu0 %v2984, 127
        %v3380 = vpop.permute.xlu0 %3379
        %3381 = vrot.lane.b32.xlu0 %v2986, 127
        %v3382 = vpop.permute.xlu0 %3381
        %3383 = vrot.lane.b32.xlu0 %v2989, 127
        %v3384 = vpop.permute.xlu0 %3383
        %3385 = vrot.lane.b32.xlu0 %v2991, 127
        %v3386 = vpop.permute.xlu0 %3385
        %3387 = vrot.lane.b32.xlu0 %v2994, 127
        %v3388 = vpop.permute.xlu0 %3387
        %3389 = vrot.lane.b32.xlu0 %v2996, 127
        %v3390 = vpop.permute.xlu0 %3389
        %3391 = vrot.lane.b32.xlu0 %v2999, 127
        %v3392 = vpop.permute.xlu0 %3391
        %3393 = vrot.lane.b32.xlu0 %v3001, 127
        %v3394 = vpop.permute.xlu0 %3393
        %3395 = vrot.lane.b32.xlu0 %v3004, 127
        %v3396 = vpop.permute.xlu0 %3395
        %3397 = vrot.lane.b32.xlu0 %v3006, 127
        %v3398 = vpop.permute.xlu0 %3397
        %3399 = vrot.lane.b32.xlu0 %v3009, 127
        %v3400 = vpop.permute.xlu0 %3399
        %3401 = vrot.lane.b32.xlu0 %v3011, 127
        %v3402 = vpop.permute.xlu0 %3401
        %3403 = vrot.lane.b32.xlu0 %v3014, 127
        %v3404 = vpop.permute.xlu0 %3403
        %3405 = vrot.lane.b32.xlu0 %v3016, 127
        %v3406 = vpop.permute.xlu0 %3405
        %v3423 = vcombine.low %v3376, %v3384
        %v3424 = vcombine.high %v3376, %v3384
        %v3426 = vunpack.c.l.s4 1983009808
        %v3427 = vunpack.c.0.s8 %v3426
        %v3428 = vlaneseq
        %v3429 = vshrl.u32 %v3428, 7
        %v3430 = vsub.s32 %v3427, %v3429
        %v3431 = vrot.slane %v3423, %v3430
        %v3433 = vunpack.c.l.s4 1983009808
        %v3434 = vunpack.c.0.s8 %v3433
        %v3435 = vlaneseq
        %v3436 = vshrl.u32 %v3435, 7
        %v3437 = vsub.s32 %v3434, %v3436
        %v3438 = vrot.slane %v3424, %v3437
        %v3439 = vcombine.low %v3380, %v3388
        %v3440 = vcombine.high %v3380, %v3388
        %v3442 = vunpack.c.l.s4 1983009808
        %v3443 = vunpack.c.0.s8 %v3442
        %v3444 = vlaneseq
        %v3445 = vshrl.u32 %v3444, 7
        %v3446 = vsub.s32 %v3443, %v3445
        %v3447 = vrot.slane %v3439, %v3446
        %v3449 = vunpack.c.l.s4 1983009808
        %v3450 = vunpack.c.0.s8 %v3449
        %v3451 = vlaneseq
        %v3452 = vshrl.u32 %v3451, 7
        %v3453 = vsub.s32 %v3450, %v3452
        %v3454 = vrot.slane %v3440, %v3453
        %v3455 = vcombine.low %v3392, %v3400
        %v3456 = vcombine.high %v3392, %v3400
        %v3458 = vunpack.c.l.s4 1983009808
        %v3459 = vunpack.c.0.s8 %v3458
        %v3460 = vlaneseq
        %v3461 = vshrl.u32 %v3460, 7
        %v3462 = vsub.s32 %v3459, %v3461
        %v3463 = vrot.slane %v3455, %v3462
        %v3465 = vunpack.c.l.s4 1983009808
        %v3466 = vunpack.c.0.s8 %v3465
        %v3467 = vlaneseq
        %v3468 = vshrl.u32 %v3467, 7
        %v3469 = vsub.s32 %v3466, %v3468
        %v3470 = vrot.slane %v3456, %v3469
        %v3471 = vcombine.low %v3396, %v3404
        %v3472 = vcombine.high %v3396, %v3404
        %v3474 = vunpack.c.l.s4 1983009808
        %v3475 = vunpack.c.0.s8 %v3474
        %v3476 = vlaneseq
        %v3477 = vshrl.u32 %v3476, 7
        %v3478 = vsub.s32 %v3475, %v3477
        %v3479 = vrot.slane %v3471, %v3478
        %v3481 = vunpack.c.l.s4 1983009808
        %v3482 = vunpack.c.0.s8 %v3481
        %v3483 = vlaneseq
        %v3484 = vshrl.u32 %v3483, 7
        %v3485 = vsub.s32 %v3482, %v3484
        %v3486 = vrot.slane %v3472, %v3485
        %v3487 = vcombine.low %v3431, %v3447
        %v3488 = vcombine.high %v3431, %v3447
        %v3490 = vunpack.c.l.s4 1934713408
        %v3491 = vunpack.c.0.s8 %v3490
        %v3492 = vlaneseq
        %v3493 = vshrl.u32 %v3492, 7
        %v3494 = vsub.s32 %v3491, %v3493
        %v3495 = vrot.slane %v3487, %v3494
        %v3497 = vunpack.c.l.s4 1934713408
        %v3498 = vunpack.c.0.s8 %v3497
        %v3499 = vlaneseq
        %v3500 = vshrl.u32 %v3499, 7
        %v3501 = vsub.s32 %v3498, %v3500
        %v3502 = vrot.slane %v3488, %v3501
        %v3503 = vcombine.low %v3438, %v3454
        %v3504 = vcombine.high %v3438, %v3454
        %v3506 = vunpack.c.l.s4 1934713408
        %v3507 = vunpack.c.0.s8 %v3506
        %v3508 = vlaneseq
        %v3509 = vshrl.u32 %v3508, 7
        %v3510 = vsub.s32 %v3507, %v3509
        %v3511 = vrot.slane %v3503, %v3510
        %v3513 = vunpack.c.l.s4 1934713408
        %v3514 = vunpack.c.0.s8 %v3513
        %v3515 = vlaneseq
        %v3516 = vshrl.u32 %v3515, 7
        %v3517 = vsub.s32 %v3514, %v3516
        %v3518 = vrot.slane %v3504, %v3517
        %v3519 = vcombine.low %v3463, %v3479
        %v3520 = vcombine.high %v3463, %v3479
        %v3522 = vunpack.c.l.s4 1934713408
        %v3523 = vunpack.c.0.s8 %v3522
        %v3524 = vlaneseq
        %v3525 = vshrl.u32 %v3524, 7
        %v3526 = vsub.s32 %v3523, %v3525
        %v3527 = vrot.slane %v3519, %v3526
        %v3529 = vunpack.c.l.s4 1934713408
        %v3530 = vunpack.c.0.s8 %v3529
        %v3531 = vlaneseq
        %v3532 = vshrl.u32 %v3531, 7
        %v3533 = vsub.s32 %v3530, %v3532
        %v3534 = vrot.slane %v3520, %v3533
        %v3535 = vcombine.low %v3470, %v3486
        %v3536 = vcombine.high %v3470, %v3486
        %v3538 = vunpack.c.l.s4 1934713408
        %v3539 = vunpack.c.0.s8 %v3538
        %v3540 = vlaneseq
        %v3541 = vshrl.u32 %v3540, 7
        %v3542 = vsub.s32 %v3539, %v3541
        %v3543 = vrot.slane %v3535, %v3542
        %v3545 = vunpack.c.l.s4 1934713408
        %v3546 = vunpack.c.0.s8 %v3545
        %v3547 = vlaneseq
        %v3548 = vshrl.u32 %v3547, 7
        %v3549 = vsub.s32 %v3546, %v3548
        %v3550 = vrot.slane %v3536, %v3549
        %v3551 = vcombine.low %v3495, %v3527
        %v3552 = vcombine.high %v3495, %v3527
        %v3553 = vcombine.low %v3502, %v3534
        %v3554 = vcombine.high %v3502, %v3534
        %v3555 = vcombine.low %v3511, %v3543
        %v3556 = vcombine.high %v3511, %v3543
        %v3557 = vcombine.low %v3518, %v3550
        %v3558 = vcombine.high %v3518, %v3550
        %v3559 = vcombine.low %v3378, %v3386
        %v3560 = vcombine.high %v3378, %v3386
        %v3562 = vunpack.c.l.s4 1983009808
        %v3563 = vunpack.c.0.s8 %v3562
        %v3564 = vlaneseq
        %v3565 = vshrl.u32 %v3564, 7
        %v3566 = vsub.s32 %v3563, %v3565
        %v3567 = vrot.slane %v3559, %v3566
        %v3569 = vunpack.c.l.s4 1983009808
        %v3570 = vunpack.c.0.s8 %v3569
        %v3571 = vlaneseq
        %v3572 = vshrl.u32 %v3571, 7
        %v3573 = vsub.s32 %v3570, %v3572
        %v3574 = vrot.slane %v3560, %v3573
        %v3575 = vcombine.low %v3382, %v3390
        %v3576 = vcombine.high %v3382, %v3390
        %v3578 = vunpack.c.l.s4 1983009808
        %v3579 = vunpack.c.0.s8 %v3578
        %v3580 = vlaneseq
        %v3581 = vshrl.u32 %v3580, 7
        %v3582 = vsub.s32 %v3579, %v3581
        %v3583 = vrot.slane %v3575, %v3582
        %v3585 = vunpack.c.l.s4 1983009808
        %v3586 = vunpack.c.0.s8 %v3585
        %v3587 = vlaneseq
        %v3588 = vshrl.u32 %v3587, 7
        %v3589 = vsub.s32 %v3586, %v3588
        %v3590 = vrot.slane %v3576, %v3589
        %v3591 = vcombine.low %v3394, %v3402
        %v3592 = vcombine.high %v3394, %v3402
        %v3594 = vunpack.c.l.s4 1983009808
        %v3595 = vunpack.c.0.s8 %v3594
        %v3596 = vlaneseq
        %v3597 = vshrl.u32 %v3596, 7
        %v3598 = vsub.s32 %v3595, %v3597
        %v3599 = vrot.slane %v3591, %v3598
        %v3601 = vunpack.c.l.s4 1983009808
        %v3602 = vunpack.c.0.s8 %v3601
        %v3603 = vlaneseq
        %v3604 = vshrl.u32 %v3603, 7
        %v3605 = vsub.s32 %v3602, %v3604
        %v3606 = vrot.slane %v3592, %v3605
        %v3607 = vcombine.low %v3398, %v3406
        %v3608 = vcombine.high %v3398, %v3406
        %v3610 = vunpack.c.l.s4 1983009808
        %v3611 = vunpack.c.0.s8 %v3610
        %v3612 = vlaneseq
        %v3613 = vshrl.u32 %v3612, 7
        %v3614 = vsub.s32 %v3611, %v3613
        %v3615 = vrot.slane %v3607, %v3614
        %v3617 = vunpack.c.l.s4 1983009808
        %v3618 = vunpack.c.0.s8 %v3617
        %v3619 = vlaneseq
        %v3620 = vshrl.u32 %v3619, 7
        %v3621 = vsub.s32 %v3618, %v3620
        %v3622 = vrot.slane %v3608, %v3621
        %v3623 = vcombine.low %v3567, %v3583
        %v3624 = vcombine.high %v3567, %v3583
        %v3626 = vunpack.c.l.s4 1934713408
        %v3627 = vunpack.c.0.s8 %v3626
        %v3628 = vlaneseq
        %v3629 = vshrl.u32 %v3628, 7
        %v3630 = vsub.s32 %v3627, %v3629
        %v3631 = vrot.slane %v3623, %v3630
        %v3633 = vunpack.c.l.s4 1934713408
        %v3634 = vunpack.c.0.s8 %v3633
        %v3635 = vlaneseq
        %v3636 = vshrl.u32 %v3635, 7
        %v3637 = vsub.s32 %v3634, %v3636
        %v3638 = vrot.slane %v3624, %v3637
        %v3639 = vcombine.low %v3574, %v3590
        %v3640 = vcombine.high %v3574, %v3590
        %v3642 = vunpack.c.l.s4 1934713408
        %v3643 = vunpack.c.0.s8 %v3642
        %v3644 = vlaneseq
        %v3645 = vshrl.u32 %v3644, 7
        %v3646 = vsub.s32 %v3643, %v3645
        %v3647 = vrot.slane %v3639, %v3646
        %v3649 = vunpack.c.l.s4 1934713408
        %v3650 = vunpack.c.0.s8 %v3649
        %v3651 = vlaneseq
        %v3652 = vshrl.u32 %v3651, 7
        %v3653 = vsub.s32 %v3650, %v3652
        %v3654 = vrot.slane %v3640, %v3653
        %v3655 = vcombine.low %v3599, %v3615
        %v3656 = vcombine.high %v3599, %v3615
        %v3658 = vunpack.c.l.s4 1934713408
        %v3659 = vunpack.c.0.s8 %v3658
        %v3660 = vlaneseq
        %v3661 = vshrl.u32 %v3660, 7
        %v3662 = vsub.s32 %v3659, %v3661
        %v3663 = vrot.slane %v3655, %v3662
        %v3665 = vunpack.c.l.s4 1934713408
        %v3666 = vunpack.c.0.s8 %v3665
        %v3667 = vlaneseq
        %v3668 = vshrl.u32 %v3667, 7
        %v3669 = vsub.s32 %v3666, %v3668
        %v3670 = vrot.slane %v3656, %v3669
        %v3671 = vcombine.low %v3606, %v3622
        %v3672 = vcombine.high %v3606, %v3622
        %v3674 = vunpack.c.l.s4 1934713408
        %v3675 = vunpack.c.0.s8 %v3674
        %v3676 = vlaneseq
        %v3677 = vshrl.u32 %v3676, 7
        %v3678 = vsub.s32 %v3675, %v3677
        %v3679 = vrot.slane %v3671, %v3678
        %v3681 = vunpack.c.l.s4 1934713408
        %v3682 = vunpack.c.0.s8 %v3681
        %v3683 = vlaneseq
        %v3684 = vshrl.u32 %v3683, 7
        %v3685 = vsub.s32 %v3682, %v3684
        %v3686 = vrot.slane %v3672, %v3685
        %v3687 = vcombine.low %v3631, %v3663
        %v3688 = vcombine.high %v3631, %v3663
        %v3689 = vcombine.low %v3638, %v3670
        %v3690 = vcombine.high %v3638, %v3670
        %v3691 = vcombine.low %v3647, %v3679
        %v3692 = vcombine.high %v3647, %v3679
        %v3693 = vcombine.low %v3654, %v3686
        %v3694 = vcombine.high %v3654, %v3686
        %3696 = vrot.lane.b32.xlu0 %v3552, 16
        %v3697 = vpop.permute.xlu0 %3696
        %3700 = vrot.lane.b32.xlu0 %v3553, 32
        %v3701 = vpop.permute.xlu0 %3700
        %3704 = vrot.lane.b32.xlu0 %v3554, 48
        %v3705 = vpop.permute.xlu0 %3704
        %3708 = vrot.lane.b32.xlu0 %v3555, 64
        %v3709 = vpop.permute.xlu0 %3708
        %3712 = vrot.lane.b32.xlu0 %v3556, 80
        %v3713 = vpop.permute.xlu0 %3712
        %3716 = vrot.lane.b32.xlu0 %v3557, 96
        %v3717 = vpop.permute.xlu0 %3716
        %3720 = vrot.lane.b32.xlu0 %v3558, 112
        %v3721 = vpop.permute.xlu0 %3720
        %3724 = vrot.lane.b32.xlu0 %v3688, 16
        %v3725 = vpop.permute.xlu0 %3724
        %3728 = vrot.lane.b32.xlu0 %v3689, 32
        %v3729 = vpop.permute.xlu0 %3728
        %3732 = vrot.lane.b32.xlu0 %v3690, 48
        %v3733 = vpop.permute.xlu0 %3732
        %3736 = vrot.lane.b32.xlu0 %v3691, 64
        %v3737 = vpop.permute.xlu0 %3736
        %3740 = vrot.lane.b32.xlu0 %v3692, 80
        %v3741 = vpop.permute.xlu0 %3740
        %3744 = vrot.lane.b32.xlu0 %v3693, 96
        %v3745 = vpop.permute.xlu0 %3744
        %3748 = vrot.lane.b32.xlu0 %v3694, 112
        %v3749 = vpop.permute.xlu0 %3748
        %v3751 = vsel %vm491, %v3551, %v3697
        %v3752 = vsel %vm2169, %v3751, %v3701
        %v3753 = vsel %vm2171, %v3752, %v3705
        %v3754 = vsel %vm2173, %v3753, %v3709
        %v3755 = vsel %vm2175, %v3754, %v3713
        %v3756 = vsel %vm2177, %v3755, %v3717
        %v3757 = vsel %vm2179, %v3756, %v3721
        %v3758 = vsel %vm491, %v3687, %v3725
        %v3759 = vsel %vm2169, %v3758, %v3729
        %v3760 = vsel %vm2171, %v3759, %v3733
        %v3761 = vsel %vm2173, %v3760, %v3737
        %v3762 = vsel %vm2175, %v3761, %v3741
        %v3763 = vsel %vm2177, %v3762, %v3745
        %v3764 = vsel %vm2179, %v3763, %v3749
        %3765 = vrot.lane.b32.xlu0 %v2979, 126
        %v3766 = vpop.permute.xlu0 %3765
        %3767 = vrot.lane.b32.xlu0 %v2981, 126
        %v3768 = vpop.permute.xlu0 %3767
        %3769 = vrot.lane.b32.xlu0 %v2984, 126
        %v3770 = vpop.permute.xlu0 %3769
        %3771 = vrot.lane.b32.xlu0 %v2986, 126
        %v3772 = vpop.permute.xlu0 %3771
        %3773 = vrot.lane.b32.xlu0 %v2989, 126
        %v3774 = vpop.permute.xlu0 %3773
        %3775 = vrot.lane.b32.xlu0 %v2991, 126
        %v3776 = vpop.permute.xlu0 %3775
        %3777 = vrot.lane.b32.xlu0 %v2994, 126
        %v3778 = vpop.permute.xlu0 %3777
        %3779 = vrot.lane.b32.xlu0 %v2996, 126
        %v3780 = vpop.permute.xlu0 %3779
        %3781 = vrot.lane.b32.xlu0 %v2999, 126
        %v3782 = vpop.permute.xlu0 %3781
        %3783 = vrot.lane.b32.xlu0 %v3001, 126
        %v3784 = vpop.permute.xlu0 %3783
        %3785 = vrot.lane.b32.xlu0 %v3004, 126
        %v3786 = vpop.permute.xlu0 %3785
        %3787 = vrot.lane.b32.xlu0 %v3006, 126
        %v3788 = vpop.permute.xlu0 %3787
        %3789 = vrot.lane.b32.xlu0 %v3009, 126
        %v3790 = vpop.permute.xlu0 %3789
        %3791 = vrot.lane.b32.xlu0 %v3011, 126
        %v3792 = vpop.permute.xlu0 %3791
        %3793 = vrot.lane.b32.xlu0 %v3014, 126
        %v3794 = vpop.permute.xlu0 %3793
        %3795 = vrot.lane.b32.xlu0 %v3016, 126
        %v3796 = vpop.permute.xlu0 %3795
        %v3813 = vcombine.low %v3766, %v3774
        %v3814 = vcombine.high %v3766, %v3774
        %v3816 = vunpack.c.l.s4 1983009808
        %v3817 = vunpack.c.0.s8 %v3816
        %v3818 = vlaneseq
        %v3819 = vshrl.u32 %v3818, 7
        %v3820 = vsub.s32 %v3817, %v3819
        %v3821 = vrot.slane %v3813, %v3820
        %v3823 = vunpack.c.l.s4 1983009808
        %v3824 = vunpack.c.0.s8 %v3823
        %v3825 = vlaneseq
        %v3826 = vshrl.u32 %v3825, 7
        %v3827 = vsub.s32 %v3824, %v3826
        %v3828 = vrot.slane %v3814, %v3827
        %v3829 = vcombine.low %v3770, %v3778
        %v3830 = vcombine.high %v3770, %v3778
        %v3832 = vunpack.c.l.s4 1983009808
        %v3833 = vunpack.c.0.s8 %v3832
        %v3834 = vlaneseq
        %v3835 = vshrl.u32 %v3834, 7
        %v3836 = vsub.s32 %v3833, %v3835
        %v3837 = vrot.slane %v3829, %v3836
        %v3839 = vunpack.c.l.s4 1983009808
        %v3840 = vunpack.c.0.s8 %v3839
        %v3841 = vlaneseq
        %v3842 = vshrl.u32 %v3841, 7
        %v3843 = vsub.s32 %v3840, %v3842
        %v3844 = vrot.slane %v3830, %v3843
        %v3845 = vcombine.low %v3782, %v3790
        %v3846 = vcombine.high %v3782, %v3790
        %v3848 = vunpack.c.l.s4 1983009808
        %v3849 = vunpack.c.0.s8 %v3848
        %v3850 = vlaneseq
        %v3851 = vshrl.u32 %v3850, 7
        %v3852 = vsub.s32 %v3849, %v3851
        %v3853 = vrot.slane %v3845, %v3852
        %v3855 = vunpack.c.l.s4 1983009808
        %v3856 = vunpack.c.0.s8 %v3855
        %v3857 = vlaneseq
        %v3858 = vshrl.u32 %v3857, 7
        %v3859 = vsub.s32 %v3856, %v3858
        %v3860 = vrot.slane %v3846, %v3859
        %v3861 = vcombine.low %v3786, %v3794
        %v3862 = vcombine.high %v3786, %v3794
        %v3864 = vunpack.c.l.s4 1983009808
        %v3865 = vunpack.c.0.s8 %v3864
        %v3866 = vlaneseq
        %v3867 = vshrl.u32 %v3866, 7
        %v3868 = vsub.s32 %v3865, %v3867
        %v3869 = vrot.slane %v3861, %v3868
        %v3871 = vunpack.c.l.s4 1983009808
        %v3872 = vunpack.c.0.s8 %v3871
        %v3873 = vlaneseq
        %v3874 = vshrl.u32 %v3873, 7
        %v3875 = vsub.s32 %v3872, %v3874
        %v3876 = vrot.slane %v3862, %v3875
        %v3877 = vcombine.low %v3821, %v3837
        %v3878 = vcombine.high %v3821, %v3837
        %v3880 = vunpack.c.l.s4 1934713408
        %v3881 = vunpack.c.0.s8 %v3880
        %v3882 = vlaneseq
        %v3883 = vshrl.u32 %v3882, 7
        %v3884 = vsub.s32 %v3881, %v3883
        %v3885 = vrot.slane %v3877, %v3884
        %v3887 = vunpack.c.l.s4 1934713408
        %v3888 = vunpack.c.0.s8 %v3887
        %v3889 = vlaneseq
        %v3890 = vshrl.u32 %v3889, 7
        %v3891 = vsub.s32 %v3888, %v3890
        %v3892 = vrot.slane %v3878, %v3891
        %v3893 = vcombine.low %v3828, %v3844
        %v3894 = vcombine.high %v3828, %v3844
        %v3896 = vunpack.c.l.s4 1934713408
        %v3897 = vunpack.c.0.s8 %v3896
        %v3898 = vlaneseq
        %v3899 = vshrl.u32 %v3898, 7
        %v3900 = vsub.s32 %v3897, %v3899
        %v3901 = vrot.slane %v3893, %v3900
        %v3903 = vunpack.c.l.s4 1934713408
        %v3904 = vunpack.c.0.s8 %v3903
        %v3905 = vlaneseq
        %v3906 = vshrl.u32 %v3905, 7
        %v3907 = vsub.s32 %v3904, %v3906
        %v3908 = vrot.slane %v3894, %v3907
        %v3909 = vcombine.low %v3853, %v3869
        %v3910 = vcombine.high %v3853, %v3869
        %v3912 = vunpack.c.l.s4 1934713408
        %v3913 = vunpack.c.0.s8 %v3912
        %v3914 = vlaneseq
        %v3915 = vshrl.u32 %v3914, 7
        %v3916 = vsub.s32 %v3913, %v3915
        %v3917 = vrot.slane %v3909, %v3916
        %v3919 = vunpack.c.l.s4 1934713408
        %v3920 = vunpack.c.0.s8 %v3919
        %v3921 = vlaneseq
        %v3922 = vshrl.u32 %v3921, 7
        %v3923 = vsub.s32 %v3920, %v3922
        %v3924 = vrot.slane %v3910, %v3923
        %v3925 = vcombine.low %v3860, %v3876
        %v3926 = vcombine.high %v3860, %v3876
        %v3928 = vunpack.c.l.s4 1934713408
        %v3929 = vunpack.c.0.s8 %v3928
        %v3930 = vlaneseq
        %v3931 = vshrl.u32 %v3930, 7
        %v3932 = vsub.s32 %v3929, %v3931
        %v3933 = vrot.slane %v3925, %v3932
        %v3935 = vunpack.c.l.s4 1934713408
        %v3936 = vunpack.c.0.s8 %v3935
        %v3937 = vlaneseq
        %v3938 = vshrl.u32 %v3937, 7
        %v3939 = vsub.s32 %v3936, %v3938
        %v3940 = vrot.slane %v3926, %v3939
        %v3941 = vcombine.low %v3885, %v3917
        %v3942 = vcombine.high %v3885, %v3917
        %v3943 = vcombine.low %v3892, %v3924
        %v3944 = vcombine.high %v3892, %v3924
        %v3945 = vcombine.low %v3901, %v3933
        %v3946 = vcombine.high %v3901, %v3933
        %v3947 = vcombine.low %v3908, %v3940
        %v3948 = vcombine.high %v3908, %v3940
        %v3949 = vcombine.low %v3768, %v3776
        %v3950 = vcombine.high %v3768, %v3776
        %v3952 = vunpack.c.l.s4 1983009808
        %v3953 = vunpack.c.0.s8 %v3952
        %v3954 = vlaneseq
        %v3955 = vshrl.u32 %v3954, 7
        %v3956 = vsub.s32 %v3953, %v3955
        %v3957 = vrot.slane %v3949, %v3956
        %v3959 = vunpack.c.l.s4 1983009808
        %v3960 = vunpack.c.0.s8 %v3959
        %v3961 = vlaneseq
        %v3962 = vshrl.u32 %v3961, 7
        %v3963 = vsub.s32 %v3960, %v3962
        %v3964 = vrot.slane %v3950, %v3963
        %v3965 = vcombine.low %v3772, %v3780
        %v3966 = vcombine.high %v3772, %v3780
        %v3968 = vunpack.c.l.s4 1983009808
        %v3969 = vunpack.c.0.s8 %v3968
        %v3970 = vlaneseq
        %v3971 = vshrl.u32 %v3970, 7
        %v3972 = vsub.s32 %v3969, %v3971
        %v3973 = vrot.slane %v3965, %v3972
        %v3975 = vunpack.c.l.s4 1983009808
        %v3976 = vunpack.c.0.s8 %v3975
        %v3977 = vlaneseq
        %v3978 = vshrl.u32 %v3977, 7
        %v3979 = vsub.s32 %v3976, %v3978
        %v3980 = vrot.slane %v3966, %v3979
        %v3981 = vcombine.low %v3784, %v3792
        %v3982 = vcombine.high %v3784, %v3792
        %v3984 = vunpack.c.l.s4 1983009808
        %v3985 = vunpack.c.0.s8 %v3984
        %v3986 = vlaneseq
        %v3987 = vshrl.u32 %v3986, 7
        %v3988 = vsub.s32 %v3985, %v3987
        %v3989 = vrot.slane %v3981, %v3988
        %v3991 = vunpack.c.l.s4 1983009808
        %v3992 = vunpack.c.0.s8 %v3991
        %v3993 = vlaneseq
        %v3994 = vshrl.u32 %v3993, 7
        %v3995 = vsub.s32 %v3992, %v3994
        %v3996 = vrot.slane %v3982, %v3995
        %v3997 = vcombine.low %v3788, %v3796
        %v3998 = vcombine.high %v3788, %v3796
        %v4000 = vunpack.c.l.s4 1983009808
        %v4001 = vunpack.c.0.s8 %v4000
        %v4002 = vlaneseq
        %v4003 = vshrl.u32 %v4002, 7
        %v4004 = vsub.s32 %v4001, %v4003
        %v4005 = vrot.slane %v3997, %v4004
        %v4007 = vunpack.c.l.s4 1983009808
        %v4008 = vunpack.c.0.s8 %v4007
        %v4009 = vlaneseq
        %v4010 = vshrl.u32 %v4009, 7
        %v4011 = vsub.s32 %v4008, %v4010
        %v4012 = vrot.slane %v3998, %v4011
        %v4013 = vcombine.low %v3957, %v3973
        %v4014 = vcombine.high %v3957, %v3973
        %v4016 = vunpack.c.l.s4 1934713408
        %v4017 = vunpack.c.0.s8 %v4016
        %v4018 = vlaneseq
        %v4019 = vshrl.u32 %v4018, 7
        %v4020 = vsub.s32 %v4017, %v4019
        %v4021 = vrot.slane %v4013, %v4020
        %v4023 = vunpack.c.l.s4 1934713408
        %v4024 = vunpack.c.0.s8 %v4023
        %v4025 = vlaneseq
        %v4026 = vshrl.u32 %v4025, 7
        %v4027 = vsub.s32 %v4024, %v4026
        %v4028 = vrot.slane %v4014, %v4027
        %v4029 = vcombine.low %v3964, %v3980
        %v4030 = vcombine.high %v3964, %v3980
        %v4032 = vunpack.c.l.s4 1934713408
        %v4033 = vunpack.c.0.s8 %v4032
        %v4034 = vlaneseq
        %v4035 = vshrl.u32 %v4034, 7
        %v4036 = vsub.s32 %v4033, %v4035
        %v4037 = vrot.slane %v4029, %v4036
        %v4039 = vunpack.c.l.s4 1934713408
        %v4040 = vunpack.c.0.s8 %v4039
        %v4041 = vlaneseq
        %v4042 = vshrl.u32 %v4041, 7
        %v4043 = vsub.s32 %v4040, %v4042
        %v4044 = vrot.slane %v4030, %v4043
        %v4045 = vcombine.low %v3989, %v4005
        %v4046 = vcombine.high %v3989, %v4005
        %v4048 = vunpack.c.l.s4 1934713408
        %v4049 = vunpack.c.0.s8 %v4048
        %v4050 = vlaneseq
        %v4051 = vshrl.u32 %v4050, 7
        %v4052 = vsub.s32 %v4049, %v4051
        %v4053 = vrot.slane %v4045, %v4052
        %v4055 = vunpack.c.l.s4 1934713408
        %v4056 = vunpack.c.0.s8 %v4055
        %v4057 = vlaneseq
        %v4058 = vshrl.u32 %v4057, 7
        %v4059 = vsub.s32 %v4056, %v4058
        %v4060 = vrot.slane %v4046, %v4059
        %v4061 = vcombine.low %v3996, %v4012
        %v4062 = vcombine.high %v3996, %v4012
        %v4064 = vunpack.c.l.s4 1934713408
        %v4065 = vunpack.c.0.s8 %v4064
        %v4066 = vlaneseq
        %v4067 = vshrl.u32 %v4066, 7
        %v4068 = vsub.s32 %v4065, %v4067
        %v4069 = vrot.slane %v4061, %v4068
        %v4071 = vunpack.c.l.s4 1934713408
        %v4072 = vunpack.c.0.s8 %v4071
        %v4073 = vlaneseq
        %v4074 = vshrl.u32 %v4073, 7
        %v4075 = vsub.s32 %v4072, %v4074
        %v4076 = vrot.slane %v4062, %v4075
        %v4077 = vcombine.low %v4021, %v4053
        %v4078 = vcombine.high %v4021, %v4053
        %v4079 = vcombine.low %v4028, %v4060
        %v4080 = vcombine.high %v4028, %v4060
        %v4081 = vcombine.low %v4037, %v4069
        %v4082 = vcombine.high %v4037, %v4069
        %v4083 = vcombine.low %v4044, %v4076
        %v4084 = vcombine.high %v4044, %v4076
        %4086 = vrot.lane.b32.xlu0 %v3942, 16
        %v4087 = vpop.permute.xlu0 %4086
        %4090 = vrot.lane.b32.xlu0 %v3943, 32
        %v4091 = vpop.permute.xlu0 %4090
        %4094 = vrot.lane.b32.xlu0 %v3944, 48
        %v4095 = vpop.permute.xlu0 %4094
        %4098 = vrot.lane.b32.xlu0 %v3945, 64
        %v4099 = vpop.permute.xlu0 %4098
        %4102 = vrot.lane.b32.xlu0 %v3946, 80
        %v4103 = vpop.permute.xlu0 %4102
        %4106 = vrot.lane.b32.xlu0 %v3947, 96
        %v4107 = vpop.permute.xlu0 %4106
        %4110 = vrot.lane.b32.xlu0 %v3948, 112
        %v4111 = vpop.permute.xlu0 %4110
        %4114 = vrot.lane.b32.xlu0 %v4078, 16
        %v4115 = vpop.permute.xlu0 %4114
        %4118 = vrot.lane.b32.xlu0 %v4079, 32
        %v4119 = vpop.permute.xlu0 %4118
        %4122 = vrot.lane.b32.xlu0 %v4080, 48
        %v4123 = vpop.permute.xlu0 %4122
        %4126 = vrot.lane.b32.xlu0 %v4081, 64
        %v4127 = vpop.permute.xlu0 %4126
        %4130 = vrot.lane.b32.xlu0 %v4082, 80
        %v4131 = vpop.permute.xlu0 %4130
        %4134 = vrot.lane.b32.xlu0 %v4083, 96
        %v4135 = vpop.permute.xlu0 %4134
        %4138 = vrot.lane.b32.xlu0 %v4084, 112
        %v4139 = vpop.permute.xlu0 %4138
        %v4141 = vsel %vm491, %v3941, %v4087
        %v4142 = vsel %vm2169, %v4141, %v4091
        %v4143 = vsel %vm2171, %v4142, %v4095
        %v4144 = vsel %vm2173, %v4143, %v4099
        %v4145 = vsel %vm2175, %v4144, %v4103
        %v4146 = vsel %vm2177, %v4145, %v4107
        %v4147 = vsel %vm2179, %v4146, %v4111
        %v4148 = vsel %vm491, %v4077, %v4115
        %v4149 = vsel %vm2169, %v4148, %v4119
        %v4150 = vsel %vm2171, %v4149, %v4123
        %v4151 = vsel %vm2173, %v4150, %v4127
        %v4152 = vsel %vm2175, %v4151, %v4131
        %v4153 = vsel %vm2177, %v4152, %v4135
        %v4154 = vsel %vm2179, %v4153, %v4139
        %vm4155 = vcmask 1045504
        %v4156 = vrot.slane %v1657, 2
        %v4157 = vrot.slane %v1635, 2
        %v4158 = vsel %vm4155, %v4156, %v4157
        %v4159 = vrot.slane %v1661, 2
        %v4160 = vsel %vm4155, %v4157, %v4159
        %v4161 = vrot.slane %v1658, 2
        %v4162 = vrot.slane %v1638, 2
        %v4163 = vsel %vm4155, %v4161, %v4162
        %v4164 = vrot.slane %v1662, 2
        %v4165 = vsel %vm4155, %v4162, %v4164
        %v4166 = vrot.slane %v1659, 2
        %v4167 = vrot.slane %v1641, 2
        %v4168 = vsel %vm4155, %v4166, %v4167
        %v4169 = vrot.slane %v1663, 2
        %v4170 = vsel %vm4155, %v4167, %v4169
        %v4171 = vrot.slane %v1660, 2
        %v4172 = vrot.slane %v1644, 2
        %v4173 = vsel %vm4155, %v4171, %v4172
        %v4174 = vrot.slane %v1664, 2
        %v4175 = vsel %vm4155, %v4172, %v4174
        %v4176 = vrot.slane %v1681, 2
        %v4177 = vrot.slane %v1698, 2
        %v4178 = vsel %vm4155, %v4176, %v4177
        %v4179 = vrot.slane %v1705, 2
        %v4180 = vsel %vm4155, %v4177, %v4179
        %v4181 = vrot.slane %v1722, 2
        %v4182 = vrot.slane %v1739, 2
        %v4183 = vsel %vm4155, %v4181, %v4182
        %v4184 = vrot.slane %v1746, 2
        %v4185 = vsel %vm4155, %v4182, %v4184
        %v4186 = vrot.slane %v1763, 2
        %v4187 = vrot.slane %v1780, 2
        %v4188 = vsel %vm4155, %v4186, %v4187
        %v4189 = vrot.slane %v1787, 2
        %v4190 = vsel %vm4155, %v4187, %v4189
        %v4191 = vrot.slane %v1804, 2
        %v4192 = vrot.slane %v1821, 2
        %v4193 = vsel %vm4155, %v4191, %v4192
        %v4194 = vrot.slane %v1828, 2
        %v4195 = vsel %vm4155, %v4192, %v4194
        %v4212 = vcombine.low %v4158, %v4168
        %v4213 = vcombine.high %v4158, %v4168
        %v4215 = vunpack.c.l.s4 1983009808
        %v4216 = vunpack.c.0.s8 %v4215
        %v4217 = vlaneseq
        %v4218 = vshrl.u32 %v4217, 7
        %v4219 = vsub.s32 %v4216, %v4218
        %v4220 = vrot.slane %v4212, %v4219
        %v4222 = vunpack.c.l.s4 1983009808
        %v4223 = vunpack.c.0.s8 %v4222
        %v4224 = vlaneseq
        %v4225 = vshrl.u32 %v4224, 7
        %v4226 = vsub.s32 %v4223, %v4225
        %v4227 = vrot.slane %v4213, %v4226
        %v4228 = vcombine.low %v4163, %v4173
        %v4229 = vcombine.high %v4163, %v4173
        %v4231 = vunpack.c.l.s4 1983009808
        %v4232 = vunpack.c.0.s8 %v4231
        %v4233 = vlaneseq
        %v4234 = vshrl.u32 %v4233, 7
        %v4235 = vsub.s32 %v4232, %v4234
        %v4236 = vrot.slane %v4228, %v4235
        %v4238 = vunpack.c.l.s4 1983009808
        %v4239 = vunpack.c.0.s8 %v4238
        %v4240 = vlaneseq
        %v4241 = vshrl.u32 %v4240, 7
        %v4242 = vsub.s32 %v4239, %v4241
        %v4243 = vrot.slane %v4229, %v4242
        %v4244 = vcombine.low %v4178, %v4188
        %v4245 = vcombine.high %v4178, %v4188
        %v4247 = vunpack.c.l.s4 1983009808
        %v4248 = vunpack.c.0.s8 %v4247
        %v4249 = vlaneseq
        %v4250 = vshrl.u32 %v4249, 7
        %v4251 = vsub.s32 %v4248, %v4250
        %v4252 = vrot.slane %v4244, %v4251
        %v4254 = vunpack.c.l.s4 1983009808
        %v4255 = vunpack.c.0.s8 %v4254
        %v4256 = vlaneseq
        %v4257 = vshrl.u32 %v4256, 7
        %v4258 = vsub.s32 %v4255, %v4257
        %v4259 = vrot.slane %v4245, %v4258
        %v4260 = vcombine.low %v4183, %v4193
        %v4261 = vcombine.high %v4183, %v4193
        %v4263 = vunpack.c.l.s4 1983009808
        %v4264 = vunpack.c.0.s8 %v4263
        %v4265 = vlaneseq
        %v4266 = vshrl.u32 %v4265, 7
        %v4267 = vsub.s32 %v4264, %v4266
        %v4268 = vrot.slane %v4260, %v4267
        %v4270 = vunpack.c.l.s4 1983009808
        %v4271 = vunpack.c.0.s8 %v4270
        %v4272 = vlaneseq
        %v4273 = vshrl.u32 %v4272, 7
        %v4274 = vsub.s32 %v4271, %v4273
        %v4275 = vrot.slane %v4261, %v4274
        %v4276 = vcombine.low %v4220, %v4236
        %v4277 = vcombine.high %v4220, %v4236
        %v4279 = vunpack.c.l.s4 1934713408
        %v4280 = vunpack.c.0.s8 %v4279
        %v4281 = vlaneseq
        %v4282 = vshrl.u32 %v4281, 7
        %v4283 = vsub.s32 %v4280, %v4282
        %v4284 = vrot.slane %v4276, %v4283
        %v4286 = vunpack.c.l.s4 1934713408
        %v4287 = vunpack.c.0.s8 %v4286
        %v4288 = vlaneseq
        %v4289 = vshrl.u32 %v4288, 7
        %v4290 = vsub.s32 %v4287, %v4289
        %v4291 = vrot.slane %v4277, %v4290
        %v4292 = vcombine.low %v4227, %v4243
        %v4293 = vcombine.high %v4227, %v4243
        %v4295 = vunpack.c.l.s4 1934713408
        %v4296 = vunpack.c.0.s8 %v4295
        %v4297 = vlaneseq
        %v4298 = vshrl.u32 %v4297, 7
        %v4299 = vsub.s32 %v4296, %v4298
        %v4300 = vrot.slane %v4292, %v4299
        %v4302 = vunpack.c.l.s4 1934713408
        %v4303 = vunpack.c.0.s8 %v4302
        %v4304 = vlaneseq
        %v4305 = vshrl.u32 %v4304, 7
        %v4306 = vsub.s32 %v4303, %v4305
        %v4307 = vrot.slane %v4293, %v4306
        %v4308 = vcombine.low %v4252, %v4268
        %v4309 = vcombine.high %v4252, %v4268
        %v4311 = vunpack.c.l.s4 1934713408
        %v4312 = vunpack.c.0.s8 %v4311
        %v4313 = vlaneseq
        %v4314 = vshrl.u32 %v4313, 7
        %v4315 = vsub.s32 %v4312, %v4314
        %v4316 = vrot.slane %v4308, %v4315
        %v4318 = vunpack.c.l.s4 1934713408
        %v4319 = vunpack.c.0.s8 %v4318
        %v4320 = vlaneseq
        %v4321 = vshrl.u32 %v4320, 7
        %v4322 = vsub.s32 %v4319, %v4321
        %v4323 = vrot.slane %v4309, %v4322
        %v4324 = vcombine.low %v4259, %v4275
        %v4325 = vcombine.high %v4259, %v4275
        %v4327 = vunpack.c.l.s4 1934713408
        %v4328 = vunpack.c.0.s8 %v4327
        %v4329 = vlaneseq
        %v4330 = vshrl.u32 %v4329, 7
        %v4331 = vsub.s32 %v4328, %v4330
        %v4332 = vrot.slane %v4324, %v4331
        %v4334 = vunpack.c.l.s4 1934713408
        %v4335 = vunpack.c.0.s8 %v4334
        %v4336 = vlaneseq
        %v4337 = vshrl.u32 %v4336, 7
        %v4338 = vsub.s32 %v4335, %v4337
        %v4339 = vrot.slane %v4325, %v4338
        %v4340 = vcombine.low %v4284, %v4316
        %v4341 = vcombine.high %v4284, %v4316
        %v4342 = vcombine.low %v4291, %v4323
        %v4343 = vcombine.high %v4291, %v4323
        %v4344 = vcombine.low %v4300, %v4332
        %v4345 = vcombine.high %v4300, %v4332
        %v4346 = vcombine.low %v4307, %v4339
        %v4347 = vcombine.high %v4307, %v4339
        %v4348 = vcombine.low %v4160, %v4170
        %v4349 = vcombine.high %v4160, %v4170
        %v4351 = vunpack.c.l.s4 1983009808
        %v4352 = vunpack.c.0.s8 %v4351
        %v4353 = vlaneseq
        %v4354 = vshrl.u32 %v4353, 7
        %v4355 = vsub.s32 %v4352, %v4354
        %v4356 = vrot.slane %v4348, %v4355
        %v4358 = vunpack.c.l.s4 1983009808
        %v4359 = vunpack.c.0.s8 %v4358
        %v4360 = vlaneseq
        %v4361 = vshrl.u32 %v4360, 7
        %v4362 = vsub.s32 %v4359, %v4361
        %v4363 = vrot.slane %v4349, %v4362
        %v4364 = vcombine.low %v4165, %v4175
        %v4365 = vcombine.high %v4165, %v4175
        %v4367 = vunpack.c.l.s4 1983009808
        %v4368 = vunpack.c.0.s8 %v4367
        %v4369 = vlaneseq
        %v4370 = vshrl.u32 %v4369, 7
        %v4371 = vsub.s32 %v4368, %v4370
        %v4372 = vrot.slane %v4364, %v4371
        %v4374 = vunpack.c.l.s4 1983009808
        %v4375 = vunpack.c.0.s8 %v4374
        %v4376 = vlaneseq
        %v4377 = vshrl.u32 %v4376, 7
        %v4378 = vsub.s32 %v4375, %v4377
        %v4379 = vrot.slane %v4365, %v4378
        %v4380 = vcombine.low %v4180, %v4190
        %v4381 = vcombine.high %v4180, %v4190
        %v4383 = vunpack.c.l.s4 1983009808
        %v4384 = vunpack.c.0.s8 %v4383
        %v4385 = vlaneseq
        %v4386 = vshrl.u32 %v4385, 7
        %v4387 = vsub.s32 %v4384, %v4386
        %v4388 = vrot.slane %v4380, %v4387
        %v4390 = vunpack.c.l.s4 1983009808
        %v4391 = vunpack.c.0.s8 %v4390
        %v4392 = vlaneseq
        %v4393 = vshrl.u32 %v4392, 7
        %v4394 = vsub.s32 %v4391, %v4393
        %v4395 = vrot.slane %v4381, %v4394
        %v4396 = vcombine.low %v4185, %v4195
        %v4397 = vcombine.high %v4185, %v4195
        %v4399 = vunpack.c.l.s4 1983009808
        %v4400 = vunpack.c.0.s8 %v4399
        %v4401 = vlaneseq
        %v4402 = vshrl.u32 %v4401, 7
        %v4403 = vsub.s32 %v4400, %v4402
        %v4404 = vrot.slane %v4396, %v4403
        %v4406 = vunpack.c.l.s4 1983009808
        %v4407 = vunpack.c.0.s8 %v4406
        %v4408 = vlaneseq
        %v4409 = vshrl.u32 %v4408, 7
        %v4410 = vsub.s32 %v4407, %v4409
        %v4411 = vrot.slane %v4397, %v4410
        %v4412 = vcombine.low %v4356, %v4372
        %v4413 = vcombine.high %v4356, %v4372
        %v4415 = vunpack.c.l.s4 1934713408
        %v4416 = vunpack.c.0.s8 %v4415
        %v4417 = vlaneseq
        %v4418 = vshrl.u32 %v4417, 7
        %v4419 = vsub.s32 %v4416, %v4418
        %v4420 = vrot.slane %v4412, %v4419
        %v4422 = vunpack.c.l.s4 1934713408
        %v4423 = vunpack.c.0.s8 %v4422
        %v4424 = vlaneseq
        %v4425 = vshrl.u32 %v4424, 7
        %v4426 = vsub.s32 %v4423, %v4425
        %v4427 = vrot.slane %v4413, %v4426
        %v4428 = vcombine.low %v4363, %v4379
        %v4429 = vcombine.high %v4363, %v4379
        %v4431 = vunpack.c.l.s4 1934713408
        %v4432 = vunpack.c.0.s8 %v4431
        %v4433 = vlaneseq
        %v4434 = vshrl.u32 %v4433, 7
        %v4435 = vsub.s32 %v4432, %v4434
        %v4436 = vrot.slane %v4428, %v4435
        %v4438 = vunpack.c.l.s4 1934713408
        %v4439 = vunpack.c.0.s8 %v4438
        %v4440 = vlaneseq
        %v4441 = vshrl.u32 %v4440, 7
        %v4442 = vsub.s32 %v4439, %v4441
        %v4443 = vrot.slane %v4429, %v4442
        %v4444 = vcombine.low %v4388, %v4404
        %v4445 = vcombine.high %v4388, %v4404
        %v4447 = vunpack.c.l.s4 1934713408
        %v4448 = vunpack.c.0.s8 %v4447
        %v4449 = vlaneseq
        %v4450 = vshrl.u32 %v4449, 7
        %v4451 = vsub.s32 %v4448, %v4450
        %v4452 = vrot.slane %v4444, %v4451
        %v4454 = vunpack.c.l.s4 1934713408
        %v4455 = vunpack.c.0.s8 %v4454
        %v4456 = vlaneseq
        %v4457 = vshrl.u32 %v4456, 7
        %v4458 = vsub.s32 %v4455, %v4457
        %v4459 = vrot.slane %v4445, %v4458
        %v4460 = vcombine.low %v4395, %v4411
        %v4461 = vcombine.high %v4395, %v4411
        %v4463 = vunpack.c.l.s4 1934713408
        %v4464 = vunpack.c.0.s8 %v4463
        %v4465 = vlaneseq
        %v4466 = vshrl.u32 %v4465, 7
        %v4467 = vsub.s32 %v4464, %v4466
        %v4468 = vrot.slane %v4460, %v4467
        %v4470 = vunpack.c.l.s4 1934713408
        %v4471 = vunpack.c.0.s8 %v4470
        %v4472 = vlaneseq
        %v4473 = vshrl.u32 %v4472, 7
        %v4474 = vsub.s32 %v4471, %v4473
        %v4475 = vrot.slane %v4461, %v4474
        %v4476 = vcombine.low %v4420, %v4452
        %v4477 = vcombine.high %v4420, %v4452
        %v4478 = vcombine.low %v4427, %v4459
        %v4479 = vcombine.high %v4427, %v4459
        %v4480 = vcombine.low %v4436, %v4468
        %v4481 = vcombine.high %v4436, %v4468
        %v4482 = vcombine.low %v4443, %v4475
        %v4483 = vcombine.high %v4443, %v4475
        %4485 = vrot.lane.b32.xlu0 %v4341, 16
        %v4486 = vpop.permute.xlu0 %4485
        %4489 = vrot.lane.b32.xlu0 %v4342, 32
        %v4490 = vpop.permute.xlu0 %4489
        %4493 = vrot.lane.b32.xlu0 %v4343, 48
        %v4494 = vpop.permute.xlu0 %4493
        %4497 = vrot.lane.b32.xlu0 %v4344, 64
        %v4498 = vpop.permute.xlu0 %4497
        %4501 = vrot.lane.b32.xlu0 %v4345, 80
        %v4502 = vpop.permute.xlu0 %4501
        %4505 = vrot.lane.b32.xlu0 %v4346, 96
        %v4506 = vpop.permute.xlu0 %4505
        %4509 = vrot.lane.b32.xlu0 %v4347, 112
        %v4510 = vpop.permute.xlu0 %4509
        %4513 = vrot.lane.b32.xlu0 %v4477, 16
        %v4514 = vpop.permute.xlu0 %4513
        %4517 = vrot.lane.b32.xlu0 %v4478, 32
        %v4518 = vpop.permute.xlu0 %4517
        %4521 = vrot.lane.b32.xlu0 %v4479, 48
        %v4522 = vpop.permute.xlu0 %4521
        %4525 = vrot.lane.b32.xlu0 %v4480, 64
        %v4526 = vpop.permute.xlu0 %4525
        %4529 = vrot.lane.b32.xlu0 %v4481, 80
        %v4530 = vpop.permute.xlu0 %4529
        %4533 = vrot.lane.b32.xlu0 %v4482, 96
        %v4534 = vpop.permute.xlu0 %4533
        %4537 = vrot.lane.b32.xlu0 %v4483, 112
        %v4538 = vpop.permute.xlu0 %4537
        %v4540 = vsel %vm491, %v4340, %v4486
        %v4541 = vsel %vm2169, %v4540, %v4490
        %v4542 = vsel %vm2171, %v4541, %v4494
        %v4543 = vsel %vm2173, %v4542, %v4498
        %v4544 = vsel %vm2175, %v4543, %v4502
        %v4545 = vsel %vm2177, %v4544, %v4506
        %v4546 = vsel %vm2179, %v4545, %v4510
        %v4547 = vsel %vm491, %v4476, %v4514
        %v4548 = vsel %vm2169, %v4547, %v4518
        %v4549 = vsel %vm2171, %v4548, %v4522
        %v4550 = vsel %vm2173, %v4549, %v4526
        %v4551 = vsel %vm2175, %v4550, %v4530
        %v4552 = vsel %vm2177, %v4551, %v4534
        %v4553 = vsel %vm2179, %v4552, %v4538
        %4554 = vrot.lane.b32.xlu0 %v4158, 127
        %v4555 = vpop.permute.xlu0 %4554
        %4556 = vrot.lane.b32.xlu0 %v4160, 127
        %v4557 = vpop.permute.xlu0 %4556
        %4558 = vrot.lane.b32.xlu0 %v4163, 127
        %v4559 = vpop.permute.xlu0 %4558
        %4560 = vrot.lane.b32.xlu0 %v4165, 127
        %v4561 = vpop.permute.xlu0 %4560
        %4562 = vrot.lane.b32.xlu0 %v4168, 127
        %v4563 = vpop.permute.xlu0 %4562
        %4564 = vrot.lane.b32.xlu0 %v4170, 127
        %v4565 = vpop.permute.xlu0 %4564
        %4566 = vrot.lane.b32.xlu0 %v4173, 127
        %v4567 = vpop.permute.xlu0 %4566
        %4568 = vrot.lane.b32.xlu0 %v4175, 127
        %v4569 = vpop.permute.xlu0 %4568
        %4570 = vrot.lane.b32.xlu0 %v4178, 127
        %v4571 = vpop.permute.xlu0 %4570
        %4572 = vrot.lane.b32.xlu0 %v4180, 127
        %v4573 = vpop.permute.xlu0 %4572
        %4574 = vrot.lane.b32.xlu0 %v4183, 127
        %v4575 = vpop.permute.xlu0 %4574
        %4576 = vrot.lane.b32.xlu0 %v4185, 127
        %v4577 = vpop.permute.xlu0 %4576
        %4578 = vrot.lane.b32.xlu0 %v4188, 127
        %v4579 = vpop.permute.xlu0 %4578
        %4580 = vrot.lane.b32.xlu0 %v4190, 127
        %v4581 = vpop.permute.xlu0 %4580
        %4582 = vrot.lane.b32.xlu0 %v4193, 127
        %v4583 = vpop.permute.xlu0 %4582
        %4584 = vrot.lane.b32.xlu0 %v4195, 127
        %v4585 = vpop.permute.xlu0 %4584
        %v4602 = vcombine.low %v4555, %v4563
        %v4603 = vcombine.high %v4555, %v4563
        %v4605 = vunpack.c.l.s4 1983009808
        %v4606 = vunpack.c.0.s8 %v4605
        %v4607 = vlaneseq
        %v4608 = vshrl.u32 %v4607, 7
        %v4609 = vsub.s32 %v4606, %v4608
        %v4610 = vrot.slane %v4602, %v4609
        %v4612 = vunpack.c.l.s4 1983009808
        %v4613 = vunpack.c.0.s8 %v4612
        %v4614 = vlaneseq
        %v4615 = vshrl.u32 %v4614, 7
        %v4616 = vsub.s32 %v4613, %v4615
        %v4617 = vrot.slane %v4603, %v4616
        %v4618 = vcombine.low %v4559, %v4567
        %v4619 = vcombine.high %v4559, %v4567
        %v4621 = vunpack.c.l.s4 1983009808
        %v4622 = vunpack.c.0.s8 %v4621
        %v4623 = vlaneseq
        %v4624 = vshrl.u32 %v4623, 7
        %v4625 = vsub.s32 %v4622, %v4624
        %v4626 = vrot.slane %v4618, %v4625
        %v4628 = vunpack.c.l.s4 1983009808
        %v4629 = vunpack.c.0.s8 %v4628
        %v4630 = vlaneseq
        %v4631 = vshrl.u32 %v4630, 7
        %v4632 = vsub.s32 %v4629, %v4631
        %v4633 = vrot.slane %v4619, %v4632
        %v4634 = vcombine.low %v4571, %v4579
        %v4635 = vcombine.high %v4571, %v4579
        %v4637 = vunpack.c.l.s4 1983009808
        %v4638 = vunpack.c.0.s8 %v4637
        %v4639 = vlaneseq
        %v4640 = vshrl.u32 %v4639, 7
        %v4641 = vsub.s32 %v4638, %v4640
        %v4642 = vrot.slane %v4634, %v4641
        %v4644 = vunpack.c.l.s4 1983009808
        %v4645 = vunpack.c.0.s8 %v4644
        %v4646 = vlaneseq
        %v4647 = vshrl.u32 %v4646, 7
        %v4648 = vsub.s32 %v4645, %v4647
        %v4649 = vrot.slane %v4635, %v4648
        %v4650 = vcombine.low %v4575, %v4583
        %v4651 = vcombine.high %v4575, %v4583
        %v4653 = vunpack.c.l.s4 1983009808
        %v4654 = vunpack.c.0.s8 %v4653
        %v4655 = vlaneseq
        %v4656 = vshrl.u32 %v4655, 7
        %v4657 = vsub.s32 %v4654, %v4656
        %v4658 = vrot.slane %v4650, %v4657
        %v4660 = vunpack.c.l.s4 1983009808
        %v4661 = vunpack.c.0.s8 %v4660
        %v4662 = vlaneseq
        %v4663 = vshrl.u32 %v4662, 7
        %v4664 = vsub.s32 %v4661, %v4663
        %v4665 = vrot.slane %v4651, %v4664
        %v4666 = vcombine.low %v4610, %v4626
        %v4667 = vcombine.high %v4610, %v4626
        %v4669 = vunpack.c.l.s4 1934713408
        %v4670 = vunpack.c.0.s8 %v4669
        %v4671 = vlaneseq
        %v4672 = vshrl.u32 %v4671, 7
        %v4673 = vsub.s32 %v4670, %v4672
        %v4674 = vrot.slane %v4666, %v4673
        %v4676 = vunpack.c.l.s4 1934713408
        %v4677 = vunpack.c.0.s8 %v4676
        %v4678 = vlaneseq
        %v4679 = vshrl.u32 %v4678, 7
        %v4680 = vsub.s32 %v4677, %v4679
        %v4681 = vrot.slane %v4667, %v4680
        %v4682 = vcombine.low %v4617, %v4633
        %v4683 = vcombine.high %v4617, %v4633
        %v4685 = vunpack.c.l.s4 1934713408
        %v4686 = vunpack.c.0.s8 %v4685
        %v4687 = vlaneseq
        %v4688 = vshrl.u32 %v4687, 7
        %v4689 = vsub.s32 %v4686, %v4688
        %v4690 = vrot.slane %v4682, %v4689
        %v4692 = vunpack.c.l.s4 1934713408
        %v4693 = vunpack.c.0.s8 %v4692
        %v4694 = vlaneseq
        %v4695 = vshrl.u32 %v4694, 7
        %v4696 = vsub.s32 %v4693, %v4695
        %v4697 = vrot.slane %v4683, %v4696
        %v4698 = vcombine.low %v4642, %v4658
        %v4699 = vcombine.high %v4642, %v4658
        %v4701 = vunpack.c.l.s4 1934713408
        %v4702 = vunpack.c.0.s8 %v4701
        %v4703 = vlaneseq
        %v4704 = vshrl.u32 %v4703, 7
        %v4705 = vsub.s32 %v4702, %v4704
        %v4706 = vrot.slane %v4698, %v4705
        %v4708 = vunpack.c.l.s4 1934713408
        %v4709 = vunpack.c.0.s8 %v4708
        %v4710 = vlaneseq
        %v4711 = vshrl.u32 %v4710, 7
        %v4712 = vsub.s32 %v4709, %v4711
        %v4713 = vrot.slane %v4699, %v4712
        %v4714 = vcombine.low %v4649, %v4665
        %v4715 = vcombine.high %v4649, %v4665
        %v4717 = vunpack.c.l.s4 1934713408
        %v4718 = vunpack.c.0.s8 %v4717
        %v4719 = vlaneseq
        %v4720 = vshrl.u32 %v4719, 7
        %v4721 = vsub.s32 %v4718, %v4720
        %v4722 = vrot.slane %v4714, %v4721
        %v4724 = vunpack.c.l.s4 1934713408
        %v4725 = vunpack.c.0.s8 %v4724
        %v4726 = vlaneseq
        %v4727 = vshrl.u32 %v4726, 7
        %v4728 = vsub.s32 %v4725, %v4727
        %v4729 = vrot.slane %v4715, %v4728
        %v4730 = vcombine.low %v4674, %v4706
        %v4731 = vcombine.high %v4674, %v4706
        %v4732 = vcombine.low %v4681, %v4713
        %v4733 = vcombine.high %v4681, %v4713
        %v4734 = vcombine.low %v4690, %v4722
        %v4735 = vcombine.high %v4690, %v4722
        %v4736 = vcombine.low %v4697, %v4729
        %v4737 = vcombine.high %v4697, %v4729
        %v4738 = vcombine.low %v4557, %v4565
        %v4739 = vcombine.high %v4557, %v4565
        %v4741 = vunpack.c.l.s4 1983009808
        %v4742 = vunpack.c.0.s8 %v4741
        %v4743 = vlaneseq
        %v4744 = vshrl.u32 %v4743, 7
        %v4745 = vsub.s32 %v4742, %v4744
        %v4746 = vrot.slane %v4738, %v4745
        %v4748 = vunpack.c.l.s4 1983009808
        %v4749 = vunpack.c.0.s8 %v4748
        %v4750 = vlaneseq
        %v4751 = vshrl.u32 %v4750, 7
        %v4752 = vsub.s32 %v4749, %v4751
        %v4753 = vrot.slane %v4739, %v4752
        %v4754 = vcombine.low %v4561, %v4569
        %v4755 = vcombine.high %v4561, %v4569
        %v4757 = vunpack.c.l.s4 1983009808
        %v4758 = vunpack.c.0.s8 %v4757
        %v4759 = vlaneseq
        %v4760 = vshrl.u32 %v4759, 7
        %v4761 = vsub.s32 %v4758, %v4760
        %v4762 = vrot.slane %v4754, %v4761
        %v4764 = vunpack.c.l.s4 1983009808
        %v4765 = vunpack.c.0.s8 %v4764
        %v4766 = vlaneseq
        %v4767 = vshrl.u32 %v4766, 7
        %v4768 = vsub.s32 %v4765, %v4767
        %v4769 = vrot.slane %v4755, %v4768
        %v4770 = vcombine.low %v4573, %v4581
        %v4771 = vcombine.high %v4573, %v4581
        %v4773 = vunpack.c.l.s4 1983009808
        %v4774 = vunpack.c.0.s8 %v4773
        %v4775 = vlaneseq
        %v4776 = vshrl.u32 %v4775, 7
        %v4777 = vsub.s32 %v4774, %v4776
        %v4778 = vrot.slane %v4770, %v4777
        %v4780 = vunpack.c.l.s4 1983009808
        %v4781 = vunpack.c.0.s8 %v4780
        %v4782 = vlaneseq
        %v4783 = vshrl.u32 %v4782, 7
        %v4784 = vsub.s32 %v4781, %v4783
        %v4785 = vrot.slane %v4771, %v4784
        %v4786 = vcombine.low %v4577, %v4585
        %v4787 = vcombine.high %v4577, %v4585
        %v4789 = vunpack.c.l.s4 1983009808
        %v4790 = vunpack.c.0.s8 %v4789
        %v4791 = vlaneseq
        %v4792 = vshrl.u32 %v4791, 7
        %v4793 = vsub.s32 %v4790, %v4792
        %v4794 = vrot.slane %v4786, %v4793
        %v4796 = vunpack.c.l.s4 1983009808
        %v4797 = vunpack.c.0.s8 %v4796
        %v4798 = vlaneseq
        %v4799 = vshrl.u32 %v4798, 7
        %v4800 = vsub.s32 %v4797, %v4799
        %v4801 = vrot.slane %v4787, %v4800
        %v4802 = vcombine.low %v4746, %v4762
        %v4803 = vcombine.high %v4746, %v4762
        %v4805 = vunpack.c.l.s4 1934713408
        %v4806 = vunpack.c.0.s8 %v4805
        %v4807 = vlaneseq
        %v4808 = vshrl.u32 %v4807, 7
        %v4809 = vsub.s32 %v4806, %v4808
        %v4810 = vrot.slane %v4802, %v4809
        %v4812 = vunpack.c.l.s4 1934713408
        %v4813 = vunpack.c.0.s8 %v4812
        %v4814 = vlaneseq
        %v4815 = vshrl.u32 %v4814, 7
        %v4816 = vsub.s32 %v4813, %v4815
        %v4817 = vrot.slane %v4803, %v4816
        %v4818 = vcombine.low %v4753, %v4769
        %v4819 = vcombine.high %v4753, %v4769
        %v4821 = vunpack.c.l.s4 1934713408
        %v4822 = vunpack.c.0.s8 %v4821
        %v4823 = vlaneseq
        %v4824 = vshrl.u32 %v4823, 7
        %v4825 = vsub.s32 %v4822, %v4824
        %v4826 = vrot.slane %v4818, %v4825
        %v4828 = vunpack.c.l.s4 1934713408
        %v4829 = vunpack.c.0.s8 %v4828
        %v4830 = vlaneseq
        %v4831 = vshrl.u32 %v4830, 7
        %v4832 = vsub.s32 %v4829, %v4831
        %v4833 = vrot.slane %v4819, %v4832
        %v4834 = vcombine.low %v4778, %v4794
        %v4835 = vcombine.high %v4778, %v4794
        %v4837 = vunpack.c.l.s4 1934713408
        %v4838 = vunpack.c.0.s8 %v4837
        %v4839 = vlaneseq
        %v4840 = vshrl.u32 %v4839, 7
        %v4841 = vsub.s32 %v4838, %v4840
        %v4842 = vrot.slane %v4834, %v4841
        %v4844 = vunpack.c.l.s4 1934713408
        %v4845 = vunpack.c.0.s8 %v4844
        %v4846 = vlaneseq
        %v4847 = vshrl.u32 %v4846, 7
        %v4848 = vsub.s32 %v4845, %v4847
        %v4849 = vrot.slane %v4835, %v4848
        %v4850 = vcombine.low %v4785, %v4801
        %v4851 = vcombine.high %v4785, %v4801
        %v4853 = vunpack.c.l.s4 1934713408
        %v4854 = vunpack.c.0.s8 %v4853
        %v4855 = vlaneseq
        %v4856 = vshrl.u32 %v4855, 7
        %v4857 = vsub.s32 %v4854, %v4856
        %v4858 = vrot.slane %v4850, %v4857
        %v4860 = vunpack.c.l.s4 1934713408
        %v4861 = vunpack.c.0.s8 %v4860
        %v4862 = vlaneseq
        %v4863 = vshrl.u32 %v4862, 7
        %v4864 = vsub.s32 %v4861, %v4863
        %v4865 = vrot.slane %v4851, %v4864
        %v4866 = vcombine.low %v4810, %v4842
        %v4867 = vcombine.high %v4810, %v4842
        %v4868 = vcombine.low %v4817, %v4849
        %v4869 = vcombine.high %v4817, %v4849
        %v4870 = vcombine.low %v4826, %v4858
        %v4871 = vcombine.high %v4826, %v4858
        %v4872 = vcombine.low %v4833, %v4865
        %v4873 = vcombine.high %v4833, %v4865
        %4875 = vrot.lane.b32.xlu0 %v4731, 16
        %v4876 = vpop.permute.xlu0 %4875
        %4879 = vrot.lane.b32.xlu0 %v4732, 32
        %v4880 = vpop.permute.xlu0 %4879
        %4883 = vrot.lane.b32.xlu0 %v4733, 48
        %v4884 = vpop.permute.xlu0 %4883
        %4887 = vrot.lane.b32.xlu0 %v4734, 64
        %v4888 = vpop.permute.xlu0 %4887
        %4891 = vrot.lane.b32.xlu0 %v4735, 80
        %v4892 = vpop.permute.xlu0 %4891
        %4895 = vrot.lane.b32.xlu0 %v4736, 96
        %v4896 = vpop.permute.xlu0 %4895
        %4899 = vrot.lane.b32.xlu0 %v4737, 112
        %v4900 = vpop.permute.xlu0 %4899
        %4903 = vrot.lane.b32.xlu0 %v4867, 16
        %v4904 = vpop.permute.xlu0 %4903
        %4907 = vrot.lane.b32.xlu0 %v4868, 32
        %v4908 = vpop.permute.xlu0 %4907
        %4911 = vrot.lane.b32.xlu0 %v4869, 48
        %v4912 = vpop.permute.xlu0 %4911
        %4915 = vrot.lane.b32.xlu0 %v4870, 64
        %v4916 = vpop.permute.xlu0 %4915
        %4919 = vrot.lane.b32.xlu0 %v4871, 80
        %v4920 = vpop.permute.xlu0 %4919
        %4923 = vrot.lane.b32.xlu0 %v4872, 96
        %v4924 = vpop.permute.xlu0 %4923
        %4927 = vrot.lane.b32.xlu0 %v4873, 112
        %v4928 = vpop.permute.xlu0 %4927
        %v4930 = vsel %vm491, %v4730, %v4876
        %v4931 = vsel %vm2169, %v4930, %v4880
        %v4932 = vsel %vm2171, %v4931, %v4884
        %v4933 = vsel %vm2173, %v4932, %v4888
        %v4934 = vsel %vm2175, %v4933, %v4892
        %v4935 = vsel %vm2177, %v4934, %v4896
        %v4936 = vsel %vm2179, %v4935, %v4900
        %v4937 = vsel %vm491, %v4866, %v4904
        %v4938 = vsel %vm2169, %v4937, %v4908
        %v4939 = vsel %vm2171, %v4938, %v4912
        %v4940 = vsel %vm2173, %v4939, %v4916
        %v4941 = vsel %vm2175, %v4940, %v4920
        %v4942 = vsel %vm2177, %v4941, %v4924
        %v4943 = vsel %vm2179, %v4942, %v4928
        %4944 = vrot.lane.b32.xlu0 %v4158, 126
        %v4945 = vpop.permute.xlu0 %4944
        %4946 = vrot.lane.b32.xlu0 %v4160, 126
        %v4947 = vpop.permute.xlu0 %4946
        %4948 = vrot.lane.b32.xlu0 %v4163, 126
        %v4949 = vpop.permute.xlu0 %4948
        %4950 = vrot.lane.b32.xlu0 %v4165, 126
        %v4951 = vpop.permute.xlu0 %4950
        %4952 = vrot.lane.b32.xlu0 %v4168, 126
        %v4953 = vpop.permute.xlu0 %4952
        %4954 = vrot.lane.b32.xlu0 %v4170, 126
        %v4955 = vpop.permute.xlu0 %4954
        %4956 = vrot.lane.b32.xlu0 %v4173, 126
        %v4957 = vpop.permute.xlu0 %4956
        %4958 = vrot.lane.b32.xlu0 %v4175, 126
        %v4959 = vpop.permute.xlu0 %4958
        %4960 = vrot.lane.b32.xlu0 %v4178, 126
        %v4961 = vpop.permute.xlu0 %4960
        %4962 = vrot.lane.b32.xlu0 %v4180, 126
        %v4963 = vpop.permute.xlu0 %4962
        %4964 = vrot.lane.b32.xlu0 %v4183, 126
        %v4965 = vpop.permute.xlu0 %4964
        %4966 = vrot.lane.b32.xlu0 %v4185, 126
        %v4967 = vpop.permute.xlu0 %4966
        %4968 = vrot.lane.b32.xlu0 %v4188, 126
        %v4969 = vpop.permute.xlu0 %4968
        %4970 = vrot.lane.b32.xlu0 %v4190, 126
        %v4971 = vpop.permute.xlu0 %4970
        %4972 = vrot.lane.b32.xlu0 %v4193, 126
        %v4973 = vpop.permute.xlu0 %4972
        %4974 = vrot.lane.b32.xlu0 %v4195, 126
        %v4975 = vpop.permute.xlu0 %4974
        %v4992 = vcombine.low %v4945, %v4953
        %v4993 = vcombine.high %v4945, %v4953
        %v4995 = vunpack.c.l.s4 1983009808
        %v4996 = vunpack.c.0.s8 %v4995
        %v4997 = vlaneseq
        %v4998 = vshrl.u32 %v4997, 7
        %v4999 = vsub.s32 %v4996, %v4998
        %v5000 = vrot.slane %v4992, %v4999
        %v5002 = vunpack.c.l.s4 1983009808
        %v5003 = vunpack.c.0.s8 %v5002
        %v5004 = vlaneseq
        %v5005 = vshrl.u32 %v5004, 7
        %v5006 = vsub.s32 %v5003, %v5005
        %v5007 = vrot.slane %v4993, %v5006
        %v5008 = vcombine.low %v4949, %v4957
        %v5009 = vcombine.high %v4949, %v4957
        %v5011 = vunpack.c.l.s4 1983009808
        %v5012 = vunpack.c.0.s8 %v5011
        %v5013 = vlaneseq
        %v5014 = vshrl.u32 %v5013, 7
        %v5015 = vsub.s32 %v5012, %v5014
        %v5016 = vrot.slane %v5008, %v5015
        %v5018 = vunpack.c.l.s4 1983009808
        %v5019 = vunpack.c.0.s8 %v5018
        %v5020 = vlaneseq
        %v5021 = vshrl.u32 %v5020, 7
        %v5022 = vsub.s32 %v5019, %v5021
        %v5023 = vrot.slane %v5009, %v5022
        %v5024 = vcombine.low %v4961, %v4969
        %v5025 = vcombine.high %v4961, %v4969
        %v5027 = vunpack.c.l.s4 1983009808
        %v5028 = vunpack.c.0.s8 %v5027
        %v5029 = vlaneseq
        %v5030 = vshrl.u32 %v5029, 7
        %v5031 = vsub.s32 %v5028, %v5030
        %v5032 = vrot.slane %v5024, %v5031
        %v5034 = vunpack.c.l.s4 1983009808
        %v5035 = vunpack.c.0.s8 %v5034
        %v5036 = vlaneseq
        %v5037 = vshrl.u32 %v5036, 7
        %v5038 = vsub.s32 %v5035, %v5037
        %v5039 = vrot.slane %v5025, %v5038
        %v5040 = vcombine.low %v4965, %v4973
        %v5041 = vcombine.high %v4965, %v4973
        %v5043 = vunpack.c.l.s4 1983009808
        %v5044 = vunpack.c.0.s8 %v5043
        %v5045 = vlaneseq
        %v5046 = vshrl.u32 %v5045, 7
        %v5047 = vsub.s32 %v5044, %v5046
        %v5048 = vrot.slane %v5040, %v5047
        %v5050 = vunpack.c.l.s4 1983009808
        %v5051 = vunpack.c.0.s8 %v5050
        %v5052 = vlaneseq
        %v5053 = vshrl.u32 %v5052, 7
        %v5054 = vsub.s32 %v5051, %v5053
        %v5055 = vrot.slane %v5041, %v5054
        %v5056 = vcombine.low %v5000, %v5016
        %v5057 = vcombine.high %v5000, %v5016
        %v5059 = vunpack.c.l.s4 1934713408
        %v5060 = vunpack.c.0.s8 %v5059
        %v5061 = vlaneseq
        %v5062 = vshrl.u32 %v5061, 7
        %v5063 = vsub.s32 %v5060, %v5062
        %v5064 = vrot.slane %v5056, %v5063
        %v5066 = vunpack.c.l.s4 1934713408
        %v5067 = vunpack.c.0.s8 %v5066
        %v5068 = vlaneseq
        %v5069 = vshrl.u32 %v5068, 7
        %v5070 = vsub.s32 %v5067, %v5069
        %v5071 = vrot.slane %v5057, %v5070
        %v5072 = vcombine.low %v5007, %v5023
        %v5073 = vcombine.high %v5007, %v5023
        %v5075 = vunpack.c.l.s4 1934713408
        %v5076 = vunpack.c.0.s8 %v5075
        %v5077 = vlaneseq
        %v5078 = vshrl.u32 %v5077, 7
        %v5079 = vsub.s32 %v5076, %v5078
        %v5080 = vrot.slane %v5072, %v5079
        %v5082 = vunpack.c.l.s4 1934713408
        %v5083 = vunpack.c.0.s8 %v5082
        %v5084 = vlaneseq
        %v5085 = vshrl.u32 %v5084, 7
        %v5086 = vsub.s32 %v5083, %v5085
        %v5087 = vrot.slane %v5073, %v5086
        %v5088 = vcombine.low %v5032, %v5048
        %v5089 = vcombine.high %v5032, %v5048
        %v5091 = vunpack.c.l.s4 1934713408
        %v5092 = vunpack.c.0.s8 %v5091
        %v5093 = vlaneseq
        %v5094 = vshrl.u32 %v5093, 7
        %v5095 = vsub.s32 %v5092, %v5094
        %v5096 = vrot.slane %v5088, %v5095
        %v5098 = vunpack.c.l.s4 1934713408
        %v5099 = vunpack.c.0.s8 %v5098
        %v5100 = vlaneseq
        %v5101 = vshrl.u32 %v5100, 7
        %v5102 = vsub.s32 %v5099, %v5101
        %v5103 = vrot.slane %v5089, %v5102
        %v5104 = vcombine.low %v5039, %v5055
        %v5105 = vcombine.high %v5039, %v5055
        %v5107 = vunpack.c.l.s4 1934713408
        %v5108 = vunpack.c.0.s8 %v5107
        %v5109 = vlaneseq
        %v5110 = vshrl.u32 %v5109, 7
        %v5111 = vsub.s32 %v5108, %v5110
        %v5112 = vrot.slane %v5104, %v5111
        %v5114 = vunpack.c.l.s4 1934713408
        %v5115 = vunpack.c.0.s8 %v5114
        %v5116 = vlaneseq
        %v5117 = vshrl.u32 %v5116, 7
        %v5118 = vsub.s32 %v5115, %v5117
        %v5119 = vrot.slane %v5105, %v5118
        %v5120 = vcombine.low %v5064, %v5096
        %v5121 = vcombine.high %v5064, %v5096
        %v5122 = vcombine.low %v5071, %v5103
        %v5123 = vcombine.high %v5071, %v5103
        %v5124 = vcombine.low %v5080, %v5112
        %v5125 = vcombine.high %v5080, %v5112
        %v5126 = vcombine.low %v5087, %v5119
        %v5127 = vcombine.high %v5087, %v5119
        %v5128 = vcombine.low %v4947, %v4955
        %v5129 = vcombine.high %v4947, %v4955
        %v5131 = vunpack.c.l.s4 1983009808
        %v5132 = vunpack.c.0.s8 %v5131
        %v5133 = vlaneseq
        %v5134 = vshrl.u32 %v5133, 7
        %v5135 = vsub.s32 %v5132, %v5134
        %v5136 = vrot.slane %v5128, %v5135
        %v5138 = vunpack.c.l.s4 1983009808
        %v5139 = vunpack.c.0.s8 %v5138
        %v5140 = vlaneseq
        %v5141 = vshrl.u32 %v5140, 7
        %v5142 = vsub.s32 %v5139, %v5141
        %v5143 = vrot.slane %v5129, %v5142
        %v5144 = vcombine.low %v4951, %v4959
        %v5145 = vcombine.high %v4951, %v4959
        %v5147 = vunpack.c.l.s4 1983009808
        %v5148 = vunpack.c.0.s8 %v5147
        %v5149 = vlaneseq
        %v5150 = vshrl.u32 %v5149, 7
        %v5151 = vsub.s32 %v5148, %v5150
        %v5152 = vrot.slane %v5144, %v5151
        %v5154 = vunpack.c.l.s4 1983009808
        %v5155 = vunpack.c.0.s8 %v5154
        %v5156 = vlaneseq
        %v5157 = vshrl.u32 %v5156, 7
        %v5158 = vsub.s32 %v5155, %v5157
        %v5159 = vrot.slane %v5145, %v5158
        %v5160 = vcombine.low %v4963, %v4971
        %v5161 = vcombine.high %v4963, %v4971
        %v5163 = vunpack.c.l.s4 1983009808
        %v5164 = vunpack.c.0.s8 %v5163
        %v5165 = vlaneseq
        %v5166 = vshrl.u32 %v5165, 7
        %v5167 = vsub.s32 %v5164, %v5166
        %v5168 = vrot.slane %v5160, %v5167
        %v5170 = vunpack.c.l.s4 1983009808
        %v5171 = vunpack.c.0.s8 %v5170
        %v5172 = vlaneseq
        %v5173 = vshrl.u32 %v5172, 7
        %v5174 = vsub.s32 %v5171, %v5173
        %v5175 = vrot.slane %v5161, %v5174
        %v5176 = vcombine.low %v4967, %v4975
        %v5177 = vcombine.high %v4967, %v4975
        %v5179 = vunpack.c.l.s4 1983009808
        %v5180 = vunpack.c.0.s8 %v5179
        %v5181 = vlaneseq
        %v5182 = vshrl.u32 %v5181, 7
        %v5183 = vsub.s32 %v5180, %v5182
        %v5184 = vrot.slane %v5176, %v5183
        %v5186 = vunpack.c.l.s4 1983009808
        %v5187 = vunpack.c.0.s8 %v5186
        %v5188 = vlaneseq
        %v5189 = vshrl.u32 %v5188, 7
        %v5190 = vsub.s32 %v5187, %v5189
        %v5191 = vrot.slane %v5177, %v5190
        %v5192 = vcombine.low %v5136, %v5152
        %v5193 = vcombine.high %v5136, %v5152
        %v5195 = vunpack.c.l.s4 1934713408
        %v5196 = vunpack.c.0.s8 %v5195
        %v5197 = vlaneseq
        %v5198 = vshrl.u32 %v5197, 7
        %v5199 = vsub.s32 %v5196, %v5198
        %v5200 = vrot.slane %v5192, %v5199
        %v5202 = vunpack.c.l.s4 1934713408
        %v5203 = vunpack.c.0.s8 %v5202
        %v5204 = vlaneseq
        %v5205 = vshrl.u32 %v5204, 7
        %v5206 = vsub.s32 %v5203, %v5205
        %v5207 = vrot.slane %v5193, %v5206
        %v5208 = vcombine.low %v5143, %v5159
        %v5209 = vcombine.high %v5143, %v5159
        %v5211 = vunpack.c.l.s4 1934713408
        %v5212 = vunpack.c.0.s8 %v5211
        %v5213 = vlaneseq
        %v5214 = vshrl.u32 %v5213, 7
        %v5215 = vsub.s32 %v5212, %v5214
        %v5216 = vrot.slane %v5208, %v5215
        %v5218 = vunpack.c.l.s4 1934713408
        %v5219 = vunpack.c.0.s8 %v5218
        %v5220 = vlaneseq
        %v5221 = vshrl.u32 %v5220, 7
        %v5222 = vsub.s32 %v5219, %v5221
        %v5223 = vrot.slane %v5209, %v5222
        %v5224 = vcombine.low %v5168, %v5184
        %v5225 = vcombine.high %v5168, %v5184
        %v5227 = vunpack.c.l.s4 1934713408
        %v5228 = vunpack.c.0.s8 %v5227
        %v5229 = vlaneseq
        %v5230 = vshrl.u32 %v5229, 7
        %v5231 = vsub.s32 %v5228, %v5230
        %v5232 = vrot.slane %v5224, %v5231
        %v5234 = vunpack.c.l.s4 1934713408
        %v5235 = vunpack.c.0.s8 %v5234
        %v5236 = vlaneseq
        %v5237 = vshrl.u32 %v5236, 7
        %v5238 = vsub.s32 %v5235, %v5237
        %v5239 = vrot.slane %v5225, %v5238
        %v5240 = vcombine.low %v5175, %v5191
        %v5241 = vcombine.high %v5175, %v5191
        %v5243 = vunpack.c.l.s4 1934713408
        %v5244 = vunpack.c.0.s8 %v5243
        %v5245 = vlaneseq
        %v5246 = vshrl.u32 %v5245, 7
        %v5247 = vsub.s32 %v5244, %v5246
        %v5248 = vrot.slane %v5240, %v5247
        %v5250 = vunpack.c.l.s4 1934713408
        %v5251 = vunpack.c.0.s8 %v5250
        %v5252 = vlaneseq
        %v5253 = vshrl.u32 %v5252, 7
        %v5254 = vsub.s32 %v5251, %v5253
        %v5255 = vrot.slane %v5241, %v5254
        %v5256 = vcombine.low %v5200, %v5232
        %v5257 = vcombine.high %v5200, %v5232
        %v5258 = vcombine.low %v5207, %v5239
        %v5259 = vcombine.high %v5207, %v5239
        %v5260 = vcombine.low %v5216, %v5248
        %v5261 = vcombine.high %v5216, %v5248
        %v5262 = vcombine.low %v5223, %v5255
        %v5263 = vcombine.high %v5223, %v5255
        %5265 = vrot.lane.b32.xlu0 %v5121, 16
        %v5266 = vpop.permute.xlu0 %5265
        %5269 = vrot.lane.b32.xlu0 %v5122, 32
        %v5270 = vpop.permute.xlu0 %5269
        %5273 = vrot.lane.b32.xlu0 %v5123, 48
        %v5274 = vpop.permute.xlu0 %5273
        %5277 = vrot.lane.b32.xlu0 %v5124, 64
        %v5278 = vpop.permute.xlu0 %5277
        %5281 = vrot.lane.b32.xlu0 %v5125, 80
        %v5282 = vpop.permute.xlu0 %5281
        %5285 = vrot.lane.b32.xlu0 %v5126, 96
        %v5286 = vpop.permute.xlu0 %5285
        %5289 = vrot.lane.b32.xlu0 %v5127, 112
        %v5290 = vpop.permute.xlu0 %5289
        %5293 = vrot.lane.b32.xlu0 %v5257, 16
        %v5294 = vpop.permute.xlu0 %5293
        %5297 = vrot.lane.b32.xlu0 %v5258, 32
        %v5298 = vpop.permute.xlu0 %5297
        %5301 = vrot.lane.b32.xlu0 %v5259, 48
        %v5302 = vpop.permute.xlu0 %5301
        %5305 = vrot.lane.b32.xlu0 %v5260, 64
        %v5306 = vpop.permute.xlu0 %5305
        %5309 = vrot.lane.b32.xlu0 %v5261, 80
        %v5310 = vpop.permute.xlu0 %5309
        %5313 = vrot.lane.b32.xlu0 %v5262, 96
        %v5314 = vpop.permute.xlu0 %5313
        %5317 = vrot.lane.b32.xlu0 %v5263, 112
        %v5318 = vpop.permute.xlu0 %5317
        %v5320 = vsel %vm491, %v5120, %v5266
        %v5321 = vsel %vm2169, %v5320, %v5270
        %v5322 = vsel %vm2171, %v5321, %v5274
        %v5323 = vsel %vm2173, %v5322, %v5278
        %v5324 = vsel %vm2175, %v5323, %v5282
        %v5325 = vsel %vm2177, %v5324, %v5286
        %v5326 = vsel %vm2179, %v5325, %v5290
        %v5327 = vsel %vm491, %v5256, %v5294
        %v5328 = vsel %vm2169, %v5327, %v5298
        %v5329 = vsel %vm2171, %v5328, %v5302
        %v5330 = vsel %vm2173, %v5329, %v5306
        %v5331 = vsel %vm2175, %v5330, %v5310
        %v5332 = vsel %vm2177, %v5331, %v5314
        %v5333 = vsel %vm2179, %v5332, %v5318
        %vm5334 = vcmask 588800
        %v5336 = vsel %vm5334, %v1837, 0
        %5338 = vmatprep.subr.mxu0 %v2187
        %5339 = vmatpush1.msra.mxu0 %v2180
        %5340 = vmatprep.subr.mxu0 %v2581
        %5341 = vmatpush1.msra.mxu0 %v2574
        %5342 = vmatprep.subr.mxu0 %v2971
        %5343 = vmatpush1.msra.mxu0 %v2964
        %5344 = vmatprep.subr.mxu0 %v3374
        %5345 = vmatpush1.msra.mxu0 %v3367
        %5346 = vmatprep.subr.mxu0 %v3764
        %5347 = vmatpush1.msra.mxu0 %v3757
        %5348 = vmatprep.subr.mxu0 %v4154
        %5349 = vmatpush1.msra.mxu0 %v4147
        %5350 = vmatprep.subr.mxu0 %v4553
        %5351 = vmatpush1.msra.mxu0 %v4546
        %5352 = vmatprep.subr.mxu0 %v4943
        %5353 = vmatpush1.msra.mxu0 %v4936
        %5354 = vmatprep.subr.mxu0 %v5333
        %5355 = vmatpush1.msra.mxu0 %v5326
        %5356 = vmatprep.subr.mxu0 0.0
        %5357 = vmatpush1.msra.mxu0 0.0
        %5358 = vmatprep.subr.mxu0 0.0
        %5359 = vmatpush1.msra.mxu0 0.0
        %5360 = vmatprep.subr.mxu0 0.0
        %5361 = vmatpush1.msra.mxu0 0.0
        %5362 = vmatprep.subr.mxu0 0.0
        %5363 = vmatpush1.msra.mxu0 0.0
        %5364 = vmatprep.subr.mxu0 0.0
        %5365 = vmatpush1.msra.mxu0 0.0
        %5366 = vmatprep.subr.mxu0 0.0
        %5367 = vmatpush1.msra.mxu0 0.0
        %5368 = vmatprep.subr.mxu0 0.0
        %5369 = vmatpush1.msra.mxu0 0.0
        %5370 = vmatprep.subr.mxu0 0.0
        %5371 = vmatpush1.msra.mxu0 0.0
        %5372 = vmatprep.subr.mxu0 0.0
        %5373 = vmatpush1.msra.mxu0 0.0
        %5374 = vmatprep.subr.mxu0 0.0
        %5375 = vmatpush1.msra.mxu0 0.0
        %5376 = vmatprep.subr.mxu0 0.0
        %5377 = vmatpush1.msra.mxu0 0.0
        %5378 = vmatprep.subr.mxu0 0.0
        %5379 = vmatpush1.msra.mxu0 0.0
        %5380 = vmatprep.subr.mxu0 0.0
        %5381 = vmatpush1.msra.mxu0 0.0
        %5382 = vmatprep.subr.mxu0 0.0
        %5383 = vmatpush1.msra.mxu0 0.0
        %5384 = vmatprep.subr.mxu0 0.0
        %5385 = vmatpush1.msra.mxu0 0.0
        %5386 = vmatprep.subr.mxu0 0.0
        %5387 = vmatpush1.msra.mxu0 0.0
        %5388 = vmatprep.subr.mxu0 0.0
        %5389 = vmatpush1.msra.mxu0 0.0
        %5390 = vmatprep.subr.mxu0 0.0
        %5391 = vmatpush1.msra.mxu0 0.0
        %5392 = vmatprep.subr.mxu0 0.0
        %5393 = vmatpush1.msra.mxu0 0.0
        %5394 = vmatprep.subr.mxu0 0.0
        %5395 = vmatpush1.msra.mxu0 0.0
        %5396 = vmatprep.subr.mxu0 0.0
        %5397 = vmatpush1.msra.mxu0 0.0
        %5398 = vmatprep.subr.mxu0 0.0
        %5399 = vmatpush1.msra.mxu0 0.0
        %5400 = vmatprep.subr.mxu0 0.0
        %5401 = vmatpush1.msra.mxu0 0.0
        %5402 = vmatprep.mubr.f32.mxu0 0.0
        %5403 = vmatmul.mubr.f32.gmra.mrb[0].mxu0 %v5336
        %v5404 = vpop.f32.mrb[0].mxu0
        %v5405 = vadd.f32 0.0, %v5404
        %v5406 = vpop.f32.mrb[0].mxu0
        %v5407 = vadd.f32 0.0, %v5406
        %5408 = vdwg.mxu0
        %5410 = vset.pattern.permute.xlu0 0
        %5411 = vperm.xlu0 %5410, %v1838
        %v5412 = vpop.permute.xlu0 %5411
        %v5414 = vmul.f32 %v5405, %v5412
        %v5415 = vmul.f32 %v5407, %v5412
        %5417 = vset.pattern.permute.xlu0 0
        %5418 = vperm.xlu0 %5417, %v1839
        %v5419 = vpop.permute.xlu0 %5418
        %v5421 = vadd.f32 %v5414, %v5419
        %v5422 = vadd.f32 %v5415, %v5419
        %v5423 = vmax.f32 %v5421, 0.0
        %v5424 = vmax.f32 %v5422, 0.0
        %v5427 = vcombine.low %v5423, %v5424
        %5429 = vst [vmem:[%s336] sm:$0xff] %v5427
        %s5430 = sand.u32 %s192, 1
        %s5431 = scalar_lea.sflag [#allocation4], %s5430
        %s5432 = sand.u32 %s192, 1
        %s5433 = smul.addr %s5432, 8
        %s5434 = scalar_lea.vmem [#allocation7], %s5433
        // Predicated region
        $region57: #{tpu_custom_call.1} parent=47 // pred_check
          %p5435 = pneg %p202
        $region58: #{tpu_custom_call.1} parent=47 // pred_check_branch
          %5437 = sbr.rel (%p5435) target = $region60
        $region59: #{tpu_custom_call.1} parent=47 // pred_region
          %s5439 = ssub.s32 128, 128
          %5440 = vsyncadd %s5431, %s5439
          %s5441 = smul.addr %s27, 2
          %s5442 = smul.addr %s5441, 64
          %s5443 = scalar_lea.hbm %s7, %s5442
          %s5445 = sshll.u32 %s5434, 4
          %s5446 = int_to_ptr.vmem [resolvable:$true] %s5445
          %5448 = dma.vmem_to_hbm [thread:$0]  %s5446, 128, %s5443, %s5431
        $region60: #{tpu_custom_call.1} parent=47 // pred_fallthru
          _
      $region48: #{tpu_custom_call.1} parent=5 // pred_fallthru
        _
      %p5449 = scmp.le.s32.totalorder 2, %s22
      // Predicated region
      $region61: #{tpu_custom_call.1} parent=5 // pred_check
        %p5450 = pneg %p5449
      $region62: #{tpu_custom_call.1} parent=5 // pred_check_branch
        %5452 = sbr.rel (%p5450) target = $region64
      $region63: #{tpu_custom_call.1} parent=5 // pred_region
        %s5453 = ssub.s32 %s22, 2
        // Predicated region
        $region65: #{tpu_custom_call.1} parent=63 // pred_check
          %p5454 = pneg %p208
        $region66: #{tpu_custom_call.1} parent=63 // pred_check_branch
          %5456 = sbr.rel (%p5454) target = $region68
        $region67: #{tpu_custom_call.1} parent=63 // pred_region
          %s5457 = sand.u32 %s193, 1
          %s5458 = scalar_lea.sflag [#allocation4], %s5457
          %s5459 = sand.u32 %s193, 1
          %s5460 = smul.addr %s5459, 8
          %s5461 = scalar_lea.vmem [#allocation7], %s5460
          %5462 = dma.done %s5458, 128
        $region68: #{tpu_custom_call.1} parent=63 // pred_fallthru
          _
      $region64: #{tpu_custom_call.1} parent=5 // pred_fallthru
        _
    $region6: #{tpu_custom_call.1} parent=1 // loop_footer
      %s26 = sadd.s32 1, %s22
    $region7: #{tpu_custom_call.1} parent=1 // loop_footer_branch
      %21 = sbr.rel target = $region3
    $region8: #{tpu_custom_call.1} parent=1 // loop_exit
      _
    %5463 = vsyncpa [#allocation3], 1
    %s5464 = scalar_lea.sflag [#allocation3], 1
    %5465 = vsyncpa %s5464, 1
    %5466 = vsyncpa [#allocation6], 1
    %s5467 = scalar_lea.sflag [#allocation6], 1
    %5468 = vsyncpa %s5467, 1
    %5469 = vsyncpa [#allocation4], 1
    %s5470 = scalar_lea.sflag [#allocation4], 1
    %5471 = vsyncpa %s5470, 1

</llo_original>
